<compile_context>
chip_gen: v6e
topology: v6e:2x2x1
jax: 0.10.0
libtpu: 0.0.40
codegen_flags: <defaults>
</compile_context>

<pallas_src>
import jax
import jax.numpy as jnp
from jax.experimental import pallas as pl
from jax.experimental.pallas import tpu as pltpu

LANE = 128


def _round_up(v, m):
    return ((v + m - 1) // m) * m


def _pad_to(x, axis, target):
    pad = target - x.shape[axis]
    if pad <= 0:
        return x
    cfg = [(0, 0)] * x.ndim
    cfg[axis] = (0, pad)
    return jnp.pad(x, cfg)


# ----------------------- Pallas kernels -----------------------

def _conv_sigmoid_pool_kernel(p_ref, w_ref, b_ref, o_ref):
    """Fused conv-as-matmul + bias + sigmoid + 2x2 max-pool.

    p_ref: (4, M, Kpad) im2col patch slab per 2x2 pool-window position,
           rows ordered (n, pooled_row, pooled_col); K zero-padded (lane mult).
    w_ref: (Kpad, 128)  weights, output channels zero-padded to 128 lanes.
    b_ref: (1, 128)     bias, lane-padded.
    o_ref: (M, 128)     pooled activations, lane-dense.
    """
    w = w_ref[...]
    b = b_ref[...]

    def act(t):
        y = jnp.dot(p_ref[t], w, preferred_element_type=jnp.float32) + b
        return jax.nn.sigmoid(y)

    o_ref[...] = jnp.maximum(jnp.maximum(act(0), act(1)),
                             jnp.maximum(act(2), act(3)))


def _mlp_kernel(x_ref, w1_ref, b1_ref, w2_ref, b2_ref, w3_ref, b3_ref, o_ref):
    """fc1+sigmoid -> fc2+sigmoid -> fc3, fully resident in VMEM, lane-padded."""
    h = jax.nn.sigmoid(
        jnp.dot(x_ref[...], w1_ref[...], preferred_element_type=jnp.float32)
        + b1_ref[...])
    h = jax.nn.sigmoid(
        jnp.dot(h, w2_ref[...], preferred_element_type=jnp.float32)
        + b2_ref[...])
    o_ref[...] = (jnp.dot(h, w3_ref[...], preferred_element_type=jnp.float32)
                  + b3_ref[...])


_VMEM = pl.BlockSpec(memory_space=pltpu.MemorySpace.VMEM)


def conv_sigmoid_pool(patches, w, b):
    T, M, Kp = patches.shape
    return pl.pallas_call(
        _conv_sigmoid_pool_kernel,
        out_shape=jax.ShapeDtypeStruct((M, LANE), jnp.float32),
        in_specs=[_VMEM, _VMEM, _VMEM],
        out_specs=_VMEM,
        cost_estimate=pl.CostEstimate(
            flops=2 * T * M * Kp * LANE,
            transcendentals=T * M * LANE,
            bytes_accessed=4 * (T * M * Kp + Kp * LANE + LANE + M * LANE)),
    )(patches, w, b)


def mlp3(x, w1, b1, w2, b2, w3, b3):
    M, K = x.shape
    return pl.pallas_call(
        _mlp_kernel,
        out_shape=jax.ShapeDtypeStruct((M, LANE), jnp.float32),
        in_specs=[_VMEM] * 7,
        out_specs=_VMEM,
        cost_estimate=pl.CostEstimate(
            flops=2 * M * LANE * (K + LANE + LANE),
            transcendentals=2 * M * LANE,
            bytes_accessed=4 * (M * K + w1.size + w2.size + w3.size
                                + 3 * LANE + M * LANE)),
    )(x, w1, b1, w2, b2, w3, b3)


# ----------------------- thin XLA glue (tiny tensors only) -----------------

def _im2col_pool_split(x_nhwc, k):
    """k x k valid-conv patches regrouped by 2x2 max-pool window position.

    Returns (4, N*(Ho//2)*(Wo//2), k*k*C); K ordered (kh, kw, c_in), rows
    ordered (n, pooled_row, pooled_col).  Pure glue on tiny activations.
    """
    N, H, W, C = x_nhwc.shape
    Ho, Wo = H - k + 1, W - k + 1
    cols = [x_nhwc[:, di:di + Ho, dj:dj + Wo, :]
            for di in range(k) for dj in range(k)]
    p = jnp.stack(cols, axis=3).reshape(N, Ho, Wo, k * k * C)
    slabs = [p[:, a::2, b::2, :].reshape(N * (Ho // 2) * (Wo // 2), k * k * C)
             for a in range(2) for b in range(2)]
    return jnp.stack(slabs, axis=0)


# ----------------------- parameters -----------------------

def init_params(key):
    """PyTorch-shaped parameters (deterministic)."""
    ks = jax.random.split(key, 10)

    def u(k, shape, fan_in):
        bound = 1.0 / jnp.sqrt(float(fan_in))
        return jax.random.uniform(k, shape, jnp.float32, -bound, bound)

    return {
        "conv1_w": u(ks[0], (6, 1, 5, 5), 1 * 5 * 5),
        "conv1_b": u(ks[1], (6,), 1 * 5 * 5),
        "conv2_w": u(ks[2], (16, 6, 5, 5), 6 * 5 * 5),
        "conv2_b": u(ks[3], (16,), 6 * 5 * 5),
        "fc1_w": u(ks[4], (120, 400), 400),
        "fc1_b": u(ks[5], (120,), 400),
        "fc2_w": u(ks[6], (84, 120), 120),
        "fc2_b": u(ks[7], (84,), 120),
        "fc3_w": u(ks[8], (10, 84), 84),
        "fc3_b": u(ks[9], (10,), 84),
    }


def prepare_params(p):
    """One-time repack (outside the hot path) into lane-dense, pre-transposed
    kernel operands.  All index permutations live here, on tiny weights."""
    def conv_w(w):                      # (Cout,Cin,kh,kw) -> (Kpad, 128), K=(kh,kw,cin)
        cout, cin, k, _ = w.shape
        w2 = jnp.transpose(w, (2, 3, 1, 0)).reshape(k * k * cin, cout)
        return _pad_to(_pad_to(w2, 0, _round_up(k * k * cin, LANE)), 1, LANE)

    def bias(b):
        return _pad_to(b.reshape(1, -1), 1, LANE)

    # fc1 input rows permuted from PyTorch (c, h, w) flatten order to (h, w, c)
    wf1 = jnp.transpose(p["fc1_w"].reshape(120, 16, 5, 5), (2, 3, 1, 0))
    wf1 = wf1.reshape(400, 120)

    return {
        "w1": conv_w(p["conv1_w"]), "b1": bias(p["conv1_b"]),
        "w2": conv_w(p["conv2_w"]), "b2": bias(p["conv2_b"]),
        "wf1": _pad_to(_pad_to(wf1, 0, _round_up(400, LANE)), 1, LANE),
        "bf1": bias(p["fc1_b"]),
        "wf2": _pad_to(_pad_to(p["fc2_w"].T, 0, LANE), 1, LANE),
        "bf2": bias(p["fc2_b"]),
        "wf3": _pad_to(_pad_to(p["fc3_w"].T, 0, LANE), 1, LANE),
        "bf3": bias(p["fc3_b"]),
    }


# ----------------------- forward pass -----------------------

def convnet_forward(x_nchw, kp):
    N = x_nchw.shape[0]

    # stage 1: conv1 (pad=2) + sigmoid + 2x2 pool  -> (N,14,14,6)
    x = jnp.transpose(x_nchw, (0, 2, 3, 1))                       # NHWC, C=1
    x = jnp.pad(x, ((0, 0), (2, 2), (2, 2), (0, 0)))              # 32x32
    p1 = _pad_to(_im2col_pool_split(x, 5), 2, LANE)               # (4, N*196, 128)
    h1 = conv_sigmoid_pool(p1, kp["w1"], kp["b1"])                # (N*196, 128)
    h1 = h1[:, :6].reshape(N, 14, 14, 6)

    # stage 2: conv2 + sigmoid + 2x2 pool  -> (N,5,5,16)
    p2 = _pad_to(_im2col_pool_split(h1, 5), 2, _round_up(150, LANE))  # (4, N*25, 256)
    h2 = conv_sigmoid_pool(p2, kp["w2"], kp["b2"])                # (N*25, 128)

    # stage 3: flatten in (h, w, c) order (fc1 rows were permuted to match)
    flat = _pad_to(h2[:, :16].reshape(N, 400), 1, _round_up(400, LANE))  # (N,512)
    out = mlp3(flat, kp["wf1"], kp["bf1"], kp["wf2"], kp["bf2"],
               kp["wf3"], kp["bf3"])                              # (N, 128)
    return out[:, :10]


if __name__ == "__main__":
    key = jax.random.PRNGKey(0)
    k_x, k_p = jax.random.split(key)
    # Input must be 28x28 so that after conv/pool stages the flatten gives 400.
    x = jax.random.normal(k_x, (2, 1, 28, 28), dtype=jnp.float32)
    params = prepare_params(init_params(k_p))

    fwd = jax.jit(convnet_forward)
    out = jax.block_until_ready(fwd(x, params))
    assert out.shape == (2, 10), out.shape
    assert bool(jnp.all(jnp.isfinite(out)))
    print("KERNEL_OK")
</pallas_src>

<mosaic_0001>
module attributes {stable_mosaic.version = 11 : i64} {
  func.func @_conv_sigmoid_pool_kernel(%arg0: memref<4x392x128xf32, #tpu.memory_space<vmem>>, %arg1: memref<128x128xf32, #tpu.memory_space<vmem>>, %arg2: memref<1x128xf32, #tpu.memory_space<vmem>>, %arg3: memref<392x128xf32, #tpu.memory_space<vmem>>) attributes {dimension_semantics = [], scalar_prefetch = 0 : i64, scratch_operands = 0 : i64, tpu.core_type = #tpu.core_type<tc>} {
    %c0 = arith.constant 0 : index
    %c0_0 = arith.constant 0 : index
    %0 = vector.load %arg1[%c0, %c0_0] : memref<128x128xf32, #tpu.memory_space<vmem>>, vector<128x128xf32>
    %c0_1 = arith.constant 0 : index
    %c0_2 = arith.constant 0 : index
    %1 = vector.load %arg2[%c0_1, %c0_2] : memref<1x128xf32, #tpu.memory_space<vmem>>, vector<1x128xf32>
    %c0_3 = arith.constant 0 : index
    %c0_4 = arith.constant 0 : index
    %c0_5 = arith.constant 0 : index
    %2 = vector.load %arg0[%c0_3, %c0_4, %c0_5] : memref<4x392x128xf32, #tpu.memory_space<vmem>>, vector<1x392x128xf32>
    %3 = vector.shape_cast %2 : vector<1x392x128xf32> to vector<392x128xf32>
    %cst = arith.constant dense<0.000000e+00> : vector<392x128xf32>
    %4 = tpu.matmul %3, %0, %cst {dimension_numbers = #tpu.dot_dimension_numbers<[1], [0], [0], [1], [0, 0, 1, 1], [], []>} : vector<392x128xf32>, vector<128x128xf32>, vector<392x128xf32> -> vector<392x128xf32>
    %5 = vector.broadcast %1 : vector<1x128xf32> to vector<392x128xf32>
    %6 = arith.addf %4, %5 : vector<392x128xf32>
    %7 = arith.negf %6 : vector<392x128xf32>
    %8 = math.exp %7 : vector<392x128xf32>
    %cst_6 = arith.constant 1.000000e+00 : f32
    %9 = vector.broadcast %cst_6 : f32 to vector<392x128xf32>
    %10 = arith.addf %9, %8 : vector<392x128xf32>
    %11 = arith.divf %9, %10 : vector<392x128xf32>
    %c1 = arith.constant 1 : index
    %c0_7 = arith.constant 0 : index
    %c0_8 = arith.constant 0 : index
    %12 = vector.load %arg0[%c1, %c0_7, %c0_8] : memref<4x392x128xf32, #tpu.memory_space<vmem>>, vector<1x392x128xf32>
    %13 = vector.shape_cast %12 : vector<1x392x128xf32> to vector<392x128xf32>
    %cst_9 = arith.constant dense<0.000000e+00> : vector<392x128xf32>
    %14 = tpu.matmul %13, %0, %cst_9 {dimension_numbers = #tpu.dot_dimension_numbers<[1], [0], [0], [1], [0, 0, 1, 1], [], []>} : vector<392x128xf32>, vector<128x128xf32>, vector<392x128xf32> -> vector<392x128xf32>
    %15 = vector.broadcast %1 : vector<1x128xf32> to vector<392x128xf32>
    %16 = arith.addf %14, %15 : vector<392x128xf32>
    %17 = arith.negf %16 : vector<392x128xf32>
    %18 = math.exp %17 : vector<392x128xf32>
    %cst_10 = arith.constant 1.000000e+00 : f32
    %19 = vector.broadcast %cst_10 : f32 to vector<392x128xf32>
    %20 = arith.addf %19, %18 : vector<392x128xf32>
    %21 = arith.divf %19, %20 : vector<392x128xf32>
    %22 = arith.maximumf %11, %21 : vector<392x128xf32>
    %c2 = arith.constant 2 : index
    %c0_11 = arith.constant 0 : index
    %c0_12 = arith.constant 0 : index
    %23 = vector.load %arg0[%c2, %c0_11, %c0_12] : memref<4x392x128xf32, #tpu.memory_space<vmem>>, vector<1x392x128xf32>
    %24 = vector.shape_cast %23 : vector<1x392x128xf32> to vector<392x128xf32>
    %cst_13 = arith.constant dense<0.000000e+00> : vector<392x128xf32>
    %25 = tpu.matmul %24, %0, %cst_13 {dimension_numbers = #tpu.dot_dimension_numbers<[1], [0], [0], [1], [0, 0, 1, 1], [], []>} : vector<392x128xf32>, vector<128x128xf32>, vector<392x128xf32> -> vector<392x128xf32>
    %26 = vector.broadcast %1 : vector<1x128xf32> to vector<392x128xf32>
    %27 = arith.addf %25, %26 : vector<392x128xf32>
    %28 = arith.negf %27 : vector<392x128xf32>
    %29 = math.exp %28 : vector<392x128xf32>
    %cst_14 = arith.constant 1.000000e+00 : f32
    %30 = vector.broadcast %cst_14 : f32 to vector<392x128xf32>
    %31 = arith.addf %30, %29 : vector<392x128xf32>
    %32 = arith.divf %30, %31 : vector<392x128xf32>
    %c3 = arith.constant 3 : index
    %c0_15 = arith.constant 0 : index
    %c0_16 = arith.constant 0 : index
    %33 = vector.load %arg0[%c3, %c0_15, %c0_16] : memref<4x392x128xf32, #tpu.memory_space<vmem>>, vector<1x392x128xf32>
    %34 = vector.shape_cast %33 : vector<1x392x128xf32> to vector<392x128xf32>
    %cst_17 = arith.constant dense<0.000000e+00> : vector<392x128xf32>
    %35 = tpu.matmul %34, %0, %cst_17 {dimension_numbers = #tpu.dot_dimension_numbers<[1], [0], [0], [1], [0, 0, 1, 1], [], []>} : vector<392x128xf32>, vector<128x128xf32>, vector<392x128xf32> -> vector<392x128xf32>
    %36 = vector.broadcast %1 : vector<1x128xf32> to vector<392x128xf32>
    %37 = arith.addf %35, %36 : vector<392x128xf32>
    %38 = arith.negf %37 : vector<392x128xf32>
    %39 = math.exp %38 : vector<392x128xf32>
    %cst_18 = arith.constant 1.000000e+00 : f32
    %40 = vector.broadcast %cst_18 : f32 to vector<392x128xf32>
    %41 = arith.addf %40, %39 : vector<392x128xf32>
    %42 = arith.divf %40, %41 : vector<392x128xf32>
    %43 = arith.maximumf %32, %42 : vector<392x128xf32>
    %44 = arith.maximumf %22, %43 : vector<392x128xf32>
    %c0_19 = arith.constant 0 : index
    %c0_20 = arith.constant 0 : index
    %45 = vector.load %arg3[%c0_19, %c0_20] : memref<392x128xf32, #tpu.memory_space<vmem>>, vector<392x128xf32>
    tpu.vector_store %arg3[%c0_19, %c0_20], %44 {strides = array<i32>} : memref<392x128xf32, #tpu.memory_space<vmem>>, vector<392x128xf32>,
    return
  }
}

module attributes {stable_mosaic.version = 11 : i64} {
  func.func @_conv_sigmoid_pool_kernel(%arg0: memref<4x50x256xf32, #tpu.memory_space<vmem>>, %arg1: memref<256x128xf32, #tpu.memory_space<vmem>>, %arg2: memref<1x128xf32, #tpu.memory_space<vmem>>, %arg3: memref<50x128xf32, #tpu.memory_space<vmem>>) attributes {dimension_semantics = [], scalar_prefetch = 0 : i64, scratch_operands = 0 : i64, tpu.core_type = #tpu.core_type<tc>} {
    %c0 = arith.constant 0 : index
    %c0_0 = arith.constant 0 : index
    %0 = vector.load %arg1[%c0, %c0_0] : memref<256x128xf32, #tpu.memory_space<vmem>>, vector<256x128xf32>
    %c0_1 = arith.constant 0 : index
    %c0_2 = arith.constant 0 : index
    %1 = vector.load %arg2[%c0_1, %c0_2] : memref<1x128xf32, #tpu.memory_space<vmem>>, vector<1x128xf32>
    %c0_3 = arith.constant 0 : index
    %c0_4 = arith.constant 0 : index
    %c0_5 = arith.constant 0 : index
    %2 = vector.load %arg0[%c0_3, %c0_4, %c0_5] : memref<4x50x256xf32, #tpu.memory_space<vmem>>, vector<1x50x256xf32>
    %3 = vector.shape_cast %2 : vector<1x50x256xf32> to vector<50x256xf32>
    %cst = arith.constant dense<0.000000e+00> : vector<50x128xf32>
    %4 = tpu.matmul %3, %0, %cst {dimension_numbers = #tpu.dot_dimension_numbers<[1], [0], [0], [1], [0, 0, 1, 1], [], []>} : vector<50x256xf32>, vector<256x128xf32>, vector<50x128xf32> -> vector<50x128xf32>
    %5 = vector.broadcast %1 : vector<1x128xf32> to vector<50x128xf32>
    %6 = arith.addf %4, %5 : vector<50x128xf32>
    %7 = arith.negf %6 : vector<50x128xf32>
    %8 = math.exp %7 : vector<50x128xf32>
    %cst_6 = arith.constant 1.000000e+00 : f32
    %9 = vector.broadcast %cst_6 : f32 to vector<50x128xf32>
    %10 = arith.addf %9, %8 : vector<50x128xf32>
    %11 = arith.divf %9, %10 : vector<50x128xf32>
    %c1 = arith.constant 1 : index
    %c0_7 = arith.constant 0 : index
    %c0_8 = arith.constant 0 : index
    %12 = vector.load %arg0[%c1, %c0_7, %c0_8] : memref<4x50x256xf32, #tpu.memory_space<vmem>>, vector<1x50x256xf32>
    %13 = vector.shape_cast %12 : vector<1x50x256xf32> to vector<50x256xf32>
    %cst_9 = arith.constant dense<0.000000e+00> : vector<50x128xf32>
    %14 = tpu.matmul %13, %0, %cst_9 {dimension_numbers = #tpu.dot_dimension_numbers<[1], [0], [0], [1], [0, 0, 1, 1], [], []>} : vector<50x256xf32>, vector<256x128xf32>, vector<50x128xf32> -> vector<50x128xf32>
    %15 = vector.broadcast %1 : vector<1x128xf32> to vector<50x128xf32>
    %16 = arith.addf %14, %15 : vector<50x128xf32>
    %17 = arith.negf %16 : vector<50x128xf32>
    %18 = math.exp %17 : vector<50x128xf32>
    %cst_10 = arith.constant 1.000000e+00 : f32
    %19 = vector.broadcast %cst_10 : f32 to vector<50x128xf32>
    %20 = arith.addf %19, %18 : vector<50x128xf32>
    %21 = arith.divf %19, %20 : vector<50x128xf32>
    %22 = arith.maximumf %11, %21 : vector<50x128xf32>
    %c2 = arith.constant 2 : index
    %c0_11 = arith.constant 0 : index
    %c0_12 = arith.constant 0 : index
    %23 = vector.load %arg0[%c2, %c0_11, %c0_12] : memref<4x50x256xf32, #tpu.memory_space<vmem>>, vector<1x50x256xf32>
    %24 = vector.shape_cast %23 : vector<1x50x256xf32> to vector<50x256xf32>
    %cst_13 = arith.constant dense<0.000000e+00> : vector<50x128xf32>
    %25 = tpu.matmul %24, %0, %cst_13 {dimension_numbers = #tpu.dot_dimension_numbers<[1], [0], [0], [1], [0, 0, 1, 1], [], []>} : vector<50x256xf32>, vector<256x128xf32>, vector<50x128xf32> -> vector<50x128xf32>
    %26 = vector.broadcast %1 : vector<1x128xf32> to vector<50x128xf32>
    %27 = arith.addf %25, %26 : vector<50x128xf32>
    %28 = arith.negf %27 : vector<50x128xf32>
    %29 = math.exp %28 : vector<50x128xf32>
    %cst_14 = arith.constant 1.000000e+00 : f32
    %30 = vector.broadcast %cst_14 : f32 to vector<50x128xf32>
    %31 = arith.addf %30, %29 : vector<50x128xf32>
    %32 = arith.divf %30, %31 : vector<50x128xf32>
    %c3 = arith.constant 3 : index
    %c0_15 = arith.constant 0 : index
    %c0_16 = arith.constant 0 : index
    %33 = vector.load %arg0[%c3, %c0_15, %c0_16] : memref<4x50x256xf32, #tpu.memory_space<vmem>>, vector<1x50x256xf32>
    %34 = vector.shape_cast %33 : vector<1x50x256xf32> to vector<50x256xf32>
    %cst_17 = arith.constant dense<0.000000e+00> : vector<50x128xf32>
    %35 = tpu.matmul %34, %0, %cst_17 {dimension_numbers = #tpu.dot_dimension_numbers<[1], [0], [0], [1], [0, 0, 1, 1], [], []>} : vector<50x256xf32>, vector<256x128xf32>, vector<50x128xf32> -> vector<50x128xf32>
    %36 = vector.broadcast %1 : vector<1x128xf32> to vector<50x128xf32>
    %37 = arith.addf %35, %36 : vector<50x128xf32>
    %38 = arith.negf %37 : vector<50x128xf32>
    %39 = math.exp %38 : vector<50x128xf32>
    %cst_18 = arith.constant 1.000000e+00 : f32
    %40 = vector.broadcast %cst_18 : f32 to vector<50x128xf32>
    %41 = arith.addf %40, %39 : vector<50x128xf32>
    %42 = arith.divf %40, %41 : vector<50x128xf32>
    %43 = arith.maximumf %32, %42 : vector<50x128xf32>
    %44 = arith.maximumf %22, %43 : vector<50x128xf32>
    %c0_19 = arith.constant 0 : index
    %c0_20 = arith.constant 0 : index
    %45 = vector.load %arg3[%c0_19, %c0_20] : memref<50x128xf32, #tpu.memory_space<vmem>>, vector<50x128xf32>
    tpu.vector_store %arg3[%c0_19, %c0_20], %44 {strides = array<i32>} : memref<50x128xf32, #tpu.memory_space<vmem>>, vector<50x128xf32>,
    return
  }
}

module attributes {stable_mosaic.version = 11 : i64} {
  func.func @_mlp_kernel(%arg0: memref<2x512xf32, #tpu.memory_space<vmem>>, %arg1: memref<512x128xf32, #tpu.memory_space<vmem>>, %arg2: memref<1x128xf32, #tpu.memory_space<vmem>>, %arg3: memref<128x128xf32, #tpu.memory_space<vmem>>, %arg4: memref<1x128xf32, #tpu.memory_space<vmem>>, %arg5: memref<128x128xf32, #tpu.memory_space<vmem>>, %arg6: memref<1x128xf32, #tpu.memory_space<vmem>>, %arg7: memref<2x128xf32, #tpu.memory_space<vmem>>) attributes {dimension_semantics = [], scalar_prefetch = 0 : i64, scratch_operands = 0 : i64, tpu.core_type = #tpu.core_type<tc>} {
    %c0 = arith.constant 0 : index
    %c0_0 = arith.constant 0 : index
    %0 = vector.load %arg0[%c0, %c0_0] : memref<2x512xf32, #tpu.memory_space<vmem>>, vector<2x512xf32>
    %c0_1 = arith.constant 0 : index
    %c0_2 = arith.constant 0 : index
    %1 = vector.load %arg1[%c0_1, %c0_2] : memref<512x128xf32, #tpu.memory_space<vmem>>, vector<512x128xf32>
    %cst = arith.constant dense<0.000000e+00> : vector<2x128xf32>
    %2 = tpu.matmul %0, %1, %cst {dimension_numbers = #tpu.dot_dimension_numbers<[1], [0], [0], [1], [0, 0, 1, 1], [], []>} : vector<2x512xf32>, vector<512x128xf32>, vector<2x128xf32> -> vector<2x128xf32>
    %c0_3 = arith.constant 0 : index
    %c0_4 = arith.constant 0 : index
    %3 = vector.load %arg2[%c0_3, %c0_4] : memref<1x128xf32, #tpu.memory_space<vmem>>, vector<1x128xf32>
    %4 = vector.broadcast %3 : vector<1x128xf32> to vector<2x128xf32>
    %5 = arith.addf %2, %4 : vector<2x128xf32>
    %6 = arith.negf %5 : vector<2x128xf32>
    %7 = math.exp %6 : vector<2x128xf32>
    %cst_5 = arith.constant 1.000000e+00 : f32
    %8 = vector.broadcast %cst_5 : f32 to vector<2x128xf32>
    %9 = arith.addf %8, %7 : vector<2x128xf32>
    %10 = arith.divf %8, %9 : vector<2x128xf32>
    %c0_6 = arith.constant 0 : index
    %c0_7 = arith.constant 0 : index
    %11 = vector.load %arg3[%c0_6, %c0_7] : memref<128x128xf32, #tpu.memory_space<vmem>>, vector<128x128xf32>
    %cst_8 = arith.constant dense<0.000000e+00> : vector<2x128xf32>
    %12 = tpu.matmul %10, %11, %cst_8 {dimension_numbers = #tpu.dot_dimension_numbers<[1], [0], [0], [1], [0, 0, 1, 1], [], []>} : vector<2x128xf32>, vector<128x128xf32>, vector<2x128xf32> -> vector<2x128xf32>
    %c0_9 = arith.constant 0 : index
    %c0_10 = arith.constant 0 : index
    %13 = vector.load %arg4[%c0_9, %c0_10] : memref<1x128xf32, #tpu.memory_space<vmem>>, vector<1x128xf32>
    %14 = vector.broadcast %13 : vector<1x128xf32> to vector<2x128xf32>
    %15 = arith.addf %12, %14 : vector<2x128xf32>
    %16 = arith.negf %15 : vector<2x128xf32>
    %17 = math.exp %16 : vector<2x128xf32>
    %cst_11 = arith.constant 1.000000e+00 : f32
    %18 = vector.broadcast %cst_11 : f32 to vector<2x128xf32>
    %19 = arith.addf %18, %17 : vector<2x128xf32>
    %20 = arith.divf %18, %19 : vector<2x128xf32>
    %c0_12 = arith.constant 0 : index
    %c0_13 = arith.constant 0 : index
    %21 = vector.load %arg5[%c0_12, %c0_13] : memref<128x128xf32, #tpu.memory_space<vmem>>, vector<128x128xf32>
    %cst_14 = arith.constant dense<0.000000e+00> : vector<2x128xf32>
    %22 = tpu.matmul %20, %21, %cst_14 {dimension_numbers = #tpu.dot_dimension_numbers<[1], [0], [0], [1], [0, 0, 1, 1], [], []>} : vector<2x128xf32>, vector<128x128xf32>, vector<2x128xf32> -> vector<2x128xf32>
    %c0_15 = arith.constant 0 : index
    %c0_16 = arith.constant 0 : index
    %23 = vector.load %arg6[%c0_15, %c0_16] : memref<1x128xf32, #tpu.memory_space<vmem>>, vector<1x128xf32>
    %24 = vector.broadcast %23 : vector<1x128xf32> to vector<2x128xf32>
    %25 = arith.addf %22, %24 : vector<2x128xf32>
    %c0_17 = arith.constant 0 : index
    %c0_18 = arith.constant 0 : index
    %26 = vector.load %arg7[%c0_17, %c0_18] : memref<2x128xf32, #tpu.memory_space<vmem>>, vector<2x128xf32>
    tpu.vector_store %arg7[%c0_17, %c0_18], %25 {strides = array<i32>} : memref<2x128xf32, #tpu.memory_space<vmem>>, vector<2x128xf32>,
    return
  }
}

</mosaic_0001>

<llo_original>
// kernel: convnet_forward.3
$region0: #{convnet_forward.3}
  #allocation0 [shape = 'u32[]', space=smem, size = 0x4, offset = 0x4, fixed_abs, tag = 'smem constant byte address 0x4 - core index']
  #allocation1 [shape = 'u32[144,128]{1,0:T(1,128)}', space=vmem, size = 0x12000, scoped, tag = 'internal scratch']
  %s0 = inlined_call_operand.vmem [shape: f32[4,392,128], index: 0, kind: input, shape index: {}]
  %s1 = inlined_call_operand.vmem [shape: f32[128,128], index: 1, kind: input, shape index: {}]
  %s2 = inlined_call_operand.vmem [shape: f32[1,128], index: 2, kind: input, shape index: {}]
  %s3 = inlined_call_operand.vmem [shape: f32[392,128], index: 3, kind: output, shape index: {}]
  %s4 = sld [smem:[#allocation0]]
  $region22: #{convnet_forward.3} parent=0
    _
  %s6 = ssub.s32 1, %s4
  %s7 = scalar_select 0, %s6, %s4
  // Predicated region
  $region2: #{convnet_forward.3} parent=0 // pred_check
    _
  $region3: #{convnet_forward.3} parent=0 // pred_check_branch
    %9 = sbr.rel (0) target = $region5
  $region4: #{convnet_forward.3} parent=0 // pred_region
    _
  $region5: #{convnet_forward.3} parent=0 // pred_fallthru
    _
  // Predicated region
  $region6: #{convnet_forward.3} parent=0 // pred_check
    _
  $region7: #{convnet_forward.3} parent=0 // pred_check_branch
    %11 = sbr.rel (0) target = $region9
  $region8: #{convnet_forward.3} parent=0 // pred_region
    _
  $region9: #{convnet_forward.3} parent=0 // pred_fallthru
    _
  // Predicated region
  $region10: #{convnet_forward.3} parent=0 // pred_check
    _
  $region11: #{convnet_forward.3} parent=0 // pred_check_branch
    %13 = sbr.rel (0) target = $region13
  $region12: #{convnet_forward.3} parent=0 // pred_region
    _
  $region13: #{convnet_forward.3} parent=0 // pred_fallthru
    _
  %v14 = vld [vmem:[%s1] sm:$0xff]
  %v15 = vld [vmem:[%s1 + $0x8] sm:$0xff]
  %v16 = vld [vmem:[%s1 + $0x10] sm:$0xff]
  %v17 = vld [vmem:[%s1 + $0x18] sm:$0xff]
  %v18 = vld [vmem:[%s1 + $0x20] sm:$0xff]
  %v19 = vld [vmem:[%s1 + $0x28] sm:$0xff]
  %v20 = vld [vmem:[%s1 + $0x30] sm:$0xff]
  %v21 = vld [vmem:[%s1 + $0x38] sm:$0xff]
  %v22 = vld [vmem:[%s1 + $0x40] sm:$0xff]
  %v23 = vld [vmem:[%s1 + $0x48] sm:$0xff]
  %v24 = vld [vmem:[%s1 + $0x50] sm:$0xff]
  %v25 = vld [vmem:[%s1 + $0x58] sm:$0xff]
  %v26 = vld [vmem:[%s1 + $0x60] sm:$0xff]
  %v27 = vld [vmem:[%s1 + $0x68] sm:$0xff]
  %v28 = vld [vmem:[%s1 + $0x70] sm:$0xff]
  %v29 = vld [vmem:[%s1 + $0x78] sm:$0xff]
  %v30 = vld [vmem:[%s2] sm:$0x1]
  %v31 = vld [vmem:[%s0] sm:$0xff]
  %v32 = vld [vmem:[%s0 + $0x8] sm:$0xff]
  %v33 = vld [vmem:[%s0 + $0x10] sm:$0xff]
  %v34 = vld [vmem:[%s0 + $0x18] sm:$0xff]
  %v35 = vld [vmem:[%s0 + $0x20] sm:$0xff]
  %v36 = vld [vmem:[%s0 + $0x28] sm:$0xff]
  %v37 = vld [vmem:[%s0 + $0x30] sm:$0xff]
  %v38 = vld [vmem:[%s0 + $0x38] sm:$0xff]
  %v39 = vld [vmem:[%s0 + $0x40] sm:$0xff]
  %v40 = vld [vmem:[%s0 + $0x48] sm:$0xff]
  %v41 = vld [vmem:[%s0 + $0x50] sm:$0xff]
  %v42 = vld [vmem:[%s0 + $0x58] sm:$0xff]
  %v43 = vld [vmem:[%s0 + $0x60] sm:$0xff]
  %v44 = vld [vmem:[%s0 + $0x68] sm:$0xff]
  %v45 = vld [vmem:[%s0 + $0x70] sm:$0xff]
  %v46 = vld [vmem:[%s0 + $0x78] sm:$0xff]
  %v47 = vld [vmem:[%s0 + $0x80] sm:$0xff]
  %v48 = vld [vmem:[%s0 + $0x88] sm:$0xff]
  %v49 = vld [vmem:[%s0 + $0x90] sm:$0xff]
  %v50 = vld [vmem:[%s0 + $0x98] sm:$0xff]
  %v51 = vld [vmem:[%s0 + $0xa0] sm:$0xff]
  %v52 = vld [vmem:[%s0 + $0xa8] sm:$0xff]
  %v53 = vld [vmem:[%s0 + $0xb0] sm:$0xff]
  %v54 = vld [vmem:[%s0 + $0xb8] sm:$0xff]
  %v55 = vld [vmem:[%s0 + $0xc0] sm:$0xff]
  %v56 = vld [vmem:[%s0 + $0xc8] sm:$0xff]
  %v57 = vld [vmem:[%s0 + $0xd0] sm:$0xff]
  %v58 = vld [vmem:[%s0 + $0xd8] sm:$0xff]
  %v59 = vld [vmem:[%s0 + $0xe0] sm:$0xff]
  %v60 = vld [vmem:[%s0 + $0xe8] sm:$0xff]
  %v61 = vld [vmem:[%s0 + $0xf0] sm:$0xff]
  %v62 = vld [vmem:[%s0 + $0xf8] sm:$0xff]
  %v63 = vld [vmem:[%s0 + $0x100] sm:$0xff]
  %v64 = vld [vmem:[%s0 + $0x108] sm:$0xff]
  %v65 = vld [vmem:[%s0 + $0x110] sm:$0xff]
  %v66 = vld [vmem:[%s0 + $0x118] sm:$0xff]
  %v67 = vld [vmem:[%s0 + $0x120] sm:$0xff]
  %v68 = vld [vmem:[%s0 + $0x128] sm:$0xff]
  %v69 = vld [vmem:[%s0 + $0x130] sm:$0xff]
  %v70 = vld [vmem:[%s0 + $0x138] sm:$0xff]
  %v71 = vld [vmem:[%s0 + $0x140] sm:$0xff]
  %v72 = vld [vmem:[%s0 + $0x148] sm:$0xff]
  %v73 = vld [vmem:[%s0 + $0x150] sm:$0xff]
  %v74 = vld [vmem:[%s0 + $0x158] sm:$0xff]
  %v75 = vld [vmem:[%s0 + $0x160] sm:$0xff]
  %v76 = vld [vmem:[%s0 + $0x168] sm:$0xff]
  %v77 = vld [vmem:[%s0 + $0x170] sm:$0xff]
  %v78 = vld [vmem:[%s0 + $0x178] sm:$0xff]
  %v79 = vld [vmem:[%s0 + $0x180] sm:$0xff]
  %v81 = vlaneseq
  %v82 = vshrl.u32 %v81, 7
  %v83 = vsub.s32 0, %v82
  %v84 = vrot.slane %v30, %v83
  %86 = vmatprep.subr.mxu0 0.0
  %87 = vmatpush1.msra.mxu0 %v29
  %88 = vmatprep.subr.mxu0 0.0
  %89 = vmatpush1.msra.mxu0 %v28
  %90 = vmatprep.subr.mxu0 0.0
  %91 = vmatpush1.msra.mxu0 %v27
  %92 = vmatprep.subr.mxu0 0.0
  %93 = vmatpush1.msra.mxu0 %v26
  %94 = vmatprep.subr.mxu0 0.0
  %95 = vmatpush1.msra.mxu0 %v25
  %96 = vmatprep.subr.mxu0 0.0
  %97 = vmatpush1.msra.mxu0 %v24
  %98 = vmatprep.subr.mxu0 0.0
  %99 = vmatpush1.msra.mxu0 %v23
  %100 = vmatprep.subr.mxu0 0.0
  %101 = vmatpush1.msra.mxu0 %v22
  %102 = vmatprep.subr.mxu0 0.0
  %103 = vmatpush1.msra.mxu0 %v21
  %104 = vmatprep.subr.mxu0 0.0
  %105 = vmatpush1.msra.mxu0 %v20
  %106 = vmatprep.subr.mxu0 0.0
  %107 = vmatpush1.msra.mxu0 %v19
  %108 = vmatprep.subr.mxu0 0.0
  %109 = vmatpush1.msra.mxu0 %v18
  %110 = vmatprep.subr.mxu0 0.0
  %111 = vmatpush1.msra.mxu0 %v17
  %112 = vmatprep.subr.mxu0 0.0
  %113 = vmatpush1.msra.mxu0 %v16
  %114 = vmatprep.subr.mxu0 0.0
  %115 = vmatpush1.msra.mxu0 %v15
  %116 = vmatprep.subr.mxu0 0.0
  %117 = vmatpush1.msra.mxu0 %v14
  %118 = vmatprep.subr.mxu0 0.0
  %119 = vmatpush2.msra.mxu0 0.0
  %120 = vmatprep.subr.mxu0 0.0
  %121 = vmatpush2.msra.mxu0 0.0
  %122 = vmatprep.subr.mxu0 0.0
  %123 = vmatpush2.msra.mxu0 0.0
  %124 = vmatprep.subr.mxu0 0.0
  %125 = vmatpush2.msra.mxu0 0.0
  %126 = vmatprep.subr.mxu0 0.0
  %127 = vmatpush2.msra.mxu0 0.0
  %128 = vmatprep.subr.mxu0 0.0
  %129 = vmatpush2.msra.mxu0 0.0
  %130 = vmatprep.subr.mxu0 0.0
  %131 = vmatpush2.msra.mxu0 0.0
  %132 = vmatprep.subr.mxu0 0.0
  %133 = vmatpush2.msra.mxu0 0.0
  %134 = vmatprep.subr.mxu0 0.0
  %135 = vmatpush2.msra.mxu0 0.0
  %136 = vmatprep.subr.mxu0 0.0
  %137 = vmatpush2.msra.mxu0 0.0
  %138 = vmatprep.subr.mxu0 0.0
  %139 = vmatpush2.msra.mxu0 0.0
  %140 = vmatprep.subr.mxu0 0.0
  %141 = vmatpush2.msra.mxu0 0.0
  %142 = vmatprep.subr.mxu0 0.0
  %143 = vmatpush2.msra.mxu0 0.0
  %144 = vmatprep.subr.mxu0 0.0
  %145 = vmatpush2.msra.mxu0 0.0
  %146 = vmatprep.subr.mxu0 0.0
  %147 = vmatpush2.msra.mxu0 0.0
  %148 = vmatprep.subr.mxu0 0.0
  %149 = vmatpush2.msra.mxu0 0.0
  %150 = vmatprep.mubr.f32.mxu0 0.0
  %151 = vmatmul.mubr.f32.gmra.mxu0 %v31
  %v152 = vpop.f32.mrf.mxu0
  %v153 = vadd.f32 %v84, %v152
  %v154 = vpop.f32.mrf.mxu0
  %155 = vmatprep.mubr.f32.mxu0 0.0
  %156 = vmatmul.mubr.f32.gmra.mxu0 %v32
  %v157 = vpop.f32.mrf.mxu0
  %v158 = vadd.f32 %v84, %v157
  %v159 = vpop.f32.mrf.mxu0
  %160 = vmatprep.mubr.f32.mxu0 0.0
  %161 = vmatmul.mubr.f32.gmra.mxu0 %v33
  %v162 = vpop.f32.mrf.mxu0
  %v163 = vadd.f32 %v84, %v162
  %v164 = vpop.f32.mrf.mxu0
  %165 = vmatprep.mubr.f32.mxu0 0.0
  %166 = vmatmul.mubr.f32.gmra.mxu0 %v34
  %v167 = vpop.f32.mrf.mxu0
  %v168 = vadd.f32 %v84, %v167
  %v169 = vpop.f32.mrf.mxu0
  %170 = vmatprep.mubr.f32.mxu0 0.0
  %171 = vmatmul.mubr.f32.gmra.mxu0 %v35
  %v172 = vpop.f32.mrf.mxu0
  %v173 = vadd.f32 %v84, %v172
  %v174 = vpop.f32.mrf.mxu0
  %175 = vmatprep.mubr.f32.mxu0 0.0
  %176 = vmatmul.mubr.f32.gmra.mxu0 %v36
  %v177 = vpop.f32.mrf.mxu0
  %v178 = vadd.f32 %v84, %v177
  %v179 = vpop.f32.mrf.mxu0
  %180 = vmatprep.mubr.f32.mxu0 0.0
  %181 = vmatmul.mubr.f32.gmra.mxu0 %v37
  %v182 = vpop.f32.mrf.mxu0
  %v183 = vadd.f32 %v84, %v182
  %v184 = vpop.f32.mrf.mxu0
  %185 = vmatprep.mubr.f32.mxu0 0.0
  %186 = vmatmul.mubr.f32.gmra.mxu0 %v38
  %v187 = vpop.f32.mrf.mxu0
  %v188 = vadd.f32 %v84, %v187
  %v189 = vpop.f32.mrf.mxu0
  %190 = vmatprep.mubr.f32.mxu0 0.0
  %191 = vmatmul.mubr.f32.gmra.mxu0 %v39
  %v192 = vpop.f32.mrf.mxu0
  %v193 = vadd.f32 %v84, %v192
  %v194 = vpop.f32.mrf.mxu0
  %195 = vmatprep.mubr.f32.mxu0 0.0
  %196 = vmatmul.mubr.f32.gmra.mxu0 %v40
  %v197 = vpop.f32.mrf.mxu0
  %v198 = vadd.f32 %v84, %v197
  %v199 = vpop.f32.mrf.mxu0
  %200 = vmatprep.mubr.f32.mxu0 0.0
  %201 = vmatmul.mubr.f32.gmra.mxu0 %v41
  %v202 = vpop.f32.mrf.mxu0
  %v203 = vadd.f32 %v84, %v202
  %v204 = vpop.f32.mrf.mxu0
  %205 = vmatprep.mubr.f32.mxu0 0.0
  %206 = vmatmul.mubr.f32.gmra.mxu0 %v42
  %v207 = vpop.f32.mrf.mxu0
  %v208 = vadd.f32 %v84, %v207
  %v209 = vpop.f32.mrf.mxu0
  %210 = vmatprep.mubr.f32.mxu0 0.0
  %211 = vmatmul.mubr.f32.gmra.mxu0 %v43
  %v212 = vpop.f32.mrf.mxu0
  %v213 = vadd.f32 %v84, %v212
  %v214 = vpop.f32.mrf.mxu0
  %215 = vmatprep.mubr.f32.mxu0 0.0
  %216 = vmatmul.mubr.f32.gmra.mxu0 %v44
  %v217 = vpop.f32.mrf.mxu0
  %v218 = vadd.f32 %v84, %v217
  %v219 = vpop.f32.mrf.mxu0
  %220 = vmatprep.mubr.f32.mxu0 0.0
  %221 = vmatmul.mubr.f32.gmra.mxu0 %v45
  %v222 = vpop.f32.mrf.mxu0
  %v223 = vadd.f32 %v84, %v222
  %v224 = vpop.f32.mrf.mxu0
  %225 = vmatprep.mubr.f32.mxu0 0.0
  %226 = vmatmul.mubr.f32.gmra.mxu0 %v46
  %v227 = vpop.f32.mrf.mxu0
  %v228 = vadd.f32 %v84, %v227
  %v229 = vpop.f32.mrf.mxu0
  %230 = vmatprep.mubr.f32.mxu0 0.0
  %231 = vmatmul.mubr.f32.gmra.mxu0 %v47
  %v232 = vpop.f32.mrf.mxu0
  %v233 = vadd.f32 %v84, %v232
  %v234 = vpop.f32.mrf.mxu0
  %235 = vmatprep.mubr.f32.mxu0 0.0
  %236 = vmatmul.mubr.f32.gmra.mxu0 %v48
  %v237 = vpop.f32.mrf.mxu0
  %v238 = vadd.f32 %v84, %v237
  %v239 = vpop.f32.mrf.mxu0
  %240 = vmatprep.mubr.f32.mxu0 0.0
  %241 = vmatmul.mubr.f32.gmra.mxu0 %v49
  %v242 = vpop.f32.mrf.mxu0
  %v243 = vadd.f32 %v84, %v242
  %v244 = vpop.f32.mrf.mxu0
  %245 = vmatprep.mubr.f32.mxu0 0.0
  %246 = vmatmul.mubr.f32.gmra.mxu0 %v50
  %v247 = vpop.f32.mrf.mxu0
  %v248 = vadd.f32 %v84, %v247
  %v249 = vpop.f32.mrf.mxu0
  %250 = vmatprep.mubr.f32.mxu0 0.0
  %251 = vmatmul.mubr.f32.gmra.mxu0 %v51
  %v252 = vpop.f32.mrf.mxu0
  %v253 = vadd.f32 %v84, %v252
  %v254 = vpop.f32.mrf.mxu0
  %255 = vmatprep.mubr.f32.mxu0 0.0
  %256 = vmatmul.mubr.f32.gmra.mxu0 %v52
  %v257 = vpop.f32.mrf.mxu0
  %v258 = vadd.f32 %v84, %v257
  %v259 = vpop.f32.mrf.mxu0
  %260 = vmatprep.mubr.f32.mxu0 0.0
  %261 = vmatmul.mubr.f32.gmra.mxu0 %v53
  %v262 = vpop.f32.mrf.mxu0
  %v263 = vadd.f32 %v84, %v262
  %v264 = vpop.f32.mrf.mxu0
  %265 = vmatprep.mubr.f32.mxu0 0.0
  %266 = vmatmul.mubr.f32.gmra.mxu0 %v54
  %v267 = vpop.f32.mrf.mxu0
  %v268 = vadd.f32 %v84, %v267
  %v269 = vpop.f32.mrf.mxu0
  %270 = vmatprep.mubr.f32.mxu0 0.0
  %271 = vmatmul.mubr.f32.gmra.mxu0 %v55
  %v272 = vpop.f32.mrf.mxu0
  %v273 = vadd.f32 %v84, %v272
  %v274 = vpop.f32.mrf.mxu0
  %275 = vmatprep.mubr.f32.mxu0 0.0
  %276 = vmatmul.mubr.f32.gmra.mxu0 %v56
  %v277 = vpop.f32.mrf.mxu0
  %v278 = vadd.f32 %v84, %v277
  %v279 = vpop.f32.mrf.mxu0
  %280 = vmatprep.mubr.f32.mxu0 0.0
  %281 = vmatmul.mubr.f32.gmra.mxu0 %v57
  %v282 = vpop.f32.mrf.mxu0
  %v283 = vadd.f32 %v84, %v282
  %v284 = vpop.f32.mrf.mxu0
  %285 = vmatprep.mubr.f32.mxu0 0.0
  %286 = vmatmul.mubr.f32.gmra.mxu0 %v58
  %v287 = vpop.f32.mrf.mxu0
  %v288 = vadd.f32 %v84, %v287
  %v289 = vpop.f32.mrf.mxu0
  %290 = vmatprep.mubr.f32.mxu0 0.0
  %291 = vmatmul.mubr.f32.gmra.mxu0 %v59
  %v292 = vpop.f32.mrf.mxu0
  %v293 = vadd.f32 %v84, %v292
  %v294 = vpop.f32.mrf.mxu0
  %295 = vmatprep.mubr.f32.mxu0 0.0
  %296 = vmatmul.mubr.f32.gmra.mxu0 %v60
  %v297 = vpop.f32.mrf.mxu0
  %v298 = vadd.f32 %v84, %v297
  %v299 = vpop.f32.mrf.mxu0
  %300 = vmatprep.mubr.f32.mxu0 0.0
  %301 = vmatmul.mubr.f32.gmra.mxu0 %v61
  %v302 = vpop.f32.mrf.mxu0
  %v303 = vadd.f32 %v84, %v302
  %v304 = vpop.f32.mrf.mxu0
  %305 = vmatprep.mubr.f32.mxu0 0.0
  %306 = vmatmul.mubr.f32.gmra.mxu0 %v62
  %v307 = vpop.f32.mrf.mxu0
  %v308 = vadd.f32 %v84, %v307
  %v309 = vpop.f32.mrf.mxu0
  %310 = vmatprep.mubr.f32.mxu0 0.0
  %311 = vmatmul.mubr.f32.gmra.mxu0 %v63
  %v312 = vpop.f32.mrf.mxu0
  %v313 = vadd.f32 %v84, %v312
  %v314 = vpop.f32.mrf.mxu0
  %315 = vmatprep.mubr.f32.mxu0 0.0
  %316 = vmatmul.mubr.f32.gmra.mxu0 %v64
  %v317 = vpop.f32.mrf.mxu0
  %v318 = vadd.f32 %v84, %v317
  %v319 = vpop.f32.mrf.mxu0
  %320 = vmatprep.mubr.f32.mxu0 0.0
  %321 = vmatmul.mubr.f32.gmra.mxu0 %v65
  %v322 = vpop.f32.mrf.mxu0
  %v323 = vadd.f32 %v84, %v322
  %v324 = vpop.f32.mrf.mxu0
  %325 = vmatprep.mubr.f32.mxu0 0.0
  %326 = vmatmul.mubr.f32.gmra.mxu0 %v66
  %v327 = vpop.f32.mrf.mxu0
  %v328 = vadd.f32 %v84, %v327
  %v329 = vpop.f32.mrf.mxu0
  %330 = vmatprep.mubr.f32.mxu0 0.0
  %331 = vmatmul.mubr.f32.gmra.mxu0 %v67
  %v332 = vpop.f32.mrf.mxu0
  %v333 = vadd.f32 %v84, %v332
  %v334 = vpop.f32.mrf.mxu0
  %335 = vmatprep.mubr.f32.mxu0 0.0
  %336 = vmatmul.mubr.f32.gmra.mxu0 %v68
  %v337 = vpop.f32.mrf.mxu0
  %v338 = vadd.f32 %v84, %v337
  %v339 = vpop.f32.mrf.mxu0
  %340 = vmatprep.mubr.f32.mxu0 0.0
  %341 = vmatmul.mubr.f32.gmra.mxu0 %v69
  %v342 = vpop.f32.mrf.mxu0
  %v343 = vadd.f32 %v84, %v342
  %v344 = vpop.f32.mrf.mxu0
  %345 = vmatprep.mubr.f32.mxu0 0.0
  %346 = vmatmul.mubr.f32.gmra.mxu0 %v70
  %v347 = vpop.f32.mrf.mxu0
  %v348 = vadd.f32 %v84, %v347
  %v349 = vpop.f32.mrf.mxu0
  %350 = vmatprep.mubr.f32.mxu0 0.0
  %351 = vmatmul.mubr.f32.gmra.mxu0 %v71
  %v352 = vpop.f32.mrf.mxu0
  %v353 = vadd.f32 %v84, %v352
  %v354 = vpop.f32.mrf.mxu0
  %355 = vmatprep.mubr.f32.mxu0 0.0
  %356 = vmatmul.mubr.f32.gmra.mxu0 %v72
  %v357 = vpop.f32.mrf.mxu0
  %v358 = vadd.f32 %v84, %v357
  %v359 = vpop.f32.mrf.mxu0
  %360 = vmatprep.mubr.f32.mxu0 0.0
  %361 = vmatmul.mubr.f32.gmra.mxu0 %v73
  %v362 = vpop.f32.mrf.mxu0
  %v363 = vadd.f32 %v84, %v362
  %v364 = vpop.f32.mrf.mxu0
  %365 = vmatprep.mubr.f32.mxu0 0.0
  %366 = vmatmul.mubr.f32.gmra.mxu0 %v74
  %v367 = vpop.f32.mrf.mxu0
  %v368 = vadd.f32 %v84, %v367
  %v369 = vpop.f32.mrf.mxu0
  %370 = vmatprep.mubr.f32.mxu0 0.0
  %371 = vmatmul.mubr.f32.gmra.mxu0 %v75
  %v372 = vpop.f32.mrf.mxu0
  %v373 = vadd.f32 %v84, %v372
  %v374 = vpop.f32.mrf.mxu0
  %375 = vmatprep.mubr.f32.mxu0 0.0
  %376 = vmatmul.mubr.f32.gmra.mxu0 %v76
  %v377 = vpop.f32.mrf.mxu0
  %v378 = vadd.f32 %v84, %v377
  %v379 = vpop.f32.mrf.mxu0
  %380 = vmatprep.mubr.f32.mxu0 0.0
  %381 = vmatmul.mubr.f32.gmra.mxu0 %v77
  %v382 = vpop.f32.mrf.mxu0
  %v383 = vadd.f32 %v84, %v382
  %v384 = vpop.f32.mrf.mxu0
  %385 = vmatprep.mubr.f32.mxu0 0.0
  %386 = vmatmul.mubr.f32.gmra.mxu0 %v78
  %v387 = vpop.f32.mrf.mxu0
  %v388 = vadd.f32 %v84, %v387
  %v389 = vpop.f32.mrf.mxu0
  %390 = vmatprep.mubr.f32.mxu0 0.0
  %391 = vmatmul.mubr.f32.gmra.mxu0 %v79
  %v392 = vpop.f32.mrf.mxu0
  %v393 = vadd.f32 %v84, %v392
  %v394 = vpop.f32.mrf.mxu0
  %395 = vdwg.mxu0
  %v396 = vxor.u32 %v153, 2147483648
  %v397 = vxor.u32 %v158, 2147483648
  %v398 = vxor.u32 %v163, 2147483648
  %v399 = vxor.u32 %v168, 2147483648
  %v400 = vxor.u32 %v173, 2147483648
  %v401 = vxor.u32 %v178, 2147483648
  %v402 = vxor.u32 %v183, 2147483648
  %v403 = vxor.u32 %v188, 2147483648
  %v404 = vxor.u32 %v193, 2147483648
  %v405 = vxor.u32 %v198, 2147483648
  %v406 = vxor.u32 %v203, 2147483648
  %v407 = vxor.u32 %v208, 2147483648
  %v408 = vxor.u32 %v213, 2147483648
  %v409 = vxor.u32 %v218, 2147483648
  %v410 = vxor.u32 %v223, 2147483648
  %v411 = vxor.u32 %v228, 2147483648
  %v412 = vxor.u32 %v233, 2147483648
  %v413 = vxor.u32 %v238, 2147483648
  %v414 = vxor.u32 %v243, 2147483648
  %v415 = vxor.u32 %v248, 2147483648
  %v416 = vxor.u32 %v253, 2147483648
  %v417 = vxor.u32 %v258, 2147483648
  %v418 = vxor.u32 %v263, 2147483648
  %v419 = vxor.u32 %v268, 2147483648
  %v420 = vxor.u32 %v273, 2147483648
  %v421 = vxor.u32 %v278, 2147483648
  %v422 = vxor.u32 %v283, 2147483648
  %v423 = vxor.u32 %v288, 2147483648
  %v424 = vxor.u32 %v293, 2147483648
  %v425 = vxor.u32 %v298, 2147483648
  %v426 = vxor.u32 %v303, 2147483648
  %v427 = vxor.u32 %v308, 2147483648
  %v428 = vxor.u32 %v313, 2147483648
  %v429 = vxor.u32 %v318, 2147483648
  %v430 = vxor.u32 %v323, 2147483648
  %v431 = vxor.u32 %v328, 2147483648
  %v432 = vxor.u32 %v333, 2147483648
  %v433 = vxor.u32 %v338, 2147483648
  %v434 = vxor.u32 %v343, 2147483648
  %v435 = vxor.u32 %v348, 2147483648
  %v436 = vxor.u32 %v353, 2147483648
  %v437 = vxor.u32 %v358, 2147483648
  %v438 = vxor.u32 %v363, 2147483648
  %v439 = vxor.u32 %v368, 2147483648
  %v440 = vxor.u32 %v373, 2147483648
  %v441 = vxor.u32 %v378, 2147483648
  %v442 = vxor.u32 %v383, 2147483648
  %v443 = vxor.u32 %v388, 2147483648
  %v444 = vxor.u32 %v393, 2147483648
  %v445 = vmul.f32 %v396, 1.442695
  %v446 = vpow.pop %v445
  %v447 = vmul.f32 %v397, 1.442695
  %v448 = vpow.pop %v447
  %v449 = vmul.f32 %v398, 1.442695
  %v450 = vpow.pop %v449
  %v451 = vmul.f32 %v399, 1.442695
  %v452 = vpow.pop %v451
  %v453 = vmul.f32 %v400, 1.442695
  %v454 = vpow.pop %v453
  %v455 = vmul.f32 %v401, 1.442695
  %v456 = vpow.pop %v455
  %v457 = vmul.f32 %v402, 1.442695
  %v458 = vpow.pop %v457
  %v459 = vmul.f32 %v403, 1.442695
  %v460 = vpow.pop %v459
  %v461 = vmul.f32 %v404, 1.442695
  %v462 = vpow.pop %v461
  %v463 = vmul.f32 %v405, 1.442695
  %v464 = vpow.pop %v463
  %v465 = vmul.f32 %v406, 1.442695
  %v466 = vpow.pop %v465
  %v467 = vmul.f32 %v407, 1.442695
  %v468 = vpow.pop %v467
  %v469 = vmul.f32 %v408, 1.442695
  %v470 = vpow.pop %v469
  %v471 = vmul.f32 %v409, 1.442695
  %v472 = vpow.pop %v471
  %v473 = vmul.f32 %v410, 1.442695
  %v474 = vpow.pop %v473
  %v475 = vmul.f32 %v411, 1.442695
  %v476 = vpow.pop %v475
  %v477 = vmul.f32 %v412, 1.442695
  %v478 = vpow.pop %v477
  %v479 = vmul.f32 %v413, 1.442695
  %v480 = vpow.pop %v479
  %v481 = vmul.f32 %v414, 1.442695
  %v482 = vpow.pop %v481
  %v483 = vmul.f32 %v415, 1.442695
  %v484 = vpow.pop %v483
  %v485 = vmul.f32 %v416, 1.442695
  %v486 = vpow.pop %v485
  %v487 = vmul.f32 %v417, 1.442695
  %v488 = vpow.pop %v487
  %v489 = vmul.f32 %v418, 1.442695
  %v490 = vpow.pop %v489
  %v491 = vmul.f32 %v419, 1.442695
  %v492 = vpow.pop %v491
  %v493 = vmul.f32 %v420, 1.442695
  %v494 = vpow.pop %v493
  %v495 = vmul.f32 %v421, 1.442695
  %v496 = vpow.pop %v495
  %v497 = vmul.f32 %v422, 1.442695
  %v498 = vpow.pop %v497
  %v499 = vmul.f32 %v423, 1.442695
  %v500 = vpow.pop %v499
  %v501 = vmul.f32 %v424, 1.442695
  %v502 = vpow.pop %v501
  %v503 = vmul.f32 %v425, 1.442695
  %v504 = vpow.pop %v503
  %v505 = vmul.f32 %v426, 1.442695
  %v506 = vpow.pop %v505
  %v507 = vmul.f32 %v427, 1.442695
  %v508 = vpow.pop %v507
  %v509 = vmul.f32 %v428, 1.442695
  %v510 = vpow.pop %v509
  %v511 = vmul.f32 %v429, 1.442695
  %v512 = vpow.pop %v511
  %v513 = vmul.f32 %v430, 1.442695
  %v514 = vpow.pop %v513
  %v515 = vmul.f32 %v431, 1.442695
  %v516 = vpow.pop %v515
  %v517 = vmul.f32 %v432, 1.442695
  %v518 = vpow.pop %v517
  %v519 = vmul.f32 %v433, 1.442695
  %v520 = vpow.pop %v519
  %v521 = vmul.f32 %v434, 1.442695
  %v522 = vpow.pop %v521
  %v523 = vmul.f32 %v435, 1.442695
  %v524 = vpow.pop %v523
  %v525 = vmul.f32 %v436, 1.442695
  %v526 = vpow.pop %v525
  %v527 = vmul.f32 %v437, 1.442695
  %v528 = vpow.pop %v527
  %v529 = vmul.f32 %v438, 1.442695
  %v530 = vpow.pop %v529
  %v531 = vmul.f32 %v439, 1.442695
  %v532 = vpow.pop %v531
  %v533 = vmul.f32 %v440, 1.442695
  %v534 = vpow.pop %v533
  %v535 = vmul.f32 %v441, 1.442695
  %v536 = vpow.pop %v535
  %v537 = vmul.f32 %v442, 1.442695
  %v538 = vpow.pop %v537
  %v539 = vmul.f32 %v443, 1.442695
  %v540 = vpow.pop %v539
  %v541 = vmul.f32 %v444, 1.442695
  %v542 = vpow.pop %v541
  %v543 = vadd.f32 %v446, 1.0
  %v544 = vadd.f32 %v448, 1.0
  %v545 = vadd.f32 %v450, 1.0
  %v546 = vadd.f32 %v452, 1.0
  %v547 = vadd.f32 %v454, 1.0
  %v548 = vadd.f32 %v456, 1.0
  %v549 = vadd.f32 %v458, 1.0
  %v550 = vadd.f32 %v460, 1.0
  %v551 = vadd.f32 %v462, 1.0
  %v552 = vadd.f32 %v464, 1.0
  %v553 = vadd.f32 %v466, 1.0
  %v554 = vadd.f32 %v468, 1.0
  %v555 = vadd.f32 %v470, 1.0
  %v556 = vadd.f32 %v472, 1.0
  %v557 = vadd.f32 %v474, 1.0
  %v558 = vadd.f32 %v476, 1.0
  %v559 = vadd.f32 %v478, 1.0
  %v560 = vadd.f32 %v480, 1.0
  %v561 = vadd.f32 %v482, 1.0
  %v562 = vadd.f32 %v484, 1.0
  %v563 = vadd.f32 %v486, 1.0
  %v564 = vadd.f32 %v488, 1.0
  %v565 = vadd.f32 %v490, 1.0
  %v566 = vadd.f32 %v492, 1.0
  %v567 = vadd.f32 %v494, 1.0
  %v568 = vadd.f32 %v496, 1.0
  %v569 = vadd.f32 %v498, 1.0
  %v570 = vadd.f32 %v500, 1.0
  %v571 = vadd.f32 %v502, 1.0
  %v572 = vadd.f32 %v504, 1.0
  %v573 = vadd.f32 %v506, 1.0
  %v574 = vadd.f32 %v508, 1.0
  %v575 = vadd.f32 %v510, 1.0
  %v576 = vadd.f32 %v512, 1.0
  %v577 = vadd.f32 %v514, 1.0
  %v578 = vadd.f32 %v516, 1.0
  %v579 = vadd.f32 %v518, 1.0
  %v580 = vadd.f32 %v520, 1.0
  %v581 = vadd.f32 %v522, 1.0
  %v582 = vadd.f32 %v524, 1.0
  %v583 = vadd.f32 %v526, 1.0
  %v584 = vadd.f32 %v528, 1.0
  %v585 = vadd.f32 %v530, 1.0
  %v586 = vadd.f32 %v532, 1.0
  %v587 = vadd.f32 %v534, 1.0
  %v588 = vadd.f32 %v536, 1.0
  %v589 = vadd.f32 %v538, 1.0
  %v590 = vadd.f32 %v540, 1.0
  %v591 = vadd.f32 %v542, 1.0
  %v592 = vrcp.pop %v543
  %v593 = vmul.f32 1.0, %v592
  %v594 = vrcp.pop %v544
  %v595 = vmul.f32 1.0, %v594
  %v596 = vrcp.pop %v545
  %v597 = vmul.f32 1.0, %v596
  %v598 = vrcp.pop %v546
  %v599 = vmul.f32 1.0, %v598
  %v600 = vrcp.pop %v547
  %v601 = vmul.f32 1.0, %v600
  %v602 = vrcp.pop %v548
  %v603 = vmul.f32 1.0, %v602
  %v604 = vrcp.pop %v549
  %v605 = vmul.f32 1.0, %v604
  %v606 = vrcp.pop %v550
  %v607 = vmul.f32 1.0, %v606
  %v608 = vrcp.pop %v551
  %v609 = vmul.f32 1.0, %v608
  %v610 = vrcp.pop %v552
  %v611 = vmul.f32 1.0, %v610
  %v612 = vrcp.pop %v553
  %v613 = vmul.f32 1.0, %v612
  %v614 = vrcp.pop %v554
  %v615 = vmul.f32 1.0, %v614
  %v616 = vrcp.pop %v555
  %v617 = vmul.f32 1.0, %v616
  %v618 = vrcp.pop %v556
  %v619 = vmul.f32 1.0, %v618
  %v620 = vrcp.pop %v557
  %v621 = vmul.f32 1.0, %v620
  %v622 = vrcp.pop %v558
  %v623 = vmul.f32 1.0, %v622
  %v624 = vrcp.pop %v559
  %v625 = vmul.f32 1.0, %v624
  %v626 = vrcp.pop %v560
  %v627 = vmul.f32 1.0, %v626
  %v628 = vrcp.pop %v561
  %v629 = vmul.f32 1.0, %v628
  %v630 = vrcp.pop %v562
  %v631 = vmul.f32 1.0, %v630
  %v632 = vrcp.pop %v563
  %v633 = vmul.f32 1.0, %v632
  %v634 = vrcp.pop %v564
  %v635 = vmul.f32 1.0, %v634
  %v636 = vrcp.pop %v565
  %v637 = vmul.f32 1.0, %v636
  %v638 = vrcp.pop %v566
  %v639 = vmul.f32 1.0, %v638
  %v640 = vrcp.pop %v567
  %v641 = vmul.f32 1.0, %v640
  %v642 = vrcp.pop %v568
  %v643 = vmul.f32 1.0, %v642
  %v644 = vrcp.pop %v569
  %v645 = vmul.f32 1.0, %v644
  %v646 = vrcp.pop %v570
  %v647 = vmul.f32 1.0, %v646
  %v648 = vrcp.pop %v571
  %v649 = vmul.f32 1.0, %v648
  %v650 = vrcp.pop %v572
  %v651 = vmul.f32 1.0, %v650
  %v652 = vrcp.pop %v573
  %v653 = vmul.f32 1.0, %v652
  %v654 = vrcp.pop %v574
  %v655 = vmul.f32 1.0, %v654
  %v656 = vrcp.pop %v575
  %v657 = vmul.f32 1.0, %v656
  %v658 = vrcp.pop %v576
  %v659 = vmul.f32 1.0, %v658
  %v660 = vrcp.pop %v577
  %v661 = vmul.f32 1.0, %v660
  %v662 = vrcp.pop %v578
  %v663 = vmul.f32 1.0, %v662
  %v664 = vrcp.pop %v579
  %v665 = vmul.f32 1.0, %v664
  %v666 = vrcp.pop %v580
  %v667 = vmul.f32 1.0, %v666
  %v668 = vrcp.pop %v581
  %v669 = vmul.f32 1.0, %v668
  %v670 = vrcp.pop %v582
  %v671 = vmul.f32 1.0, %v670
  %v672 = vrcp.pop %v583
  %v673 = vmul.f32 1.0, %v672
  %v674 = vrcp.pop %v584
  %v675 = vmul.f32 1.0, %v674
  %v676 = vrcp.pop %v585
  %v677 = vmul.f32 1.0, %v676
  %v678 = vrcp.pop %v586
  %v679 = vmul.f32 1.0, %v678
  %v680 = vrcp.pop %v587
  %v681 = vmul.f32 1.0, %v680
  %v682 = vrcp.pop %v588
  %v683 = vmul.f32 1.0, %v682
  %v684 = vrcp.pop %v589
  %v685 = vmul.f32 1.0, %v684
  %v686 = vrcp.pop %v590
  %v687 = vmul.f32 1.0, %v686
  %v688 = vrcp.pop %v591
  %v689 = vmul.f32 1.0, %v688
  %s690 = scalar_lea.vmem %s0, 392
  %v691 = vld [vmem:[%s690] sm:$0xff]
  %v692 = vld [vmem:[%s690 + $0x8] sm:$0xff]
  %v693 = vld [vmem:[%s690 + $0x10] sm:$0xff]
  %v694 = vld [vmem:[%s690 + $0x18] sm:$0xff]
  %v695 = vld [vmem:[%s690 + $0x20] sm:$0xff]
  %v696 = vld [vmem:[%s690 + $0x28] sm:$0xff]
  %v697 = vld [vmem:[%s690 + $0x30] sm:$0xff]
  %v698 = vld [vmem:[%s690 + $0x38] sm:$0xff]
  %v699 = vld [vmem:[%s690 + $0x40] sm:$0xff]
  %v700 = vld [vmem:[%s690 + $0x48] sm:$0xff]
  %v701 = vld [vmem:[%s690 + $0x50] sm:$0xff]
  %v702 = vld [vmem:[%s690 + $0x58] sm:$0xff]
  %v703 = vld [vmem:[%s690 + $0x60] sm:$0xff]
  %v704 = vld [vmem:[%s690 + $0x68] sm:$0xff]
  %v705 = vld [vmem:[%s690 + $0x70] sm:$0xff]
  %v706 = vld [vmem:[%s690 + $0x78] sm:$0xff]
  %v707 = vld [vmem:[%s690 + $0x80] sm:$0xff]
  %v708 = vld [vmem:[%s690 + $0x88] sm:$0xff]
  %v709 = vld [vmem:[%s690 + $0x90] sm:$0xff]
  %v710 = vld [vmem:[%s690 + $0x98] sm:$0xff]
  %v711 = vld [vmem:[%s690 + $0xa0] sm:$0xff]
  %v712 = vld [vmem:[%s690 + $0xa8] sm:$0xff]
  %v713 = vld [vmem:[%s690 + $0xb0] sm:$0xff]
  %v714 = vld [vmem:[%s690 + $0xb8] sm:$0xff]
  %v715 = vld [vmem:[%s690 + $0xc0] sm:$0xff]
  %v716 = vld [vmem:[%s690 + $0xc8] sm:$0xff]
  %v717 = vld [vmem:[%s690 + $0xd0] sm:$0xff]
  %v718 = vld [vmem:[%s690 + $0xd8] sm:$0xff]
  %v719 = vld [vmem:[%s690 + $0xe0] sm:$0xff]
  %v720 = vld [vmem:[%s690 + $0xe8] sm:$0xff]
  %v721 = vld [vmem:[%s690 + $0xf0] sm:$0xff]
  %v722 = vld [vmem:[%s690 + $0xf8] sm:$0xff]
  %v723 = vld [vmem:[%s690 + $0x100] sm:$0xff]
  %v724 = vld [vmem:[%s690 + $0x108] sm:$0xff]
  %v725 = vld [vmem:[%s690 + $0x110] sm:$0xff]
  %v726 = vld [vmem:[%s690 + $0x118] sm:$0xff]
  %v727 = vld [vmem:[%s690 + $0x120] sm:$0xff]
  %v728 = vld [vmem:[%s690 + $0x128] sm:$0xff]
  %v729 = vld [vmem:[%s690 + $0x130] sm:$0xff]
  %v730 = vld [vmem:[%s690 + $0x138] sm:$0xff]
  %v731 = vld [vmem:[%s690 + $0x140] sm:$0xff]
  %v732 = vld [vmem:[%s690 + $0x148] sm:$0xff]
  %v733 = vld [vmem:[%s690 + $0x150] sm:$0xff]
  %v734 = vld [vmem:[%s690 + $0x158] sm:$0xff]
  %v735 = vld [vmem:[%s690 + $0x160] sm:$0xff]
  %v736 = vld [vmem:[%s690 + $0x168] sm:$0xff]
  %v737 = vld [vmem:[%s690 + $0x170] sm:$0xff]
  %v738 = vld [vmem:[%s690 + $0x178] sm:$0xff]
  %v739 = vld [vmem:[%s690 + $0x180] sm:$0xff]
  %740 = vmatprep.subr.mxu0 0.0
  %741 = vmatpush1.msra.mxu0 %v29
  %742 = vmatprep.subr.mxu0 0.0
  %743 = vmatpush1.msra.mxu0 %v28
  %744 = vmatprep.subr.mxu0 0.0
  %745 = vmatpush1.msra.mxu0 %v27
  %746 = vmatprep.subr.mxu0 0.0
  %747 = vmatpush1.msra.mxu0 %v26
  %748 = vmatprep.subr.mxu0 0.0
  %749 = vmatpush1.msra.mxu0 %v25
  %750 = vmatprep.subr.mxu0 0.0
  %751 = vmatpush1.msra.mxu0 %v24
  %752 = vmatprep.subr.mxu0 0.0
  %753 = vmatpush1.msra.mxu0 %v23
  %754 = vmatprep.subr.mxu0 0.0
  %755 = vmatpush1.msra.mxu0 %v22
  %756 = vmatprep.subr.mxu0 0.0
  %757 = vmatpush1.msra.mxu0 %v21
  %758 = vmatprep.subr.mxu0 0.0
  %759 = vmatpush1.msra.mxu0 %v20
  %760 = vmatprep.subr.mxu0 0.0
  %761 = vmatpush1.msra.mxu0 %v19
  %762 = vmatprep.subr.mxu0 0.0
  %763 = vmatpush1.msra.mxu0 %v18
  %764 = vmatprep.subr.mxu0 0.0
  %765 = vmatpush1.msra.mxu0 %v17
  %766 = vmatprep.subr.mxu0 0.0
  %767 = vmatpush1.msra.mxu0 %v16
  %768 = vmatprep.subr.mxu0 0.0
  %769 = vmatpush1.msra.mxu0 %v15
  %770 = vmatprep.subr.mxu0 0.0
  %771 = vmatpush1.msra.mxu0 %v14
  %772 = vmatprep.subr.mxu0 0.0
  %773 = vmatpush2.msra.mxu0 0.0
  %774 = vmatprep.subr.mxu0 0.0
  %775 = vmatpush2.msra.mxu0 0.0
  %776 = vmatprep.subr.mxu0 0.0
  %777 = vmatpush2.msra.mxu0 0.0
  %778 = vmatprep.subr.mxu0 0.0
  %779 = vmatpush2.msra.mxu0 0.0
  %780 = vmatprep.subr.mxu0 0.0
  %781 = vmatpush2.msra.mxu0 0.0
  %782 = vmatprep.subr.mxu0 0.0
  %783 = vmatpush2.msra.mxu0 0.0
  %784 = vmatprep.subr.mxu0 0.0
  %785 = vmatpush2.msra.mxu0 0.0
  %786 = vmatprep.subr.mxu0 0.0
  %787 = vmatpush2.msra.mxu0 0.0
  %788 = vmatprep.subr.mxu0 0.0
  %789 = vmatpush2.msra.mxu0 0.0
  %790 = vmatprep.subr.mxu0 0.0
  %791 = vmatpush2.msra.mxu0 0.0
  %792 = vmatprep.subr.mxu0 0.0
  %793 = vmatpush2.msra.mxu0 0.0
  %794 = vmatprep.subr.mxu0 0.0
  %795 = vmatpush2.msra.mxu0 0.0
  %796 = vmatprep.subr.mxu0 0.0
  %797 = vmatpush2.msra.mxu0 0.0
  %798 = vmatprep.subr.mxu0 0.0
  %799 = vmatpush2.msra.mxu0 0.0
  %800 = vmatprep.subr.mxu0 0.0
  %801 = vmatpush2.msra.mxu0 0.0
  %802 = vmatprep.subr.mxu0 0.0
  %803 = vmatpush2.msra.mxu0 0.0
  %804 = vmatprep.mubr.f32.mxu0 0.0
  %805 = vmatmul.mubr.f32.gmra.mxu0 %v691
  %v806 = vpop.f32.mrf.mxu0
  %v807 = vadd.f32 %v84, %v806
  %v808 = vpop.f32.mrf.mxu0
  %809 = vmatprep.mubr.f32.mxu0 0.0
  %810 = vmatmul.mubr.f32.gmra.mxu0 %v692
  %v811 = vpop.f32.mrf.mxu0
  %v812 = vadd.f32 %v84, %v811
  %v813 = vpop.f32.mrf.mxu0
  %814 = vmatprep.mubr.f32.mxu0 0.0
  %815 = vmatmul.mubr.f32.gmra.mxu0 %v693
  %v816 = vpop.f32.mrf.mxu0
  %v817 = vadd.f32 %v84, %v816
  %v818 = vpop.f32.mrf.mxu0
  %819 = vmatprep.mubr.f32.mxu0 0.0
  %820 = vmatmul.mubr.f32.gmra.mxu0 %v694
  %v821 = vpop.f32.mrf.mxu0
  %v822 = vadd.f32 %v84, %v821
  %v823 = vpop.f32.mrf.mxu0
  %824 = vmatprep.mubr.f32.mxu0 0.0
  %825 = vmatmul.mubr.f32.gmra.mxu0 %v695
  %v826 = vpop.f32.mrf.mxu0
  %v827 = vadd.f32 %v84, %v826
  %v828 = vpop.f32.mrf.mxu0
  %829 = vmatprep.mubr.f32.mxu0 0.0
  %830 = vmatmul.mubr.f32.gmra.mxu0 %v696
  %v831 = vpop.f32.mrf.mxu0
  %v832 = vadd.f32 %v84, %v831
  %v833 = vpop.f32.mrf.mxu0
  %834 = vmatprep.mubr.f32.mxu0 0.0
  %835 = vmatmul.mubr.f32.gmra.mxu0 %v697
  %v836 = vpop.f32.mrf.mxu0
  %v837 = vadd.f32 %v84, %v836
  %v838 = vpop.f32.mrf.mxu0
  %839 = vmatprep.mubr.f32.mxu0 0.0
  %840 = vmatmul.mubr.f32.gmra.mxu0 %v698
  %v841 = vpop.f32.mrf.mxu0
  %v842 = vadd.f32 %v84, %v841
  %v843 = vpop.f32.mrf.mxu0
  %844 = vmatprep.mubr.f32.mxu0 0.0
  %845 = vmatmul.mubr.f32.gmra.mxu0 %v699
  %v846 = vpop.f32.mrf.mxu0
  %v847 = vadd.f32 %v84, %v846
  %v848 = vpop.f32.mrf.mxu0
  %849 = vmatprep.mubr.f32.mxu0 0.0
  %850 = vmatmul.mubr.f32.gmra.mxu0 %v700
  %v851 = vpop.f32.mrf.mxu0
  %v852 = vadd.f32 %v84, %v851
  %v853 = vpop.f32.mrf.mxu0
  %854 = vmatprep.mubr.f32.mxu0 0.0
  %855 = vmatmul.mubr.f32.gmra.mxu0 %v701
  %v856 = vpop.f32.mrf.mxu0
  %v857 = vadd.f32 %v84, %v856
  %v858 = vpop.f32.mrf.mxu0
  %859 = vmatprep.mubr.f32.mxu0 0.0
  %860 = vmatmul.mubr.f32.gmra.mxu0 %v702
  %v861 = vpop.f32.mrf.mxu0
  %v862 = vadd.f32 %v84, %v861
  %v863 = vpop.f32.mrf.mxu0
  %864 = vmatprep.mubr.f32.mxu0 0.0
  %865 = vmatmul.mubr.f32.gmra.mxu0 %v703
  %v866 = vpop.f32.mrf.mxu0
  %v867 = vadd.f32 %v84, %v866
  %v868 = vpop.f32.mrf.mxu0
  %869 = vmatprep.mubr.f32.mxu0 0.0
  %870 = vmatmul.mubr.f32.gmra.mxu0 %v704
  %v871 = vpop.f32.mrf.mxu0
  %v872 = vadd.f32 %v84, %v871
  %v873 = vpop.f32.mrf.mxu0
  %874 = vmatprep.mubr.f32.mxu0 0.0
  %875 = vmatmul.mubr.f32.gmra.mxu0 %v705
  %v876 = vpop.f32.mrf.mxu0
  %v877 = vadd.f32 %v84, %v876
  %v878 = vpop.f32.mrf.mxu0
  %879 = vmatprep.mubr.f32.mxu0 0.0
  %880 = vmatmul.mubr.f32.gmra.mxu0 %v706
  %v881 = vpop.f32.mrf.mxu0
  %v882 = vadd.f32 %v84, %v881
  %v883 = vpop.f32.mrf.mxu0
  %884 = vmatprep.mubr.f32.mxu0 0.0
  %885 = vmatmul.mubr.f32.gmra.mxu0 %v707
  %v886 = vpop.f32.mrf.mxu0
  %v887 = vadd.f32 %v84, %v886
  %v888 = vpop.f32.mrf.mxu0
  %889 = vmatprep.mubr.f32.mxu0 0.0
  %890 = vmatmul.mubr.f32.gmra.mxu0 %v708
  %v891 = vpop.f32.mrf.mxu0
  %v892 = vadd.f32 %v84, %v891
  %v893 = vpop.f32.mrf.mxu0
  %894 = vmatprep.mubr.f32.mxu0 0.0
  %895 = vmatmul.mubr.f32.gmra.mxu0 %v709
  %v896 = vpop.f32.mrf.mxu0
  %v897 = vadd.f32 %v84, %v896
  %v898 = vpop.f32.mrf.mxu0
  %899 = vmatprep.mubr.f32.mxu0 0.0
  %900 = vmatmul.mubr.f32.gmra.mxu0 %v710
  %v901 = vpop.f32.mrf.mxu0
  %v902 = vadd.f32 %v84, %v901
  %v903 = vpop.f32.mrf.mxu0
  %904 = vmatprep.mubr.f32.mxu0 0.0
  %905 = vmatmul.mubr.f32.gmra.mxu0 %v711
  %v906 = vpop.f32.mrf.mxu0
  %v907 = vadd.f32 %v84, %v906
  %v908 = vpop.f32.mrf.mxu0
  %909 = vmatprep.mubr.f32.mxu0 0.0
  %910 = vmatmul.mubr.f32.gmra.mxu0 %v712
  %v911 = vpop.f32.mrf.mxu0
  %v912 = vadd.f32 %v84, %v911
  %v913 = vpop.f32.mrf.mxu0
  %914 = vmatprep.mubr.f32.mxu0 0.0
  %915 = vmatmul.mubr.f32.gmra.mxu0 %v713
  %v916 = vpop.f32.mrf.mxu0
  %v917 = vadd.f32 %v84, %v916
  %v918 = vpop.f32.mrf.mxu0
  %919 = vmatprep.mubr.f32.mxu0 0.0
  %920 = vmatmul.mubr.f32.gmra.mxu0 %v714
  %v921 = vpop.f32.mrf.mxu0
  %v922 = vadd.f32 %v84, %v921
  %v923 = vpop.f32.mrf.mxu0
  %924 = vmatprep.mubr.f32.mxu0 0.0
  %925 = vmatmul.mubr.f32.gmra.mxu0 %v715
  %v926 = vpop.f32.mrf.mxu0
  %v927 = vadd.f32 %v84, %v926
  %v928 = vpop.f32.mrf.mxu0
  %929 = vmatprep.mubr.f32.mxu0 0.0
  %930 = vmatmul.mubr.f32.gmra.mxu0 %v716
  %v931 = vpop.f32.mrf.mxu0
  %v932 = vadd.f32 %v84, %v931
  %v933 = vpop.f32.mrf.mxu0
  %934 = vmatprep.mubr.f32.mxu0 0.0
  %935 = vmatmul.mubr.f32.gmra.mxu0 %v717
  %v936 = vpop.f32.mrf.mxu0
  %v937 = vadd.f32 %v84, %v936
  %v938 = vpop.f32.mrf.mxu0
  %939 = vmatprep.mubr.f32.mxu0 0.0
  %940 = vmatmul.mubr.f32.gmra.mxu0 %v718
  %v941 = vpop.f32.mrf.mxu0
  %v942 = vadd.f32 %v84, %v941
  %v943 = vpop.f32.mrf.mxu0
  %944 = vmatprep.mubr.f32.mxu0 0.0
  %945 = vmatmul.mubr.f32.gmra.mxu0 %v719
  %v946 = vpop.f32.mrf.mxu0
  %v947 = vadd.f32 %v84, %v946
  %v948 = vpop.f32.mrf.mxu0
  %949 = vmatprep.mubr.f32.mxu0 0.0
  %950 = vmatmul.mubr.f32.gmra.mxu0 %v720
  %v951 = vpop.f32.mrf.mxu0
  %v952 = vadd.f32 %v84, %v951
  %v953 = vpop.f32.mrf.mxu0
  %954 = vmatprep.mubr.f32.mxu0 0.0
  %955 = vmatmul.mubr.f32.gmra.mxu0 %v721
  %v956 = vpop.f32.mrf.mxu0
  %v957 = vadd.f32 %v84, %v956
  %v958 = vpop.f32.mrf.mxu0
  %959 = vmatprep.mubr.f32.mxu0 0.0
  %960 = vmatmul.mubr.f32.gmra.mxu0 %v722
  %v961 = vpop.f32.mrf.mxu0
  %v962 = vadd.f32 %v84, %v961
  %v963 = vpop.f32.mrf.mxu0
  %964 = vmatprep.mubr.f32.mxu0 0.0
  %965 = vmatmul.mubr.f32.gmra.mxu0 %v723
  %v966 = vpop.f32.mrf.mxu0
  %v967 = vadd.f32 %v84, %v966
  %v968 = vpop.f32.mrf.mxu0
  %969 = vmatprep.mubr.f32.mxu0 0.0
  %970 = vmatmul.mubr.f32.gmra.mxu0 %v724
  %v971 = vpop.f32.mrf.mxu0
  %v972 = vadd.f32 %v84, %v971
  %v973 = vpop.f32.mrf.mxu0
  %974 = vmatprep.mubr.f32.mxu0 0.0
  %975 = vmatmul.mubr.f32.gmra.mxu0 %v725
  %v976 = vpop.f32.mrf.mxu0
  %v977 = vadd.f32 %v84, %v976
  %v978 = vpop.f32.mrf.mxu0
  %979 = vmatprep.mubr.f32.mxu0 0.0
  %980 = vmatmul.mubr.f32.gmra.mxu0 %v726
  %v981 = vpop.f32.mrf.mxu0
  %v982 = vadd.f32 %v84, %v981
  %v983 = vpop.f32.mrf.mxu0
  %984 = vmatprep.mubr.f32.mxu0 0.0
  %985 = vmatmul.mubr.f32.gmra.mxu0 %v727
  %v986 = vpop.f32.mrf.mxu0
  %v987 = vadd.f32 %v84, %v986
  %v988 = vpop.f32.mrf.mxu0
  %989 = vmatprep.mubr.f32.mxu0 0.0
  %990 = vmatmul.mubr.f32.gmra.mxu0 %v728
  %v991 = vpop.f32.mrf.mxu0
  %v992 = vadd.f32 %v84, %v991
  %v993 = vpop.f32.mrf.mxu0
  %994 = vmatprep.mubr.f32.mxu0 0.0
  %995 = vmatmul.mubr.f32.gmra.mxu0 %v729
  %v996 = vpop.f32.mrf.mxu0
  %v997 = vadd.f32 %v84, %v996
  %v998 = vpop.f32.mrf.mxu0
  %999 = vmatprep.mubr.f32.mxu0 0.0
  %1000 = vmatmul.mubr.f32.gmra.mxu0 %v730
  %v1001 = vpop.f32.mrf.mxu0
  %v1002 = vadd.f32 %v84, %v1001
  %v1003 = vpop.f32.mrf.mxu0
  %1004 = vmatprep.mubr.f32.mxu0 0.0
  %1005 = vmatmul.mubr.f32.gmra.mxu0 %v731
  %v1006 = vpop.f32.mrf.mxu0
  %v1007 = vadd.f32 %v84, %v1006
  %v1008 = vpop.f32.mrf.mxu0
  %1009 = vmatprep.mubr.f32.mxu0 0.0
  %1010 = vmatmul.mubr.f32.gmra.mxu0 %v732
  %v1011 = vpop.f32.mrf.mxu0
  %v1012 = vadd.f32 %v84, %v1011
  %v1013 = vpop.f32.mrf.mxu0
  %1014 = vmatprep.mubr.f32.mxu0 0.0
  %1015 = vmatmul.mubr.f32.gmra.mxu0 %v733
  %v1016 = vpop.f32.mrf.mxu0
  %v1017 = vadd.f32 %v84, %v1016
  %v1018 = vpop.f32.mrf.mxu0
  %1019 = vmatprep.mubr.f32.mxu0 0.0
  %1020 = vmatmul.mubr.f32.gmra.mxu0 %v734
  %v1021 = vpop.f32.mrf.mxu0
  %v1022 = vadd.f32 %v84, %v1021
  %v1023 = vpop.f32.mrf.mxu0
  %1024 = vmatprep.mubr.f32.mxu0 0.0
  %1025 = vmatmul.mubr.f32.gmra.mxu0 %v735
  %v1026 = vpop.f32.mrf.mxu0
  %v1027 = vadd.f32 %v84, %v1026
  %v1028 = vpop.f32.mrf.mxu0
  %1029 = vmatprep.mubr.f32.mxu0 0.0
  %1030 = vmatmul.mubr.f32.gmra.mxu0 %v736
  %v1031 = vpop.f32.mrf.mxu0
  %v1032 = vadd.f32 %v84, %v1031
  %v1033 = vpop.f32.mrf.mxu0
  %1034 = vmatprep.mubr.f32.mxu0 0.0
  %1035 = vmatmul.mubr.f32.gmra.mxu0 %v737
  %v1036 = vpop.f32.mrf.mxu0
  %v1037 = vadd.f32 %v84, %v1036
  %v1038 = vpop.f32.mrf.mxu0
  %1039 = vmatprep.mubr.f32.mxu0 0.0
  %1040 = vmatmul.mubr.f32.gmra.mxu0 %v738
  %v1041 = vpop.f32.mrf.mxu0
  %v1042 = vadd.f32 %v84, %v1041
  %v1043 = vpop.f32.mrf.mxu0
  %1044 = vmatprep.mubr.f32.mxu0 0.0
  %1045 = vmatmul.mubr.f32.gmra.mxu0 %v739
  %v1046 = vpop.f32.mrf.mxu0
  %v1047 = vadd.f32 %v84, %v1046
  %v1048 = vpop.f32.mrf.mxu0
  %1049 = vdwg.mxu0
  %v1050 = vxor.u32 %v807, 2147483648
  %v1051 = vxor.u32 %v812, 2147483648
  %v1052 = vxor.u32 %v817, 2147483648
  %v1053 = vxor.u32 %v822, 2147483648
  %v1054 = vxor.u32 %v827, 2147483648
  %v1055 = vxor.u32 %v832, 2147483648
  %v1056 = vxor.u32 %v837, 2147483648
  %v1057 = vxor.u32 %v842, 2147483648
  %v1058 = vxor.u32 %v847, 2147483648
  %v1059 = vxor.u32 %v852, 2147483648
  %v1060 = vxor.u32 %v857, 2147483648
  %v1061 = vxor.u32 %v862, 2147483648
  %v1062 = vxor.u32 %v867, 2147483648
  %v1063 = vxor.u32 %v872, 2147483648
  %v1064 = vxor.u32 %v877, 2147483648
  %v1065 = vxor.u32 %v882, 2147483648
  %v1066 = vxor.u32 %v887, 2147483648
  %v1067 = vxor.u32 %v892, 2147483648
  %v1068 = vxor.u32 %v897, 2147483648
  %v1069 = vxor.u32 %v902, 2147483648
  %v1070 = vxor.u32 %v907, 2147483648
  %v1071 = vxor.u32 %v912, 2147483648
  %v1072 = vxor.u32 %v917, 2147483648
  %v1073 = vxor.u32 %v922, 2147483648
  %v1074 = vxor.u32 %v927, 2147483648
  %v1075 = vxor.u32 %v932, 2147483648
  %v1076 = vxor.u32 %v937, 2147483648
  %v1077 = vxor.u32 %v942, 2147483648
  %v1078 = vxor.u32 %v947, 2147483648
  %v1079 = vxor.u32 %v952, 2147483648
  %v1080 = vxor.u32 %v957, 2147483648
  %v1081 = vxor.u32 %v962, 2147483648
  %v1082 = vxor.u32 %v967, 2147483648
  %v1083 = vxor.u32 %v972, 2147483648
  %v1084 = vxor.u32 %v977, 2147483648
  %v1085 = vxor.u32 %v982, 2147483648
  %v1086 = vxor.u32 %v987, 2147483648
  %v1087 = vxor.u32 %v992, 2147483648
  %v1088 = vxor.u32 %v997, 2147483648
  %v1089 = vxor.u32 %v1002, 2147483648
  %v1090 = vxor.u32 %v1007, 2147483648
  %v1091 = vxor.u32 %v1012, 2147483648
  %v1092 = vxor.u32 %v1017, 2147483648
  %v1093 = vxor.u32 %v1022, 2147483648
  %v1094 = vxor.u32 %v1027, 2147483648
  %v1095 = vxor.u32 %v1032, 2147483648
  %v1096 = vxor.u32 %v1037, 2147483648
  %v1097 = vxor.u32 %v1042, 2147483648
  %v1098 = vxor.u32 %v1047, 2147483648
  %v1099 = vmul.f32 %v1050, 1.442695
  %v1100 = vpow.pop %v1099
  %v1101 = vmul.f32 %v1051, 1.442695
  %v1102 = vpow.pop %v1101
  %v1103 = vmul.f32 %v1052, 1.442695
  %v1104 = vpow.pop %v1103
  %v1105 = vmul.f32 %v1053, 1.442695
  %v1106 = vpow.pop %v1105
  %v1107 = vmul.f32 %v1054, 1.442695
  %v1108 = vpow.pop %v1107
  %v1109 = vmul.f32 %v1055, 1.442695
  %v1110 = vpow.pop %v1109
  %v1111 = vmul.f32 %v1056, 1.442695
  %v1112 = vpow.pop %v1111
  %v1113 = vmul.f32 %v1057, 1.442695
  %v1114 = vpow.pop %v1113
  %v1115 = vmul.f32 %v1058, 1.442695
  %v1116 = vpow.pop %v1115
  %v1117 = vmul.f32 %v1059, 1.442695
  %v1118 = vpow.pop %v1117
  %v1119 = vmul.f32 %v1060, 1.442695
  %v1120 = vpow.pop %v1119
  %v1121 = vmul.f32 %v1061, 1.442695
  %v1122 = vpow.pop %v1121
  %v1123 = vmul.f32 %v1062, 1.442695
  %v1124 = vpow.pop %v1123
  %v1125 = vmul.f32 %v1063, 1.442695
  %v1126 = vpow.pop %v1125
  %v1127 = vmul.f32 %v1064, 1.442695
  %v1128 = vpow.pop %v1127
  %v1129 = vmul.f32 %v1065, 1.442695
  %v1130 = vpow.pop %v1129
  %v1131 = vmul.f32 %v1066, 1.442695
  %v1132 = vpow.pop %v1131
  %v1133 = vmul.f32 %v1067, 1.442695
  %v1134 = vpow.pop %v1133
  %v1135 = vmul.f32 %v1068, 1.442695
  %v1136 = vpow.pop %v1135
  %v1137 = vmul.f32 %v1069, 1.442695
  %v1138 = vpow.pop %v1137
  %v1139 = vmul.f32 %v1070, 1.442695
  %v1140 = vpow.pop %v1139
  %v1141 = vmul.f32 %v1071, 1.442695
  %v1142 = vpow.pop %v1141
  %v1143 = vmul.f32 %v1072, 1.442695
  %v1144 = vpow.pop %v1143
  %v1145 = vmul.f32 %v1073, 1.442695
  %v1146 = vpow.pop %v1145
  %v1147 = vmul.f32 %v1074, 1.442695
  %v1148 = vpow.pop %v1147
  %v1149 = vmul.f32 %v1075, 1.442695
  %v1150 = vpow.pop %v1149
  %v1151 = vmul.f32 %v1076, 1.442695
  %v1152 = vpow.pop %v1151
  %v1153 = vmul.f32 %v1077, 1.442695
  %v1154 = vpow.pop %v1153
  %v1155 = vmul.f32 %v1078, 1.442695
  %v1156 = vpow.pop %v1155
  %v1157 = vmul.f32 %v1079, 1.442695
  %v1158 = vpow.pop %v1157
  %v1159 = vmul.f32 %v1080, 1.442695
  %v1160 = vpow.pop %v1159
  %v1161 = vmul.f32 %v1081, 1.442695
  %v1162 = vpow.pop %v1161
  %v1163 = vmul.f32 %v1082, 1.442695
  %v1164 = vpow.pop %v1163
  %v1165 = vmul.f32 %v1083, 1.442695
  %v1166 = vpow.pop %v1165
  %v1167 = vmul.f32 %v1084, 1.442695
  %v1168 = vpow.pop %v1167
  %v1169 = vmul.f32 %v1085, 1.442695
  %v1170 = vpow.pop %v1169
  %v1171 = vmul.f32 %v1086, 1.442695
  %v1172 = vpow.pop %v1171
  %v1173 = vmul.f32 %v1087, 1.442695
  %v1174 = vpow.pop %v1173
  %v1175 = vmul.f32 %v1088, 1.442695
  %v1176 = vpow.pop %v1175
  %v1177 = vmul.f32 %v1089, 1.442695
  %v1178 = vpow.pop %v1177
  %v1179 = vmul.f32 %v1090, 1.442695
  %v1180 = vpow.pop %v1179
  %v1181 = vmul.f32 %v1091, 1.442695
  %v1182 = vpow.pop %v1181
  %v1183 = vmul.f32 %v1092, 1.442695
  %v1184 = vpow.pop %v1183
  %v1185 = vmul.f32 %v1093, 1.442695
  %v1186 = vpow.pop %v1185
  %v1187 = vmul.f32 %v1094, 1.442695
  %v1188 = vpow.pop %v1187
  %v1189 = vmul.f32 %v1095, 1.442695
  %v1190 = vpow.pop %v1189
  %v1191 = vmul.f32 %v1096, 1.442695
  %v1192 = vpow.pop %v1191
  %v1193 = vmul.f32 %v1097, 1.442695
  %v1194 = vpow.pop %v1193
  %v1195 = vmul.f32 %v1098, 1.442695
  %v1196 = vpow.pop %v1195
  %v1197 = vadd.f32 %v1100, 1.0
  %v1198 = vadd.f32 %v1102, 1.0
  %v1199 = vadd.f32 %v1104, 1.0
  %v1200 = vadd.f32 %v1106, 1.0
  %v1201 = vadd.f32 %v1108, 1.0
  %v1202 = vadd.f32 %v1110, 1.0
  %v1203 = vadd.f32 %v1112, 1.0
  %v1204 = vadd.f32 %v1114, 1.0
  %v1205 = vadd.f32 %v1116, 1.0
  %v1206 = vadd.f32 %v1118, 1.0
  %v1207 = vadd.f32 %v1120, 1.0
  %v1208 = vadd.f32 %v1122, 1.0
  %v1209 = vadd.f32 %v1124, 1.0
  %v1210 = vadd.f32 %v1126, 1.0
  %v1211 = vadd.f32 %v1128, 1.0
  %v1212 = vadd.f32 %v1130, 1.0
  %v1213 = vadd.f32 %v1132, 1.0
  %v1214 = vadd.f32 %v1134, 1.0
  %v1215 = vadd.f32 %v1136, 1.0
  %v1216 = vadd.f32 %v1138, 1.0
  %v1217 = vadd.f32 %v1140, 1.0
  %v1218 = vadd.f32 %v1142, 1.0
  %v1219 = vadd.f32 %v1144, 1.0
  %v1220 = vadd.f32 %v1146, 1.0
  %v1221 = vadd.f32 %v1148, 1.0
  %v1222 = vadd.f32 %v1150, 1.0
  %v1223 = vadd.f32 %v1152, 1.0
  %v1224 = vadd.f32 %v1154, 1.0
  %v1225 = vadd.f32 %v1156, 1.0
  %v1226 = vadd.f32 %v1158, 1.0
  %v1227 = vadd.f32 %v1160, 1.0
  %v1228 = vadd.f32 %v1162, 1.0
  %v1229 = vadd.f32 %v1164, 1.0
  %v1230 = vadd.f32 %v1166, 1.0
  %v1231 = vadd.f32 %v1168, 1.0
  %v1232 = vadd.f32 %v1170, 1.0
  %v1233 = vadd.f32 %v1172, 1.0
  %v1234 = vadd.f32 %v1174, 1.0
  %v1235 = vadd.f32 %v1176, 1.0
  %v1236 = vadd.f32 %v1178, 1.0
  %v1237 = vadd.f32 %v1180, 1.0
  %v1238 = vadd.f32 %v1182, 1.0
  %v1239 = vadd.f32 %v1184, 1.0
  %v1240 = vadd.f32 %v1186, 1.0
  %v1241 = vadd.f32 %v1188, 1.0
  %v1242 = vadd.f32 %v1190, 1.0
  %v1243 = vadd.f32 %v1192, 1.0
  %v1244 = vadd.f32 %v1194, 1.0
  %v1245 = vadd.f32 %v1196, 1.0
  %v1246 = vrcp.pop %v1197
  %v1247 = vmul.f32 1.0, %v1246
  %v1248 = vrcp.pop %v1198
  %v1249 = vmul.f32 1.0, %v1248
  %v1250 = vrcp.pop %v1199
  %v1251 = vmul.f32 1.0, %v1250
  %v1252 = vrcp.pop %v1200
  %v1253 = vmul.f32 1.0, %v1252
  %v1254 = vrcp.pop %v1201
  %v1255 = vmul.f32 1.0, %v1254
  %v1256 = vrcp.pop %v1202
  %v1257 = vmul.f32 1.0, %v1256
  %v1258 = vrcp.pop %v1203
  %v1259 = vmul.f32 1.0, %v1258
  %v1260 = vrcp.pop %v1204
  %v1261 = vmul.f32 1.0, %v1260
  %v1262 = vrcp.pop %v1205
  %v1263 = vmul.f32 1.0, %v1262
  %v1264 = vrcp.pop %v1206
  %v1265 = vmul.f32 1.0, %v1264
  %v1266 = vrcp.pop %v1207
  %v1267 = vmul.f32 1.0, %v1266
  %v1268 = vrcp.pop %v1208
  %v1269 = vmul.f32 1.0, %v1268
  %v1270 = vrcp.pop %v1209
  %v1271 = vmul.f32 1.0, %v1270
  %v1272 = vrcp.pop %v1210
  %v1273 = vmul.f32 1.0, %v1272
  %v1274 = vrcp.pop %v1211
  %v1275 = vmul.f32 1.0, %v1274
  %v1276 = vrcp.pop %v1212
  %v1277 = vmul.f32 1.0, %v1276
  %v1278 = vrcp.pop %v1213
  %v1279 = vmul.f32 1.0, %v1278
  %v1280 = vrcp.pop %v1214
  %v1281 = vmul.f32 1.0, %v1280
  %v1282 = vrcp.pop %v1215
  %v1283 = vmul.f32 1.0, %v1282
  %v1284 = vrcp.pop %v1216
  %v1285 = vmul.f32 1.0, %v1284
  %v1286 = vrcp.pop %v1217
  %v1287 = vmul.f32 1.0, %v1286
  %v1288 = vrcp.pop %v1218
  %v1289 = vmul.f32 1.0, %v1288
  %v1290 = vrcp.pop %v1219
  %v1291 = vmul.f32 1.0, %v1290
  %v1292 = vrcp.pop %v1220
  %v1293 = vmul.f32 1.0, %v1292
  %v1294 = vrcp.pop %v1221
  %v1295 = vmul.f32 1.0, %v1294
  %v1296 = vrcp.pop %v1222
  %v1297 = vmul.f32 1.0, %v1296
  %v1298 = vrcp.pop %v1223
  %v1299 = vmul.f32 1.0, %v1298
  %v1300 = vrcp.pop %v1224
  %v1301 = vmul.f32 1.0, %v1300
  %v1302 = vrcp.pop %v1225
  %v1303 = vmul.f32 1.0, %v1302
  %v1304 = vrcp.pop %v1226
  %v1305 = vmul.f32 1.0, %v1304
  %v1306 = vrcp.pop %v1227
  %v1307 = vmul.f32 1.0, %v1306
  %v1308 = vrcp.pop %v1228
  %v1309 = vmul.f32 1.0, %v1308
  %v1310 = vrcp.pop %v1229
  %v1311 = vmul.f32 1.0, %v1310
  %v1312 = vrcp.pop %v1230
  %v1313 = vmul.f32 1.0, %v1312
  %v1314 = vrcp.pop %v1231
  %v1315 = vmul.f32 1.0, %v1314
  %v1316 = vrcp.pop %v1232
  %v1317 = vmul.f32 1.0, %v1316
  %v1318 = vrcp.pop %v1233
  %v1319 = vmul.f32 1.0, %v1318
  %v1320 = vrcp.pop %v1234
  %v1321 = vmul.f32 1.0, %v1320
  %v1322 = vrcp.pop %v1235
  %v1323 = vmul.f32 1.0, %v1322
  %v1324 = vrcp.pop %v1236
  %v1325 = vmul.f32 1.0, %v1324
  %v1326 = vrcp.pop %v1237
  %v1327 = vmul.f32 1.0, %v1326
  %v1328 = vrcp.pop %v1238
  %v1329 = vmul.f32 1.0, %v1328
  %v1330 = vrcp.pop %v1239
  %v1331 = vmul.f32 1.0, %v1330
  %v1332 = vrcp.pop %v1240
  %v1333 = vmul.f32 1.0, %v1332
  %v1334 = vrcp.pop %v1241
  %v1335 = vmul.f32 1.0, %v1334
  %v1336 = vrcp.pop %v1242
  %v1337 = vmul.f32 1.0, %v1336
  %v1338 = vrcp.pop %v1243
  %v1339 = vmul.f32 1.0, %v1338
  %v1340 = vrcp.pop %v1244
  %v1341 = vmul.f32 1.0, %v1340
  %v1342 = vrcp.pop %v1245
  %v1343 = vmul.f32 1.0, %v1342
  %v1344 = vmax.f32 %v593, %v1247
  %v1345 = vmax.f32 %v595, %v1249
  %v1346 = vmax.f32 %v597, %v1251
  %v1347 = vmax.f32 %v599, %v1253
  %v1348 = vmax.f32 %v601, %v1255
  %v1349 = vmax.f32 %v603, %v1257
  %v1350 = vmax.f32 %v605, %v1259
  %v1351 = vmax.f32 %v607, %v1261
  %v1352 = vmax.f32 %v609, %v1263
  %v1353 = vmax.f32 %v611, %v1265
  %v1354 = vmax.f32 %v613, %v1267
  %v1355 = vmax.f32 %v615, %v1269
  %v1356 = vmax.f32 %v617, %v1271
  %v1357 = vmax.f32 %v619, %v1273
  %v1358 = vmax.f32 %v621, %v1275
  %v1359 = vmax.f32 %v623, %v1277
  %v1360 = vmax.f32 %v625, %v1279
  %v1361 = vmax.f32 %v627, %v1281
  %v1362 = vmax.f32 %v629, %v1283
  %v1363 = vmax.f32 %v631, %v1285
  %v1364 = vmax.f32 %v633, %v1287
  %v1365 = vmax.f32 %v635, %v1289
  %v1366 = vmax.f32 %v637, %v1291
  %v1367 = vmax.f32 %v639, %v1293
  %v1368 = vmax.f32 %v641, %v1295
  %v1369 = vmax.f32 %v643, %v1297
  %v1370 = vmax.f32 %v645, %v1299
  %v1371 = vmax.f32 %v647, %v1301
  %v1372 = vmax.f32 %v649, %v1303
  %v1373 = vmax.f32 %v651, %v1305
  %v1374 = vmax.f32 %v653, %v1307
  %v1375 = vmax.f32 %v655, %v1309
  %v1376 = vmax.f32 %v657, %v1311
  %v1377 = vmax.f32 %v659, %v1313
  %v1378 = vmax.f32 %v661, %v1315
  %v1379 = vmax.f32 %v663, %v1317
  %v1380 = vmax.f32 %v665, %v1319
  %v1381 = vmax.f32 %v667, %v1321
  %v1382 = vmax.f32 %v669, %v1323
  %v1383 = vmax.f32 %v671, %v1325
  %v1384 = vmax.f32 %v673, %v1327
  %v1385 = vmax.f32 %v675, %v1329
  %v1386 = vmax.f32 %v677, %v1331
  %v1387 = vmax.f32 %v679, %v1333
  %v1388 = vmax.f32 %v681, %v1335
  %v1389 = vmax.f32 %v683, %v1337
  %v1390 = vmax.f32 %v685, %v1339
  %v1391 = vmax.f32 %v687, %v1341
  %v1392 = vmax.f32 %v689, %v1343
  %s1393 = scalar_lea.vmem %s0, 784
  %v1394 = vld [vmem:[%s1393] sm:$0xff]
  %v1395 = vld [vmem:[%s1393 + $0x8] sm:$0xff]
  %v1396 = vld [vmem:[%s1393 + $0x10] sm:$0xff]
  %v1397 = vld [vmem:[%s1393 + $0x18] sm:$0xff]
  %v1398 = vld [vmem:[%s1393 + $0x20] sm:$0xff]
  %v1399 = vld [vmem:[%s1393 + $0x28] sm:$0xff]
  %v1400 = vld [vmem:[%s1393 + $0x30] sm:$0xff]
  %v1401 = vld [vmem:[%s1393 + $0x38] sm:$0xff]
  %v1402 = vld [vmem:[%s1393 + $0x40] sm:$0xff]
  %v1403 = vld [vmem:[%s1393 + $0x48] sm:$0xff]
  %v1404 = vld [vmem:[%s1393 + $0x50] sm:$0xff]
  %v1405 = vld [vmem:[%s1393 + $0x58] sm:$0xff]
  %v1406 = vld [vmem:[%s1393 + $0x60] sm:$0xff]
  %v1407 = vld [vmem:[%s1393 + $0x68] sm:$0xff]
  %v1408 = vld [vmem:[%s1393 + $0x70] sm:$0xff]
  %v1409 = vld [vmem:[%s1393 + $0x78] sm:$0xff]
  %v1410 = vld [vmem:[%s1393 + $0x80] sm:$0xff]
  %v1411 = vld [vmem:[%s1393 + $0x88] sm:$0xff]
  %v1412 = vld [vmem:[%s1393 + $0x90] sm:$0xff]
  %v1413 = vld [vmem:[%s1393 + $0x98] sm:$0xff]
  %v1414 = vld [vmem:[%s1393 + $0xa0] sm:$0xff]
  %v1415 = vld [vmem:[%s1393 + $0xa8] sm:$0xff]
  %v1416 = vld [vmem:[%s1393 + $0xb0] sm:$0xff]
  %v1417 = vld [vmem:[%s1393 + $0xb8] sm:$0xff]
  %v1418 = vld [vmem:[%s1393 + $0xc0] sm:$0xff]
  %v1419 = vld [vmem:[%s1393 + $0xc8] sm:$0xff]
  %v1420 = vld [vmem:[%s1393 + $0xd0] sm:$0xff]
  %v1421 = vld [vmem:[%s1393 + $0xd8] sm:$0xff]
  %v1422 = vld [vmem:[%s1393 + $0xe0] sm:$0xff]
  %v1423 = vld [vmem:[%s1393 + $0xe8] sm:$0xff]
  %v1424 = vld [vmem:[%s1393 + $0xf0] sm:$0xff]
  %v1425 = vld [vmem:[%s1393 + $0xf8] sm:$0xff]
  %v1426 = vld [vmem:[%s1393 + $0x100] sm:$0xff]
  %v1427 = vld [vmem:[%s1393 + $0x108] sm:$0xff]
  %v1428 = vld [vmem:[%s1393 + $0x110] sm:$0xff]
  %v1429 = vld [vmem:[%s1393 + $0x118] sm:$0xff]
  %v1430 = vld [vmem:[%s1393 + $0x120] sm:$0xff]
  %v1431 = vld [vmem:[%s1393 + $0x128] sm:$0xff]
  %v1432 = vld [vmem:[%s1393 + $0x130] sm:$0xff]
  %v1433 = vld [vmem:[%s1393 + $0x138] sm:$0xff]
  %v1434 = vld [vmem:[%s1393 + $0x140] sm:$0xff]
  %v1435 = vld [vmem:[%s1393 + $0x148] sm:$0xff]
  %v1436 = vld [vmem:[%s1393 + $0x150] sm:$0xff]
  %v1437 = vld [vmem:[%s1393 + $0x158] sm:$0xff]
  %v1438 = vld [vmem:[%s1393 + $0x160] sm:$0xff]
  %v1439 = vld [vmem:[%s1393 + $0x168] sm:$0xff]
  %v1440 = vld [vmem:[%s1393 + $0x170] sm:$0xff]
  %v1441 = vld [vmem:[%s1393 + $0x178] sm:$0xff]
  %v1442 = vld [vmem:[%s1393 + $0x180] sm:$0xff]
  %1443 = vmatprep.subr.mxu0 0.0
  %1444 = vmatpush1.msra.mxu0 %v29
  %1445 = vmatprep.subr.mxu0 0.0
  %1446 = vmatpush1.msra.mxu0 %v28
  %1447 = vmatprep.subr.mxu0 0.0
  %1448 = vmatpush1.msra.mxu0 %v27
  %1449 = vmatprep.subr.mxu0 0.0
  %1450 = vmatpush1.msra.mxu0 %v26
  %1451 = vmatprep.subr.mxu0 0.0
  %1452 = vmatpush1.msra.mxu0 %v25
  %1453 = vmatprep.subr.mxu0 0.0
  %1454 = vmatpush1.msra.mxu0 %v24
  %1455 = vmatprep.subr.mxu0 0.0
  %1456 = vmatpush1.msra.mxu0 %v23
  %1457 = vmatprep.subr.mxu0 0.0
  %1458 = vmatpush1.msra.mxu0 %v22
  %1459 = vmatprep.subr.mxu0 0.0
  %1460 = vmatpush1.msra.mxu0 %v21
  %1461 = vmatprep.subr.mxu0 0.0
  %1462 = vmatpush1.msra.mxu0 %v20
  %1463 = vmatprep.subr.mxu0 0.0
  %1464 = vmatpush1.msra.mxu0 %v19
  %1465 = vmatprep.subr.mxu0 0.0
  %1466 = vmatpush1.msra.mxu0 %v18
  %1467 = vmatprep.subr.mxu0 0.0
  %1468 = vmatpush1.msra.mxu0 %v17
  %1469 = vmatprep.subr.mxu0 0.0
  %1470 = vmatpush1.msra.mxu0 %v16
  %1471 = vmatprep.subr.mxu0 0.0
  %1472 = vmatpush1.msra.mxu0 %v15
  %1473 = vmatprep.subr.mxu0 0.0
  %1474 = vmatpush1.msra.mxu0 %v14
  %1475 = vmatprep.subr.mxu0 0.0
  %1476 = vmatpush2.msra.mxu0 0.0
  %1477 = vmatprep.subr.mxu0 0.0
  %1478 = vmatpush2.msra.mxu0 0.0
  %1479 = vmatprep.subr.mxu0 0.0
  %1480 = vmatpush2.msra.mxu0 0.0
  %1481 = vmatprep.subr.mxu0 0.0
  %1482 = vmatpush2.msra.mxu0 0.0
  %1483 = vmatprep.subr.mxu0 0.0
  %1484 = vmatpush2.msra.mxu0 0.0
  %1485 = vmatprep.subr.mxu0 0.0
  %1486 = vmatpush2.msra.mxu0 0.0
  %1487 = vmatprep.subr.mxu0 0.0
  %1488 = vmatpush2.msra.mxu0 0.0
  %1489 = vmatprep.subr.mxu0 0.0
  %1490 = vmatpush2.msra.mxu0 0.0
  %1491 = vmatprep.subr.mxu0 0.0
  %1492 = vmatpush2.msra.mxu0 0.0
  %1493 = vmatprep.subr.mxu0 0.0
  %1494 = vmatpush2.msra.mxu0 0.0
  %1495 = vmatprep.subr.mxu0 0.0
  %1496 = vmatpush2.msra.mxu0 0.0
  %1497 = vmatprep.subr.mxu0 0.0
  %1498 = vmatpush2.msra.mxu0 0.0
  %1499 = vmatprep.subr.mxu0 0.0
  %1500 = vmatpush2.msra.mxu0 0.0
  %1501 = vmatprep.subr.mxu0 0.0
  %1502 = vmatpush2.msra.mxu0 0.0
  %1503 = vmatprep.subr.mxu0 0.0
  %1504 = vmatpush2.msra.mxu0 0.0
  %1505 = vmatprep.subr.mxu0 0.0
  %1506 = vmatpush2.msra.mxu0 0.0
  %1507 = vmatprep.mubr.f32.mxu0 0.0
  %1508 = vmatmul.mubr.f32.gmra.mxu0 %v1394
  %v1509 = vpop.f32.mrf.mxu0
  %v1510 = vadd.f32 %v84, %v1509
  %v1511 = vpop.f32.mrf.mxu0
  %1512 = vmatprep.mubr.f32.mxu0 0.0
  %1513 = vmatmul.mubr.f32.gmra.mxu0 %v1395
  %v1514 = vpop.f32.mrf.mxu0
  %v1515 = vadd.f32 %v84, %v1514
  %v1516 = vpop.f32.mrf.mxu0
  %1517 = vmatprep.mubr.f32.mxu0 0.0
  %1518 = vmatmul.mubr.f32.gmra.mxu0 %v1396
  %v1519 = vpop.f32.mrf.mxu0
  %v1520 = vadd.f32 %v84, %v1519
  %v1521 = vpop.f32.mrf.mxu0
  %1522 = vmatprep.mubr.f32.mxu0 0.0
  %1523 = vmatmul.mubr.f32.gmra.mxu0 %v1397
  %v1524 = vpop.f32.mrf.mxu0
  %v1525 = vadd.f32 %v84, %v1524
  %v1526 = vpop.f32.mrf.mxu0
  %1527 = vmatprep.mubr.f32.mxu0 0.0
  %1528 = vmatmul.mubr.f32.gmra.mxu0 %v1398
  %v1529 = vpop.f32.mrf.mxu0
  %v1530 = vadd.f32 %v84, %v1529
  %v1531 = vpop.f32.mrf.mxu0
  %1532 = vmatprep.mubr.f32.mxu0 0.0
  %1533 = vmatmul.mubr.f32.gmra.mxu0 %v1399
  %v1534 = vpop.f32.mrf.mxu0
  %v1535 = vadd.f32 %v84, %v1534
  %v1536 = vpop.f32.mrf.mxu0
  %1537 = vmatprep.mubr.f32.mxu0 0.0
  %1538 = vmatmul.mubr.f32.gmra.mxu0 %v1400
  %v1539 = vpop.f32.mrf.mxu0
  %v1540 = vadd.f32 %v84, %v1539
  %v1541 = vpop.f32.mrf.mxu0
  %1542 = vmatprep.mubr.f32.mxu0 0.0
  %1543 = vmatmul.mubr.f32.gmra.mxu0 %v1401
  %v1544 = vpop.f32.mrf.mxu0
  %v1545 = vadd.f32 %v84, %v1544
  %v1546 = vpop.f32.mrf.mxu0
  %1547 = vmatprep.mubr.f32.mxu0 0.0
  %1548 = vmatmul.mubr.f32.gmra.mxu0 %v1402
  %v1549 = vpop.f32.mrf.mxu0
  %v1550 = vadd.f32 %v84, %v1549
  %v1551 = vpop.f32.mrf.mxu0
  %1552 = vmatprep.mubr.f32.mxu0 0.0
  %1553 = vmatmul.mubr.f32.gmra.mxu0 %v1403
  %v1554 = vpop.f32.mrf.mxu0
  %v1555 = vadd.f32 %v84, %v1554
  %v1556 = vpop.f32.mrf.mxu0
  %1557 = vmatprep.mubr.f32.mxu0 0.0
  %1558 = vmatmul.mubr.f32.gmra.mxu0 %v1404
  %v1559 = vpop.f32.mrf.mxu0
  %v1560 = vadd.f32 %v84, %v1559
  %v1561 = vpop.f32.mrf.mxu0
  %1562 = vmatprep.mubr.f32.mxu0 0.0
  %1563 = vmatmul.mubr.f32.gmra.mxu0 %v1405
  %v1564 = vpop.f32.mrf.mxu0
  %v1565 = vadd.f32 %v84, %v1564
  %v1566 = vpop.f32.mrf.mxu0
  %1567 = vmatprep.mubr.f32.mxu0 0.0
  %1568 = vmatmul.mubr.f32.gmra.mxu0 %v1406
  %v1569 = vpop.f32.mrf.mxu0
  %v1570 = vadd.f32 %v84, %v1569
  %v1571 = vpop.f32.mrf.mxu0
  %1572 = vmatprep.mubr.f32.mxu0 0.0
  %1573 = vmatmul.mubr.f32.gmra.mxu0 %v1407
  %v1574 = vpop.f32.mrf.mxu0
  %v1575 = vadd.f32 %v84, %v1574
  %v1576 = vpop.f32.mrf.mxu0
  %1577 = vmatprep.mubr.f32.mxu0 0.0
  %1578 = vmatmul.mubr.f32.gmra.mxu0 %v1408
  %v1579 = vpop.f32.mrf.mxu0
  %v1580 = vadd.f32 %v84, %v1579
  %v1581 = vpop.f32.mrf.mxu0
  %1582 = vmatprep.mubr.f32.mxu0 0.0
  %1583 = vmatmul.mubr.f32.gmra.mxu0 %v1409
  %v1584 = vpop.f32.mrf.mxu0
  %v1585 = vadd.f32 %v84, %v1584
  %v1586 = vpop.f32.mrf.mxu0
  %1587 = vmatprep.mubr.f32.mxu0 0.0
  %1588 = vmatmul.mubr.f32.gmra.mxu0 %v1410
  %v1589 = vpop.f32.mrf.mxu0
  %v1590 = vadd.f32 %v84, %v1589
  %v1591 = vpop.f32.mrf.mxu0
  %1592 = vmatprep.mubr.f32.mxu0 0.0
  %1593 = vmatmul.mubr.f32.gmra.mxu0 %v1411
  %v1594 = vpop.f32.mrf.mxu0
  %v1595 = vadd.f32 %v84, %v1594
  %v1596 = vpop.f32.mrf.mxu0
  %1597 = vmatprep.mubr.f32.mxu0 0.0
  %1598 = vmatmul.mubr.f32.gmra.mxu0 %v1412
  %v1599 = vpop.f32.mrf.mxu0
  %v1600 = vadd.f32 %v84, %v1599
  %v1601 = vpop.f32.mrf.mxu0
  %1602 = vmatprep.mubr.f32.mxu0 0.0
  %1603 = vmatmul.mubr.f32.gmra.mxu0 %v1413
  %v1604 = vpop.f32.mrf.mxu0
  %v1605 = vadd.f32 %v84, %v1604
  %v1606 = vpop.f32.mrf.mxu0
  %1607 = vmatprep.mubr.f32.mxu0 0.0
  %1608 = vmatmul.mubr.f32.gmra.mxu0 %v1414
  %v1609 = vpop.f32.mrf.mxu0
  %v1610 = vadd.f32 %v84, %v1609
  %v1611 = vpop.f32.mrf.mxu0
  %1612 = vmatprep.mubr.f32.mxu0 0.0
  %1613 = vmatmul.mubr.f32.gmra.mxu0 %v1415
  %v1614 = vpop.f32.mrf.mxu0
  %v1615 = vadd.f32 %v84, %v1614
  %v1616 = vpop.f32.mrf.mxu0
  %1617 = vmatprep.mubr.f32.mxu0 0.0
  %1618 = vmatmul.mubr.f32.gmra.mxu0 %v1416
  %v1619 = vpop.f32.mrf.mxu0
  %v1620 = vadd.f32 %v84, %v1619
  %v1621 = vpop.f32.mrf.mxu0
  %1622 = vmatprep.mubr.f32.mxu0 0.0
  %1623 = vmatmul.mubr.f32.gmra.mxu0 %v1417
  %v1624 = vpop.f32.mrf.mxu0
  %v1625 = vadd.f32 %v84, %v1624
  %v1626 = vpop.f32.mrf.mxu0
  %1627 = vmatprep.mubr.f32.mxu0 0.0
  %1628 = vmatmul.mubr.f32.gmra.mxu0 %v1418
  %v1629 = vpop.f32.mrf.mxu0
  %v1630 = vadd.f32 %v84, %v1629
  %v1631 = vpop.f32.mrf.mxu0
  %1632 = vmatprep.mubr.f32.mxu0 0.0
  %1633 = vmatmul.mubr.f32.gmra.mxu0 %v1419
  %v1634 = vpop.f32.mrf.mxu0
  %v1635 = vadd.f32 %v84, %v1634
  %v1636 = vpop.f32.mrf.mxu0
  %1637 = vmatprep.mubr.f32.mxu0 0.0
  %1638 = vmatmul.mubr.f32.gmra.mxu0 %v1420
  %v1639 = vpop.f32.mrf.mxu0
  %v1640 = vadd.f32 %v84, %v1639
  %v1641 = vpop.f32.mrf.mxu0
  %1642 = vmatprep.mubr.f32.mxu0 0.0
  %1643 = vmatmul.mubr.f32.gmra.mxu0 %v1421
  %v1644 = vpop.f32.mrf.mxu0
  %v1645 = vadd.f32 %v84, %v1644
  %v1646 = vpop.f32.mrf.mxu0
  %1647 = vmatprep.mubr.f32.mxu0 0.0
  %1648 = vmatmul.mubr.f32.gmra.mxu0 %v1422
  %v1649 = vpop.f32.mrf.mxu0
  %v1650 = vadd.f32 %v84, %v1649
  %v1651 = vpop.f32.mrf.mxu0
  %1652 = vmatprep.mubr.f32.mxu0 0.0
  %1653 = vmatmul.mubr.f32.gmra.mxu0 %v1423
  %v1654 = vpop.f32.mrf.mxu0
  %v1655 = vadd.f32 %v84, %v1654
  %v1656 = vpop.f32.mrf.mxu0
  %1657 = vmatprep.mubr.f32.mxu0 0.0
  %1658 = vmatmul.mubr.f32.gmra.mxu0 %v1424
  %v1659 = vpop.f32.mrf.mxu0
  %v1660 = vadd.f32 %v84, %v1659
  %v1661 = vpop.f32.mrf.mxu0
  %1662 = vmatprep.mubr.f32.mxu0 0.0
  %1663 = vmatmul.mubr.f32.gmra.mxu0 %v1425
  %v1664 = vpop.f32.mrf.mxu0
  %v1665 = vadd.f32 %v84, %v1664
  %v1666 = vpop.f32.mrf.mxu0
  %1667 = vmatprep.mubr.f32.mxu0 0.0
  %1668 = vmatmul.mubr.f32.gmra.mxu0 %v1426
  %v1669 = vpop.f32.mrf.mxu0
  %v1670 = vadd.f32 %v84, %v1669
  %v1671 = vpop.f32.mrf.mxu0
  %1672 = vmatprep.mubr.f32.mxu0 0.0
  %1673 = vmatmul.mubr.f32.gmra.mxu0 %v1427
  %v1674 = vpop.f32.mrf.mxu0
  %v1675 = vadd.f32 %v84, %v1674
  %v1676 = vpop.f32.mrf.mxu0
  %1677 = vmatprep.mubr.f32.mxu0 0.0
  %1678 = vmatmul.mubr.f32.gmra.mxu0 %v1428
  %v1679 = vpop.f32.mrf.mxu0
  %v1680 = vadd.f32 %v84, %v1679
  %v1681 = vpop.f32.mrf.mxu0
  %1682 = vmatprep.mubr.f32.mxu0 0.0
  %1683 = vmatmul.mubr.f32.gmra.mxu0 %v1429
  %v1684 = vpop.f32.mrf.mxu0
  %v1685 = vadd.f32 %v84, %v1684
  %v1686 = vpop.f32.mrf.mxu0
  %1687 = vmatprep.mubr.f32.mxu0 0.0
  %1688 = vmatmul.mubr.f32.gmra.mxu0 %v1430
  %v1689 = vpop.f32.mrf.mxu0
  %v1690 = vadd.f32 %v84, %v1689
  %v1691 = vpop.f32.mrf.mxu0
  %1692 = vmatprep.mubr.f32.mxu0 0.0
  %1693 = vmatmul.mubr.f32.gmra.mxu0 %v1431
  %v1694 = vpop.f32.mrf.mxu0
  %v1695 = vadd.f32 %v84, %v1694
  %v1696 = vpop.f32.mrf.mxu0
  %1697 = vmatprep.mubr.f32.mxu0 0.0
  %1698 = vmatmul.mubr.f32.gmra.mxu0 %v1432
  %v1699 = vpop.f32.mrf.mxu0
  %v1700 = vadd.f32 %v84, %v1699
  %v1701 = vpop.f32.mrf.mxu0
  %1702 = vmatprep.mubr.f32.mxu0 0.0
  %1703 = vmatmul.mubr.f32.gmra.mxu0 %v1433
  %v1704 = vpop.f32.mrf.mxu0
  %v1705 = vadd.f32 %v84, %v1704
  %v1706 = vpop.f32.mrf.mxu0
  %1707 = vmatprep.mubr.f32.mxu0 0.0
  %1708 = vmatmul.mubr.f32.gmra.mxu0 %v1434
  %v1709 = vpop.f32.mrf.mxu0
  %v1710 = vadd.f32 %v84, %v1709
  %v1711 = vpop.f32.mrf.mxu0
  %1712 = vmatprep.mubr.f32.mxu0 0.0
  %1713 = vmatmul.mubr.f32.gmra.mxu0 %v1435
  %v1714 = vpop.f32.mrf.mxu0
  %v1715 = vadd.f32 %v84, %v1714
  %v1716 = vpop.f32.mrf.mxu0
  %1717 = vmatprep.mubr.f32.mxu0 0.0
  %1718 = vmatmul.mubr.f32.gmra.mxu0 %v1436
  %v1719 = vpop.f32.mrf.mxu0
  %v1720 = vadd.f32 %v84, %v1719
  %v1721 = vpop.f32.mrf.mxu0
  %1722 = vmatprep.mubr.f32.mxu0 0.0
  %1723 = vmatmul.mubr.f32.gmra.mxu0 %v1437
  %v1724 = vpop.f32.mrf.mxu0
  %v1725 = vadd.f32 %v84, %v1724
  %v1726 = vpop.f32.mrf.mxu0
  %1727 = vmatprep.mubr.f32.mxu0 0.0
  %1728 = vmatmul.mubr.f32.gmra.mxu0 %v1438
  %v1729 = vpop.f32.mrf.mxu0
  %v1730 = vadd.f32 %v84, %v1729
  %v1731 = vpop.f32.mrf.mxu0
  %1732 = vmatprep.mubr.f32.mxu0 0.0
  %1733 = vmatmul.mubr.f32.gmra.mxu0 %v1439
  %v1734 = vpop.f32.mrf.mxu0
  %v1735 = vadd.f32 %v84, %v1734
  %v1736 = vpop.f32.mrf.mxu0
  %1737 = vmatprep.mubr.f32.mxu0 0.0
  %1738 = vmatmul.mubr.f32.gmra.mxu0 %v1440
  %v1739 = vpop.f32.mrf.mxu0
  %v1740 = vadd.f32 %v84, %v1739
  %v1741 = vpop.f32.mrf.mxu0
  %1742 = vmatprep.mubr.f32.mxu0 0.0
  %1743 = vmatmul.mubr.f32.gmra.mxu0 %v1441
  %v1744 = vpop.f32.mrf.mxu0
  %v1745 = vadd.f32 %v84, %v1744
  %v1746 = vpop.f32.mrf.mxu0
  %1747 = vmatprep.mubr.f32.mxu0 0.0
  %1748 = vmatmul.mubr.f32.gmra.mxu0 %v1442
  %v1749 = vpop.f32.mrf.mxu0
  %v1750 = vadd.f32 %v84, %v1749
  %v1751 = vpop.f32.mrf.mxu0
  %1752 = vdwg.mxu0
  %v1753 = vxor.u32 %v1510, 2147483648
  %v1754 = vxor.u32 %v1515, 2147483648
  %v1755 = vxor.u32 %v1520, 2147483648
  %v1756 = vxor.u32 %v1525, 2147483648
  %v1757 = vxor.u32 %v1530, 2147483648
  %v1758 = vxor.u32 %v1535, 2147483648
  %v1759 = vxor.u32 %v1540, 2147483648
  %v1760 = vxor.u32 %v1545, 2147483648
  %v1761 = vxor.u32 %v1550, 2147483648
  %v1762 = vxor.u32 %v1555, 2147483648
  %v1763 = vxor.u32 %v1560, 2147483648
  %v1764 = vxor.u32 %v1565, 2147483648
  %v1765 = vxor.u32 %v1570, 2147483648
  %v1766 = vxor.u32 %v1575, 2147483648
  %v1767 = vxor.u32 %v1580, 2147483648
  %v1768 = vxor.u32 %v1585, 2147483648
  %v1769 = vxor.u32 %v1590, 2147483648
  %v1770 = vxor.u32 %v1595, 2147483648
  %v1771 = vxor.u32 %v1600, 2147483648
  %v1772 = vxor.u32 %v1605, 2147483648
  %v1773 = vxor.u32 %v1610, 2147483648
  %v1774 = vxor.u32 %v1615, 2147483648
  %v1775 = vxor.u32 %v1620, 2147483648
  %v1776 = vxor.u32 %v1625, 2147483648
  %v1777 = vxor.u32 %v1630, 2147483648
  %v1778 = vxor.u32 %v1635, 2147483648
  %v1779 = vxor.u32 %v1640, 2147483648
  %v1780 = vxor.u32 %v1645, 2147483648
  %v1781 = vxor.u32 %v1650, 2147483648
  %v1782 = vxor.u32 %v1655, 2147483648
  %v1783 = vxor.u32 %v1660, 2147483648
  %v1784 = vxor.u32 %v1665, 2147483648
  %v1785 = vxor.u32 %v1670, 2147483648
  %v1786 = vxor.u32 %v1675, 2147483648
  %v1787 = vxor.u32 %v1680, 2147483648
  %v1788 = vxor.u32 %v1685, 2147483648
  %v1789 = vxor.u32 %v1690, 2147483648
  %v1790 = vxor.u32 %v1695, 2147483648
  %v1791 = vxor.u32 %v1700, 2147483648
  %v1792 = vxor.u32 %v1705, 2147483648
  %v1793 = vxor.u32 %v1710, 2147483648
  %v1794 = vxor.u32 %v1715, 2147483648
  %v1795 = vxor.u32 %v1720, 2147483648
  %v1796 = vxor.u32 %v1725, 2147483648
  %v1797 = vxor.u32 %v1730, 2147483648
  %v1798 = vxor.u32 %v1735, 2147483648
  %v1799 = vxor.u32 %v1740, 2147483648
  %v1800 = vxor.u32 %v1745, 2147483648
  %v1801 = vxor.u32 %v1750, 2147483648
  %v1802 = vmul.f32 %v1753, 1.442695
  %v1803 = vpow.pop %v1802
  %v1804 = vmul.f32 %v1754, 1.442695
  %v1805 = vpow.pop %v1804
  %v1806 = vmul.f32 %v1755, 1.442695
  %v1807 = vpow.pop %v1806
  %v1808 = vmul.f32 %v1756, 1.442695
  %v1809 = vpow.pop %v1808
  %v1810 = vmul.f32 %v1757, 1.442695
  %v1811 = vpow.pop %v1810
  %v1812 = vmul.f32 %v1758, 1.442695
  %v1813 = vpow.pop %v1812
  %v1814 = vmul.f32 %v1759, 1.442695
  %v1815 = vpow.pop %v1814
  %v1816 = vmul.f32 %v1760, 1.442695
  %v1817 = vpow.pop %v1816
  %v1818 = vmul.f32 %v1761, 1.442695
  %v1819 = vpow.pop %v1818
  %v1820 = vmul.f32 %v1762, 1.442695
  %v1821 = vpow.pop %v1820
  %v1822 = vmul.f32 %v1763, 1.442695
  %v1823 = vpow.pop %v1822
  %v1824 = vmul.f32 %v1764, 1.442695
  %v1825 = vpow.pop %v1824
  %v1826 = vmul.f32 %v1765, 1.442695
  %v1827 = vpow.pop %v1826
  %v1828 = vmul.f32 %v1766, 1.442695
  %v1829 = vpow.pop %v1828
  %v1830 = vmul.f32 %v1767, 1.442695
  %v1831 = vpow.pop %v1830
  %v1832 = vmul.f32 %v1768, 1.442695
  %v1833 = vpow.pop %v1832
  %v1834 = vmul.f32 %v1769, 1.442695
  %v1835 = vpow.pop %v1834
  %v1836 = vmul.f32 %v1770, 1.442695
  %v1837 = vpow.pop %v1836
  %v1838 = vmul.f32 %v1771, 1.442695
  %v1839 = vpow.pop %v1838
  %v1840 = vmul.f32 %v1772, 1.442695
  %v1841 = vpow.pop %v1840
  %v1842 = vmul.f32 %v1773, 1.442695
  %v1843 = vpow.pop %v1842
  %v1844 = vmul.f32 %v1774, 1.442695
  %v1845 = vpow.pop %v1844
  %v1846 = vmul.f32 %v1775, 1.442695
  %v1847 = vpow.pop %v1846
  %v1848 = vmul.f32 %v1776, 1.442695
  %v1849 = vpow.pop %v1848
  %v1850 = vmul.f32 %v1777, 1.442695
  %v1851 = vpow.pop %v1850
  %v1852 = vmul.f32 %v1778, 1.442695
  %v1853 = vpow.pop %v1852
  %v1854 = vmul.f32 %v1779, 1.442695
  %v1855 = vpow.pop %v1854
  %v1856 = vmul.f32 %v1780, 1.442695
  %v1857 = vpow.pop %v1856
  %v1858 = vmul.f32 %v1781, 1.442695
  %v1859 = vpow.pop %v1858
  %v1860 = vmul.f32 %v1782, 1.442695
  %v1861 = vpow.pop %v1860
  %v1862 = vmul.f32 %v1783, 1.442695
  %v1863 = vpow.pop %v1862
  %v1864 = vmul.f32 %v1784, 1.442695
  %v1865 = vpow.pop %v1864
  %v1866 = vmul.f32 %v1785, 1.442695
  %v1867 = vpow.pop %v1866
  %v1868 = vmul.f32 %v1786, 1.442695
  %v1869 = vpow.pop %v1868
  %v1870 = vmul.f32 %v1787, 1.442695
  %v1871 = vpow.pop %v1870
  %v1872 = vmul.f32 %v1788, 1.442695
  %v1873 = vpow.pop %v1872
  %v1874 = vmul.f32 %v1789, 1.442695
  %v1875 = vpow.pop %v1874
  %v1876 = vmul.f32 %v1790, 1.442695
  %v1877 = vpow.pop %v1876
  %v1878 = vmul.f32 %v1791, 1.442695
  %v1879 = vpow.pop %v1878
  %v1880 = vmul.f32 %v1792, 1.442695
  %v1881 = vpow.pop %v1880
  %v1882 = vmul.f32 %v1793, 1.442695
  %v1883 = vpow.pop %v1882
  %v1884 = vmul.f32 %v1794, 1.442695
  %v1885 = vpow.pop %v1884
  %v1886 = vmul.f32 %v1795, 1.442695
  %v1887 = vpow.pop %v1886
  %v1888 = vmul.f32 %v1796, 1.442695
  %v1889 = vpow.pop %v1888
  %v1890 = vmul.f32 %v1797, 1.442695
  %v1891 = vpow.pop %v1890
  %v1892 = vmul.f32 %v1798, 1.442695
  %v1893 = vpow.pop %v1892
  %v1894 = vmul.f32 %v1799, 1.442695
  %v1895 = vpow.pop %v1894
  %v1896 = vmul.f32 %v1800, 1.442695
  %v1897 = vpow.pop %v1896
  %v1898 = vmul.f32 %v1801, 1.442695
  %v1899 = vpow.pop %v1898
  %v1900 = vadd.f32 %v1803, 1.0
  %v1901 = vadd.f32 %v1805, 1.0
  %v1902 = vadd.f32 %v1807, 1.0
  %v1903 = vadd.f32 %v1809, 1.0
  %v1904 = vadd.f32 %v1811, 1.0
  %v1905 = vadd.f32 %v1813, 1.0
  %v1906 = vadd.f32 %v1815, 1.0
  %v1907 = vadd.f32 %v1817, 1.0
  %v1908 = vadd.f32 %v1819, 1.0
  %v1909 = vadd.f32 %v1821, 1.0
  %v1910 = vadd.f32 %v1823, 1.0
  %v1911 = vadd.f32 %v1825, 1.0
  %v1912 = vadd.f32 %v1827, 1.0
  %v1913 = vadd.f32 %v1829, 1.0
  %v1914 = vadd.f32 %v1831, 1.0
  %v1915 = vadd.f32 %v1833, 1.0
  %v1916 = vadd.f32 %v1835, 1.0
  %v1917 = vadd.f32 %v1837, 1.0
  %v1918 = vadd.f32 %v1839, 1.0
  %v1919 = vadd.f32 %v1841, 1.0
  %v1920 = vadd.f32 %v1843, 1.0
  %v1921 = vadd.f32 %v1845, 1.0
  %v1922 = vadd.f32 %v1847, 1.0
  %v1923 = vadd.f32 %v1849, 1.0
  %v1924 = vadd.f32 %v1851, 1.0
  %v1925 = vadd.f32 %v1853, 1.0
  %v1926 = vadd.f32 %v1855, 1.0
  %v1927 = vadd.f32 %v1857, 1.0
  %v1928 = vadd.f32 %v1859, 1.0
  %v1929 = vadd.f32 %v1861, 1.0
  %v1930 = vadd.f32 %v1863, 1.0
  %v1931 = vadd.f32 %v1865, 1.0
  %v1932 = vadd.f32 %v1867, 1.0
  %v1933 = vadd.f32 %v1869, 1.0
  %v1934 = vadd.f32 %v1871, 1.0
  %v1935 = vadd.f32 %v1873, 1.0
  %v1936 = vadd.f32 %v1875, 1.0
  %v1937 = vadd.f32 %v1877, 1.0
  %v1938 = vadd.f32 %v1879, 1.0
  %v1939 = vadd.f32 %v1881, 1.0
  %v1940 = vadd.f32 %v1883, 1.0
  %v1941 = vadd.f32 %v1885, 1.0
  %v1942 = vadd.f32 %v1887, 1.0
  %v1943 = vadd.f32 %v1889, 1.0
  %v1944 = vadd.f32 %v1891, 1.0
  %v1945 = vadd.f32 %v1893, 1.0
  %v1946 = vadd.f32 %v1895, 1.0
  %v1947 = vadd.f32 %v1897, 1.0
  %v1948 = vadd.f32 %v1899, 1.0
  %v1949 = vrcp.pop %v1900
  %v1950 = vmul.f32 1.0, %v1949
  %v1951 = vrcp.pop %v1901
  %v1952 = vmul.f32 1.0, %v1951
  %v1953 = vrcp.pop %v1902
  %v1954 = vmul.f32 1.0, %v1953
  %v1955 = vrcp.pop %v1903
  %v1956 = vmul.f32 1.0, %v1955
  %v1957 = vrcp.pop %v1904
  %v1958 = vmul.f32 1.0, %v1957
  %v1959 = vrcp.pop %v1905
  %v1960 = vmul.f32 1.0, %v1959
  %v1961 = vrcp.pop %v1906
  %v1962 = vmul.f32 1.0, %v1961
  %v1963 = vrcp.pop %v1907
  %v1964 = vmul.f32 1.0, %v1963
  %v1965 = vrcp.pop %v1908
  %v1966 = vmul.f32 1.0, %v1965
  %v1967 = vrcp.pop %v1909
  %v1968 = vmul.f32 1.0, %v1967
  %v1969 = vrcp.pop %v1910
  %v1970 = vmul.f32 1.0, %v1969
  %v1971 = vrcp.pop %v1911
  %v1972 = vmul.f32 1.0, %v1971
  %v1973 = vrcp.pop %v1912
  %v1974 = vmul.f32 1.0, %v1973
  %v1975 = vrcp.pop %v1913
  %v1976 = vmul.f32 1.0, %v1975
  %v1977 = vrcp.pop %v1914
  %v1978 = vmul.f32 1.0, %v1977
  %v1979 = vrcp.pop %v1915
  %v1980 = vmul.f32 1.0, %v1979
  %v1981 = vrcp.pop %v1916
  %v1982 = vmul.f32 1.0, %v1981
  %v1983 = vrcp.pop %v1917
  %v1984 = vmul.f32 1.0, %v1983
  %v1985 = vrcp.pop %v1918
  %v1986 = vmul.f32 1.0, %v1985
  %v1987 = vrcp.pop %v1919
  %v1988 = vmul.f32 1.0, %v1987
  %v1989 = vrcp.pop %v1920
  %v1990 = vmul.f32 1.0, %v1989
  %v1991 = vrcp.pop %v1921
  %v1992 = vmul.f32 1.0, %v1991
  %v1993 = vrcp.pop %v1922
  %v1994 = vmul.f32 1.0, %v1993
  %v1995 = vrcp.pop %v1923
  %v1996 = vmul.f32 1.0, %v1995
  %v1997 = vrcp.pop %v1924
  %v1998 = vmul.f32 1.0, %v1997
  %v1999 = vrcp.pop %v1925
  %v2000 = vmul.f32 1.0, %v1999
  %v2001 = vrcp.pop %v1926
  %v2002 = vmul.f32 1.0, %v2001
  %v2003 = vrcp.pop %v1927
  %v2004 = vmul.f32 1.0, %v2003
  %v2005 = vrcp.pop %v1928
  %v2006 = vmul.f32 1.0, %v2005
  %v2007 = vrcp.pop %v1929
  %v2008 = vmul.f32 1.0, %v2007
  %v2009 = vrcp.pop %v1930
  %v2010 = vmul.f32 1.0, %v2009
  %v2011 = vrcp.pop %v1931
  %v2012 = vmul.f32 1.0, %v2011
  %v2013 = vrcp.pop %v1932
  %v2014 = vmul.f32 1.0, %v2013
  %v2015 = vrcp.pop %v1933
  %v2016 = vmul.f32 1.0, %v2015
  %v2017 = vrcp.pop %v1934
  %v2018 = vmul.f32 1.0, %v2017
  %v2019 = vrcp.pop %v1935
  %v2020 = vmul.f32 1.0, %v2019
  %v2021 = vrcp.pop %v1936
  %v2022 = vmul.f32 1.0, %v2021
  %v2023 = vrcp.pop %v1937
  %v2024 = vmul.f32 1.0, %v2023
  %v2025 = vrcp.pop %v1938
  %v2026 = vmul.f32 1.0, %v2025
  %v2027 = vrcp.pop %v1939
  %v2028 = vmul.f32 1.0, %v2027
  %v2029 = vrcp.pop %v1940
  %v2030 = vmul.f32 1.0, %v2029
  %v2031 = vrcp.pop %v1941
  %v2032 = vmul.f32 1.0, %v2031
  %v2033 = vrcp.pop %v1942
  %v2034 = vmul.f32 1.0, %v2033
  %v2035 = vrcp.pop %v1943
  %v2036 = vmul.f32 1.0, %v2035
  %v2037 = vrcp.pop %v1944
  %v2038 = vmul.f32 1.0, %v2037
  %v2039 = vrcp.pop %v1945
  %v2040 = vmul.f32 1.0, %v2039
  %v2041 = vrcp.pop %v1946
  %v2042 = vmul.f32 1.0, %v2041
  %v2043 = vrcp.pop %v1947
  %v2044 = vmul.f32 1.0, %v2043
  %v2045 = vrcp.pop %v1948
  %v2046 = vmul.f32 1.0, %v2045
  %s2047 = scalar_lea.vmem %s0, 1176
  %v2048 = vld [vmem:[%s2047] sm:$0xff]
  %v2049 = vld [vmem:[%s2047 + $0x8] sm:$0xff]
  %v2050 = vld [vmem:[%s2047 + $0x10] sm:$0xff]
  %v2051 = vld [vmem:[%s2047 + $0x18] sm:$0xff]
  %v2052 = vld [vmem:[%s2047 + $0x20] sm:$0xff]
  %v2053 = vld [vmem:[%s2047 + $0x28] sm:$0xff]
  %v2054 = vld [vmem:[%s2047 + $0x30] sm:$0xff]
  %v2055 = vld [vmem:[%s2047 + $0x38] sm:$0xff]
  %v2056 = vld [vmem:[%s2047 + $0x40] sm:$0xff]
  %v2057 = vld [vmem:[%s2047 + $0x48] sm:$0xff]
  %v2058 = vld [vmem:[%s2047 + $0x50] sm:$0xff]
  %v2059 = vld [vmem:[%s2047 + $0x58] sm:$0xff]
  %v2060 = vld [vmem:[%s2047 + $0x60] sm:$0xff]
  %v2061 = vld [vmem:[%s2047 + $0x68] sm:$0xff]
  %v2062 = vld [vmem:[%s2047 + $0x70] sm:$0xff]
  %v2063 = vld [vmem:[%s2047 + $0x78] sm:$0xff]
  %v2064 = vld [vmem:[%s2047 + $0x80] sm:$0xff]
  %v2065 = vld [vmem:[%s2047 + $0x88] sm:$0xff]
  %v2066 = vld [vmem:[%s2047 + $0x90] sm:$0xff]
  %v2067 = vld [vmem:[%s2047 + $0x98] sm:$0xff]
  %v2068 = vld [vmem:[%s2047 + $0xa0] sm:$0xff]
  %v2069 = vld [vmem:[%s2047 + $0xa8] sm:$0xff]
  %v2070 = vld [vmem:[%s2047 + $0xb0] sm:$0xff]
  %v2071 = vld [vmem:[%s2047 + $0xb8] sm:$0xff]
  %v2072 = vld [vmem:[%s2047 + $0xc0] sm:$0xff]
  %v2073 = vld [vmem:[%s2047 + $0xc8] sm:$0xff]
  %v2074 = vld [vmem:[%s2047 + $0xd0] sm:$0xff]
  %v2075 = vld [vmem:[%s2047 + $0xd8] sm:$0xff]
  %v2076 = vld [vmem:[%s2047 + $0xe0] sm:$0xff]
  %v2077 = vld [vmem:[%s2047 + $0xe8] sm:$0xff]
  %v2078 = vld [vmem:[%s2047 + $0xf0] sm:$0xff]
  %v2079 = vld [vmem:[%s2047 + $0xf8] sm:$0xff]
  %v2080 = vld [vmem:[%s2047 + $0x100] sm:$0xff]
  %v2081 = vld [vmem:[%s2047 + $0x108] sm:$0xff]
  %v2082 = vld [vmem:[%s2047 + $0x110] sm:$0xff]
  %v2083 = vld [vmem:[%s2047 + $0x118] sm:$0xff]
  %v2084 = vld [vmem:[%s2047 + $0x120] sm:$0xff]
  %v2085 = vld [vmem:[%s2047 + $0x128] sm:$0xff]
  %v2086 = vld [vmem:[%s2047 + $0x130] sm:$0xff]
  %v2087 = vld [vmem:[%s2047 + $0x138] sm:$0xff]
  %v2088 = vld [vmem:[%s2047 + $0x140] sm:$0xff]
  %v2089 = vld [vmem:[%s2047 + $0x148] sm:$0xff]
  %v2090 = vld [vmem:[%s2047 + $0x150] sm:$0xff]
  %v2091 = vld [vmem:[%s2047 + $0x158] sm:$0xff]
  %v2092 = vld [vmem:[%s2047 + $0x160] sm:$0xff]
  %v2093 = vld [vmem:[%s2047 + $0x168] sm:$0xff]
  %v2094 = vld [vmem:[%s2047 + $0x170] sm:$0xff]
  %v2095 = vld [vmem:[%s2047 + $0x178] sm:$0xff]
  %v2096 = vld [vmem:[%s2047 + $0x180] sm:$0xff]
  %2097 = vmatprep.subr.mxu0 0.0
  %2098 = vmatpush1.msra.mxu0 %v29
  %2099 = vmatprep.subr.mxu0 0.0
  %2100 = vmatpush1.msra.mxu0 %v28
  %2101 = vmatprep.subr.mxu0 0.0
  %2102 = vmatpush1.msra.mxu0 %v27
  %2103 = vmatprep.subr.mxu0 0.0
  %2104 = vmatpush1.msra.mxu0 %v26
  %2105 = vmatprep.subr.mxu0 0.0
  %2106 = vmatpush1.msra.mxu0 %v25
  %2107 = vmatprep.subr.mxu0 0.0
  %2108 = vmatpush1.msra.mxu0 %v24
  %2109 = vmatprep.subr.mxu0 0.0
  %2110 = vmatpush1.msra.mxu0 %v23
  %2111 = vmatprep.subr.mxu0 0.0
  %2112 = vmatpush1.msra.mxu0 %v22
  %2113 = vmatprep.subr.mxu0 0.0
  %2114 = vmatpush1.msra.mxu0 %v21
  %2115 = vmatprep.subr.mxu0 0.0
  %2116 = vmatpush1.msra.mxu0 %v20
  %2117 = vmatprep.subr.mxu0 0.0
  %2118 = vmatpush1.msra.mxu0 %v19
  %2119 = vmatprep.subr.mxu0 0.0
  %2120 = vmatpush1.msra.mxu0 %v18
  %2121 = vmatprep.subr.mxu0 0.0
  %2122 = vmatpush1.msra.mxu0 %v17
  %2123 = vmatprep.subr.mxu0 0.0
  %2124 = vmatpush1.msra.mxu0 %v16
  %2125 = vmatprep.subr.mxu0 0.0
  %2126 = vmatpush1.msra.mxu0 %v15
  %2127 = vmatprep.subr.mxu0 0.0
  %2128 = vmatpush1.msra.mxu0 %v14
  %2129 = vmatprep.subr.mxu0 0.0
  %2130 = vmatpush2.msra.mxu0 0.0
  %2131 = vmatprep.subr.mxu0 0.0
  %2132 = vmatpush2.msra.mxu0 0.0
  %2133 = vmatprep.subr.mxu0 0.0
  %2134 = vmatpush2.msra.mxu0 0.0
  %2135 = vmatprep.subr.mxu0 0.0
  %2136 = vmatpush2.msra.mxu0 0.0
  %2137 = vmatprep.subr.mxu0 0.0
  %2138 = vmatpush2.msra.mxu0 0.0
  %2139 = vmatprep.subr.mxu0 0.0
  %2140 = vmatpush2.msra.mxu0 0.0
  %2141 = vmatprep.subr.mxu0 0.0
  %2142 = vmatpush2.msra.mxu0 0.0
  %2143 = vmatprep.subr.mxu0 0.0
  %2144 = vmatpush2.msra.mxu0 0.0
  %2145 = vmatprep.subr.mxu0 0.0
  %2146 = vmatpush2.msra.mxu0 0.0
  %2147 = vmatprep.subr.mxu0 0.0
  %2148 = vmatpush2.msra.mxu0 0.0
  %2149 = vmatprep.subr.mxu0 0.0
  %2150 = vmatpush2.msra.mxu0 0.0
  %2151 = vmatprep.subr.mxu0 0.0
  %2152 = vmatpush2.msra.mxu0 0.0
  %2153 = vmatprep.subr.mxu0 0.0
  %2154 = vmatpush2.msra.mxu0 0.0
  %2155 = vmatprep.subr.mxu0 0.0
  %2156 = vmatpush2.msra.mxu0 0.0
  %2157 = vmatprep.subr.mxu0 0.0
  %2158 = vmatpush2.msra.mxu0 0.0
  %2159 = vmatprep.subr.mxu0 0.0
  %2160 = vmatpush2.msra.mxu0 0.0
  %2161 = vmatprep.mubr.f32.mxu0 0.0
  %2162 = vmatmul.mubr.f32.gmra.mxu0 %v2048
  %v2163 = vpop.f32.mrf.mxu0
  %v2164 = vadd.f32 %v84, %v2163
  %v2165 = vpop.f32.mrf.mxu0
  %2166 = vmatprep.mubr.f32.mxu0 0.0
  %2167 = vmatmul.mubr.f32.gmra.mxu0 %v2049
  %v2168 = vpop.f32.mrf.mxu0
  %v2169 = vadd.f32 %v84, %v2168
  %v2170 = vpop.f32.mrf.mxu0
  %2171 = vmatprep.mubr.f32.mxu0 0.0
  %2172 = vmatmul.mubr.f32.gmra.mxu0 %v2050
  %v2173 = vpop.f32.mrf.mxu0
  %v2174 = vadd.f32 %v84, %v2173
  %v2175 = vpop.f32.mrf.mxu0
  %2176 = vmatprep.mubr.f32.mxu0 0.0
  %2177 = vmatmul.mubr.f32.gmra.mxu0 %v2051
  %v2178 = vpop.f32.mrf.mxu0
  %v2179 = vadd.f32 %v84, %v2178
  %v2180 = vpop.f32.mrf.mxu0
  %2181 = vmatprep.mubr.f32.mxu0 0.0
  %2182 = vmatmul.mubr.f32.gmra.mxu0 %v2052
  %v2183 = vpop.f32.mrf.mxu0
  %v2184 = vadd.f32 %v84, %v2183
  %v2185 = vpop.f32.mrf.mxu0
  %2186 = vmatprep.mubr.f32.mxu0 0.0
  %2187 = vmatmul.mubr.f32.gmra.mxu0 %v2053
  %v2188 = vpop.f32.mrf.mxu0
  %v2189 = vadd.f32 %v84, %v2188
  %v2190 = vpop.f32.mrf.mxu0
  %2191 = vmatprep.mubr.f32.mxu0 0.0
  %2192 = vmatmul.mubr.f32.gmra.mxu0 %v2054
  %v2193 = vpop.f32.mrf.mxu0
  %v2194 = vadd.f32 %v84, %v2193
  %v2195 = vpop.f32.mrf.mxu0
  %2196 = vmatprep.mubr.f32.mxu0 0.0
  %2197 = vmatmul.mubr.f32.gmra.mxu0 %v2055
  %v2198 = vpop.f32.mrf.mxu0
  %v2199 = vadd.f32 %v84, %v2198
  %v2200 = vpop.f32.mrf.mxu0
  %2201 = vmatprep.mubr.f32.mxu0 0.0
  %2202 = vmatmul.mubr.f32.gmra.mxu0 %v2056
  %v2203 = vpop.f32.mrf.mxu0
  %v2204 = vadd.f32 %v84, %v2203
  %v2205 = vpop.f32.mrf.mxu0
  %2206 = vmatprep.mubr.f32.mxu0 0.0
  %2207 = vmatmul.mubr.f32.gmra.mxu0 %v2057
  %v2208 = vpop.f32.mrf.mxu0
  %v2209 = vadd.f32 %v84, %v2208
  %v2210 = vpop.f32.mrf.mxu0
  %2211 = vmatprep.mubr.f32.mxu0 0.0
  %2212 = vmatmul.mubr.f32.gmra.mxu0 %v2058
  %v2213 = vpop.f32.mrf.mxu0
  %v2214 = vadd.f32 %v84, %v2213
  %v2215 = vpop.f32.mrf.mxu0
  %2216 = vmatprep.mubr.f32.mxu0 0.0
  %2217 = vmatmul.mubr.f32.gmra.mxu0 %v2059
  %v2218 = vpop.f32.mrf.mxu0
  %v2219 = vadd.f32 %v84, %v2218
  %v2220 = vpop.f32.mrf.mxu0
  %2221 = vmatprep.mubr.f32.mxu0 0.0
  %2222 = vmatmul.mubr.f32.gmra.mxu0 %v2060
  %v2223 = vpop.f32.mrf.mxu0
  %v2224 = vadd.f32 %v84, %v2223
  %v2225 = vpop.f32.mrf.mxu0
  %2226 = vmatprep.mubr.f32.mxu0 0.0
  %2227 = vmatmul.mubr.f32.gmra.mxu0 %v2061
  %v2228 = vpop.f32.mrf.mxu0
  %v2229 = vadd.f32 %v84, %v2228
  %v2230 = vpop.f32.mrf.mxu0
  %2231 = vmatprep.mubr.f32.mxu0 0.0
  %2232 = vmatmul.mubr.f32.gmra.mxu0 %v2062
  %v2233 = vpop.f32.mrf.mxu0
  %v2234 = vadd.f32 %v84, %v2233
  %v2235 = vpop.f32.mrf.mxu0
  %2236 = vmatprep.mubr.f32.mxu0 0.0
  %2237 = vmatmul.mubr.f32.gmra.mxu0 %v2063
  %v2238 = vpop.f32.mrf.mxu0
  %v2239 = vadd.f32 %v84, %v2238
  %v2240 = vpop.f32.mrf.mxu0
  %2241 = vmatprep.mubr.f32.mxu0 0.0
  %2242 = vmatmul.mubr.f32.gmra.mxu0 %v2064
  %v2243 = vpop.f32.mrf.mxu0
  %v2244 = vadd.f32 %v84, %v2243
  %v2245 = vpop.f32.mrf.mxu0
  %2246 = vmatprep.mubr.f32.mxu0 0.0
  %2247 = vmatmul.mubr.f32.gmra.mxu0 %v2065
  %v2248 = vpop.f32.mrf.mxu0
  %v2249 = vadd.f32 %v84, %v2248
  %v2250 = vpop.f32.mrf.mxu0
  %2251 = vmatprep.mubr.f32.mxu0 0.0
  %2252 = vmatmul.mubr.f32.gmra.mxu0 %v2066
  %v2253 = vpop.f32.mrf.mxu0
  %v2254 = vadd.f32 %v84, %v2253
  %v2255 = vpop.f32.mrf.mxu0
  %2256 = vmatprep.mubr.f32.mxu0 0.0
  %2257 = vmatmul.mubr.f32.gmra.mxu0 %v2067
  %v2258 = vpop.f32.mrf.mxu0
  %v2259 = vadd.f32 %v84, %v2258
  %v2260 = vpop.f32.mrf.mxu0
  %2261 = vmatprep.mubr.f32.mxu0 0.0
  %2262 = vmatmul.mubr.f32.gmra.mxu0 %v2068
  %v2263 = vpop.f32.mrf.mxu0
  %v2264 = vadd.f32 %v84, %v2263
  %v2265 = vpop.f32.mrf.mxu0
  %2266 = vmatprep.mubr.f32.mxu0 0.0
  %2267 = vmatmul.mubr.f32.gmra.mxu0 %v2069
  %v2268 = vpop.f32.mrf.mxu0
  %v2269 = vadd.f32 %v84, %v2268
  %v2270 = vpop.f32.mrf.mxu0
  %2271 = vmatprep.mubr.f32.mxu0 0.0
  %2272 = vmatmul.mubr.f32.gmra.mxu0 %v2070
  %v2273 = vpop.f32.mrf.mxu0
  %v2274 = vadd.f32 %v84, %v2273
  %v2275 = vpop.f32.mrf.mxu0
  %2276 = vmatprep.mubr.f32.mxu0 0.0
  %2277 = vmatmul.mubr.f32.gmra.mxu0 %v2071
  %v2278 = vpop.f32.mrf.mxu0
  %v2279 = vadd.f32 %v84, %v2278
  %v2280 = vpop.f32.mrf.mxu0
  %2281 = vmatprep.mubr.f32.mxu0 0.0
  %2282 = vmatmul.mubr.f32.gmra.mxu0 %v2072
  %v2283 = vpop.f32.mrf.mxu0
  %v2284 = vadd.f32 %v84, %v2283
  %v2285 = vpop.f32.mrf.mxu0
  %2286 = vmatprep.mubr.f32.mxu0 0.0
  %2287 = vmatmul.mubr.f32.gmra.mxu0 %v2073
  %v2288 = vpop.f32.mrf.mxu0
  %v2289 = vadd.f32 %v84, %v2288
  %v2290 = vpop.f32.mrf.mxu0
  %2291 = vmatprep.mubr.f32.mxu0 0.0
  %2292 = vmatmul.mubr.f32.gmra.mxu0 %v2074
  %v2293 = vpop.f32.mrf.mxu0
  %v2294 = vadd.f32 %v84, %v2293
  %v2295 = vpop.f32.mrf.mxu0
  %2296 = vmatprep.mubr.f32.mxu0 0.0
  %2297 = vmatmul.mubr.f32.gmra.mxu0 %v2075
  %v2298 = vpop.f32.mrf.mxu0
  %v2299 = vadd.f32 %v84, %v2298
  %v2300 = vpop.f32.mrf.mxu0
  %2301 = vmatprep.mubr.f32.mxu0 0.0
  %2302 = vmatmul.mubr.f32.gmra.mxu0 %v2076
  %v2303 = vpop.f32.mrf.mxu0
  %v2304 = vadd.f32 %v84, %v2303
  %v2305 = vpop.f32.mrf.mxu0
  %2306 = vmatprep.mubr.f32.mxu0 0.0
  %2307 = vmatmul.mubr.f32.gmra.mxu0 %v2077
  %v2308 = vpop.f32.mrf.mxu0
  %v2309 = vadd.f32 %v84, %v2308
  %v2310 = vpop.f32.mrf.mxu0
  %2311 = vmatprep.mubr.f32.mxu0 0.0
  %2312 = vmatmul.mubr.f32.gmra.mxu0 %v2078
  %v2313 = vpop.f32.mrf.mxu0
  %v2314 = vadd.f32 %v84, %v2313
  %v2315 = vpop.f32.mrf.mxu0
  %2316 = vmatprep.mubr.f32.mxu0 0.0
  %2317 = vmatmul.mubr.f32.gmra.mxu0 %v2079
  %v2318 = vpop.f32.mrf.mxu0
  %v2319 = vadd.f32 %v84, %v2318
  %v2320 = vpop.f32.mrf.mxu0
  %2321 = vmatprep.mubr.f32.mxu0 0.0
  %2322 = vmatmul.mubr.f32.gmra.mxu0 %v2080
  %v2323 = vpop.f32.mrf.mxu0
  %v2324 = vadd.f32 %v84, %v2323
  %v2325 = vpop.f32.mrf.mxu0
  %2326 = vmatprep.mubr.f32.mxu0 0.0
  %2327 = vmatmul.mubr.f32.gmra.mxu0 %v2081
  %v2328 = vpop.f32.mrf.mxu0
  %v2329 = vadd.f32 %v84, %v2328
  %v2330 = vpop.f32.mrf.mxu0
  %2331 = vmatprep.mubr.f32.mxu0 0.0
  %2332 = vmatmul.mubr.f32.gmra.mxu0 %v2082
  %v2333 = vpop.f32.mrf.mxu0
  %v2334 = vadd.f32 %v84, %v2333
  %v2335 = vpop.f32.mrf.mxu0
  %2336 = vmatprep.mubr.f32.mxu0 0.0
  %2337 = vmatmul.mubr.f32.gmra.mxu0 %v2083
  %v2338 = vpop.f32.mrf.mxu0
  %v2339 = vadd.f32 %v84, %v2338
  %v2340 = vpop.f32.mrf.mxu0
  %2341 = vmatprep.mubr.f32.mxu0 0.0
  %2342 = vmatmul.mubr.f32.gmra.mxu0 %v2084
  %v2343 = vpop.f32.mrf.mxu0
  %v2344 = vadd.f32 %v84, %v2343
  %v2345 = vpop.f32.mrf.mxu0
  %2346 = vmatprep.mubr.f32.mxu0 0.0
  %2347 = vmatmul.mubr.f32.gmra.mxu0 %v2085
  %v2348 = vpop.f32.mrf.mxu0
  %v2349 = vadd.f32 %v84, %v2348
  %v2350 = vpop.f32.mrf.mxu0
  %2351 = vmatprep.mubr.f32.mxu0 0.0
  %2352 = vmatmul.mubr.f32.gmra.mxu0 %v2086
  %v2353 = vpop.f32.mrf.mxu0
  %v2354 = vadd.f32 %v84, %v2353
  %v2355 = vpop.f32.mrf.mxu0
  %2356 = vmatprep.mubr.f32.mxu0 0.0
  %2357 = vmatmul.mubr.f32.gmra.mxu0 %v2087
  %v2358 = vpop.f32.mrf.mxu0
  %v2359 = vadd.f32 %v84, %v2358
  %v2360 = vpop.f32.mrf.mxu0
  %2361 = vmatprep.mubr.f32.mxu0 0.0
  %2362 = vmatmul.mubr.f32.gmra.mxu0 %v2088
  %v2363 = vpop.f32.mrf.mxu0
  %v2364 = vadd.f32 %v84, %v2363
  %v2365 = vpop.f32.mrf.mxu0
  %2366 = vmatprep.mubr.f32.mxu0 0.0
  %2367 = vmatmul.mubr.f32.gmra.mxu0 %v2089
  %v2368 = vpop.f32.mrf.mxu0
  %v2369 = vadd.f32 %v84, %v2368
  %v2370 = vpop.f32.mrf.mxu0
  %2371 = vmatprep.mubr.f32.mxu0 0.0
  %2372 = vmatmul.mubr.f32.gmra.mxu0 %v2090
  %v2373 = vpop.f32.mrf.mxu0
  %v2374 = vadd.f32 %v84, %v2373
  %v2375 = vpop.f32.mrf.mxu0
  %2376 = vmatprep.mubr.f32.mxu0 0.0
  %2377 = vmatmul.mubr.f32.gmra.mxu0 %v2091
  %v2378 = vpop.f32.mrf.mxu0
  %v2379 = vadd.f32 %v84, %v2378
  %v2380 = vpop.f32.mrf.mxu0
  %2381 = vmatprep.mubr.f32.mxu0 0.0
  %2382 = vmatmul.mubr.f32.gmra.mxu0 %v2092
  %v2383 = vpop.f32.mrf.mxu0
  %v2384 = vadd.f32 %v84, %v2383
  %v2385 = vpop.f32.mrf.mxu0
  %2386 = vmatprep.mubr.f32.mxu0 0.0
  %2387 = vmatmul.mubr.f32.gmra.mxu0 %v2093
  %v2388 = vpop.f32.mrf.mxu0
  %v2389 = vadd.f32 %v84, %v2388
  %v2390 = vpop.f32.mrf.mxu0
  %2391 = vmatprep.mubr.f32.mxu0 0.0
  %2392 = vmatmul.mubr.f32.gmra.mxu0 %v2094
  %v2393 = vpop.f32.mrf.mxu0
  %v2394 = vadd.f32 %v84, %v2393
  %v2395 = vpop.f32.mrf.mxu0
  %2396 = vmatprep.mubr.f32.mxu0 0.0
  %2397 = vmatmul.mubr.f32.gmra.mxu0 %v2095
  %v2398 = vpop.f32.mrf.mxu0
  %v2399 = vadd.f32 %v84, %v2398
  %v2400 = vpop.f32.mrf.mxu0
  %2401 = vmatprep.mubr.f32.mxu0 0.0
  %2402 = vmatmul.mubr.f32.gmra.mxu0 %v2096
  %v2403 = vpop.f32.mrf.mxu0
  %v2404 = vadd.f32 %v84, %v2403
  %v2405 = vpop.f32.mrf.mxu0
  %2406 = vdwg.mxu0
  %v2407 = vxor.u32 %v2164, 2147483648
  %v2408 = vxor.u32 %v2169, 2147483648
  %v2409 = vxor.u32 %v2174, 2147483648
  %v2410 = vxor.u32 %v2179, 2147483648
  %v2411 = vxor.u32 %v2184, 2147483648
  %v2412 = vxor.u32 %v2189, 2147483648
  %v2413 = vxor.u32 %v2194, 2147483648
  %v2414 = vxor.u32 %v2199, 2147483648
  %v2415 = vxor.u32 %v2204, 2147483648
  %v2416 = vxor.u32 %v2209, 2147483648
  %v2417 = vxor.u32 %v2214, 2147483648
  %v2418 = vxor.u32 %v2219, 2147483648
  %v2419 = vxor.u32 %v2224, 2147483648
  %v2420 = vxor.u32 %v2229, 2147483648
  %v2421 = vxor.u32 %v2234, 2147483648
  %v2422 = vxor.u32 %v2239, 2147483648
  %v2423 = vxor.u32 %v2244, 2147483648
  %v2424 = vxor.u32 %v2249, 2147483648
  %v2425 = vxor.u32 %v2254, 2147483648
  %v2426 = vxor.u32 %v2259, 2147483648
  %v2427 = vxor.u32 %v2264, 2147483648
  %v2428 = vxor.u32 %v2269, 2147483648
  %v2429 = vxor.u32 %v2274, 2147483648
  %v2430 = vxor.u32 %v2279, 2147483648
  %v2431 = vxor.u32 %v2284, 2147483648
  %v2432 = vxor.u32 %v2289, 2147483648
  %v2433 = vxor.u32 %v2294, 2147483648
  %v2434 = vxor.u32 %v2299, 2147483648
  %v2435 = vxor.u32 %v2304, 2147483648
  %v2436 = vxor.u32 %v2309, 2147483648
  %v2437 = vxor.u32 %v2314, 2147483648
  %v2438 = vxor.u32 %v2319, 2147483648
  %v2439 = vxor.u32 %v2324, 2147483648
  %v2440 = vxor.u32 %v2329, 2147483648
  %v2441 = vxor.u32 %v2334, 2147483648
  %v2442 = vxor.u32 %v2339, 2147483648
  %v2443 = vxor.u32 %v2344, 2147483648
  %v2444 = vxor.u32 %v2349, 2147483648
  %v2445 = vxor.u32 %v2354, 2147483648
  %v2446 = vxor.u32 %v2359, 2147483648
  %v2447 = vxor.u32 %v2364, 2147483648
  %v2448 = vxor.u32 %v2369, 2147483648
  %v2449 = vxor.u32 %v2374, 2147483648
  %v2450 = vxor.u32 %v2379, 2147483648
  %v2451 = vxor.u32 %v2384, 2147483648
  %v2452 = vxor.u32 %v2389, 2147483648
  %v2453 = vxor.u32 %v2394, 2147483648
  %v2454 = vxor.u32 %v2399, 2147483648
  %v2455 = vxor.u32 %v2404, 2147483648
  %v2456 = vmul.f32 %v2407, 1.442695
  %v2457 = vpow.pop %v2456
  %v2458 = vmul.f32 %v2408, 1.442695
  %v2459 = vpow.pop %v2458
  %v2460 = vmul.f32 %v2409, 1.442695
  %v2461 = vpow.pop %v2460
  %v2462 = vmul.f32 %v2410, 1.442695
  %v2463 = vpow.pop %v2462
  %v2464 = vmul.f32 %v2411, 1.442695
  %v2465 = vpow.pop %v2464
  %v2466 = vmul.f32 %v2412, 1.442695
  %v2467 = vpow.pop %v2466
  %v2468 = vmul.f32 %v2413, 1.442695
  %v2469 = vpow.pop %v2468
  %v2470 = vmul.f32 %v2414, 1.442695
  %v2471 = vpow.pop %v2470
  %v2472 = vmul.f32 %v2415, 1.442695
  %v2473 = vpow.pop %v2472
  %v2474 = vmul.f32 %v2416, 1.442695
  %v2475 = vpow.pop %v2474
  %v2476 = vmul.f32 %v2417, 1.442695
  %v2477 = vpow.pop %v2476
  %v2478 = vmul.f32 %v2418, 1.442695
  %v2479 = vpow.pop %v2478
  %v2480 = vmul.f32 %v2419, 1.442695
  %v2481 = vpow.pop %v2480
  %v2482 = vmul.f32 %v2420, 1.442695
  %v2483 = vpow.pop %v2482
  %v2484 = vmul.f32 %v2421, 1.442695
  %v2485 = vpow.pop %v2484
  %v2486 = vmul.f32 %v2422, 1.442695
  %v2487 = vpow.pop %v2486
  %v2488 = vmul.f32 %v2423, 1.442695
  %v2489 = vpow.pop %v2488
  %v2490 = vmul.f32 %v2424, 1.442695
  %v2491 = vpow.pop %v2490
  %v2492 = vmul.f32 %v2425, 1.442695
  %v2493 = vpow.pop %v2492
  %v2494 = vmul.f32 %v2426, 1.442695
  %v2495 = vpow.pop %v2494
  %v2496 = vmul.f32 %v2427, 1.442695
  %v2497 = vpow.pop %v2496
  %v2498 = vmul.f32 %v2428, 1.442695
  %v2499 = vpow.pop %v2498
  %v2500 = vmul.f32 %v2429, 1.442695
  %v2501 = vpow.pop %v2500
  %v2502 = vmul.f32 %v2430, 1.442695
  %v2503 = vpow.pop %v2502
  %v2504 = vmul.f32 %v2431, 1.442695
  %v2505 = vpow.pop %v2504
  %v2506 = vmul.f32 %v2432, 1.442695
  %v2507 = vpow.pop %v2506
  %v2508 = vmul.f32 %v2433, 1.442695
  %v2509 = vpow.pop %v2508
  %v2510 = vmul.f32 %v2434, 1.442695
  %v2511 = vpow.pop %v2510
  %v2512 = vmul.f32 %v2435, 1.442695
  %v2513 = vpow.pop %v2512
  %v2514 = vmul.f32 %v2436, 1.442695
  %v2515 = vpow.pop %v2514
  %v2516 = vmul.f32 %v2437, 1.442695
  %v2517 = vpow.pop %v2516
  %v2518 = vmul.f32 %v2438, 1.442695
  %v2519 = vpow.pop %v2518
  %v2520 = vmul.f32 %v2439, 1.442695
  %v2521 = vpow.pop %v2520
  %v2522 = vmul.f32 %v2440, 1.442695
  %v2523 = vpow.pop %v2522
  %v2524 = vmul.f32 %v2441, 1.442695
  %v2525 = vpow.pop %v2524
  %v2526 = vmul.f32 %v2442, 1.442695
  %v2527 = vpow.pop %v2526
  %v2528 = vmul.f32 %v2443, 1.442695
  %v2529 = vpow.pop %v2528
  %v2530 = vmul.f32 %v2444, 1.442695
  %v2531 = vpow.pop %v2530
  %v2532 = vmul.f32 %v2445, 1.442695
  %v2533 = vpow.pop %v2532
  %v2534 = vmul.f32 %v2446, 1.442695
  %v2535 = vpow.pop %v2534
  %v2536 = vmul.f32 %v2447, 1.442695
  %v2537 = vpow.pop %v2536
  %v2538 = vmul.f32 %v2448, 1.442695
  %v2539 = vpow.pop %v2538
  %v2540 = vmul.f32 %v2449, 1.442695
  %v2541 = vpow.pop %v2540
  %v2542 = vmul.f32 %v2450, 1.442695
  %v2543 = vpow.pop %v2542
  %v2544 = vmul.f32 %v2451, 1.442695
  %v2545 = vpow.pop %v2544
  %v2546 = vmul.f32 %v2452, 1.442695
  %v2547 = vpow.pop %v2546
  %v2548 = vmul.f32 %v2453, 1.442695
  %v2549 = vpow.pop %v2548
  %v2550 = vmul.f32 %v2454, 1.442695
  %v2551 = vpow.pop %v2550
  %v2552 = vmul.f32 %v2455, 1.442695
  %v2553 = vpow.pop %v2552
  %v2554 = vadd.f32 %v2457, 1.0
  %v2555 = vadd.f32 %v2459, 1.0
  %v2556 = vadd.f32 %v2461, 1.0
  %v2557 = vadd.f32 %v2463, 1.0
  %v2558 = vadd.f32 %v2465, 1.0
  %v2559 = vadd.f32 %v2467, 1.0
  %v2560 = vadd.f32 %v2469, 1.0
  %v2561 = vadd.f32 %v2471, 1.0
  %v2562 = vadd.f32 %v2473, 1.0
  %v2563 = vadd.f32 %v2475, 1.0
  %v2564 = vadd.f32 %v2477, 1.0
  %v2565 = vadd.f32 %v2479, 1.0
  %v2566 = vadd.f32 %v2481, 1.0
  %v2567 = vadd.f32 %v2483, 1.0
  %v2568 = vadd.f32 %v2485, 1.0
  %v2569 = vadd.f32 %v2487, 1.0
  %v2570 = vadd.f32 %v2489, 1.0
  %v2571 = vadd.f32 %v2491, 1.0
  %v2572 = vadd.f32 %v2493, 1.0
  %v2573 = vadd.f32 %v2495, 1.0
  %v2574 = vadd.f32 %v2497, 1.0
  %v2575 = vadd.f32 %v2499, 1.0
  %v2576 = vadd.f32 %v2501, 1.0
  %v2577 = vadd.f32 %v2503, 1.0
  %v2578 = vadd.f32 %v2505, 1.0
  %v2579 = vadd.f32 %v2507, 1.0
  %v2580 = vadd.f32 %v2509, 1.0
  %v2581 = vadd.f32 %v2511, 1.0
  %v2582 = vadd.f32 %v2513, 1.0
  %v2583 = vadd.f32 %v2515, 1.0
  %v2584 = vadd.f32 %v2517, 1.0
  %v2585 = vadd.f32 %v2519, 1.0
  %v2586 = vadd.f32 %v2521, 1.0
  %v2587 = vadd.f32 %v2523, 1.0
  %v2588 = vadd.f32 %v2525, 1.0
  %v2589 = vadd.f32 %v2527, 1.0
  %v2590 = vadd.f32 %v2529, 1.0
  %v2591 = vadd.f32 %v2531, 1.0
  %v2592 = vadd.f32 %v2533, 1.0
  %v2593 = vadd.f32 %v2535, 1.0
  %v2594 = vadd.f32 %v2537, 1.0
  %v2595 = vadd.f32 %v2539, 1.0
  %v2596 = vadd.f32 %v2541, 1.0
  %v2597 = vadd.f32 %v2543, 1.0
  %v2598 = vadd.f32 %v2545, 1.0
  %v2599 = vadd.f32 %v2547, 1.0
  %v2600 = vadd.f32 %v2549, 1.0
  %v2601 = vadd.f32 %v2551, 1.0
  %v2602 = vadd.f32 %v2553, 1.0
  %v2603 = vrcp.pop %v2554
  %v2604 = vmul.f32 1.0, %v2603
  %v2605 = vrcp.pop %v2555
  %v2606 = vmul.f32 1.0, %v2605
  %v2607 = vrcp.pop %v2556
  %v2608 = vmul.f32 1.0, %v2607
  %v2609 = vrcp.pop %v2557
  %v2610 = vmul.f32 1.0, %v2609
  %v2611 = vrcp.pop %v2558
  %v2612 = vmul.f32 1.0, %v2611
  %v2613 = vrcp.pop %v2559
  %v2614 = vmul.f32 1.0, %v2613
  %v2615 = vrcp.pop %v2560
  %v2616 = vmul.f32 1.0, %v2615
  %v2617 = vrcp.pop %v2561
  %v2618 = vmul.f32 1.0, %v2617
  %v2619 = vrcp.pop %v2562
  %v2620 = vmul.f32 1.0, %v2619
  %v2621 = vrcp.pop %v2563
  %v2622 = vmul.f32 1.0, %v2621
  %v2623 = vrcp.pop %v2564
  %v2624 = vmul.f32 1.0, %v2623
  %v2625 = vrcp.pop %v2565
  %v2626 = vmul.f32 1.0, %v2625
  %v2627 = vrcp.pop %v2566
  %v2628 = vmul.f32 1.0, %v2627
  %v2629 = vrcp.pop %v2567
  %v2630 = vmul.f32 1.0, %v2629
  %v2631 = vrcp.pop %v2568
  %v2632 = vmul.f32 1.0, %v2631
  %v2633 = vrcp.pop %v2569
  %v2634 = vmul.f32 1.0, %v2633
  %v2635 = vrcp.pop %v2570
  %v2636 = vmul.f32 1.0, %v2635
  %v2637 = vrcp.pop %v2571
  %v2638 = vmul.f32 1.0, %v2637
  %v2639 = vrcp.pop %v2572
  %v2640 = vmul.f32 1.0, %v2639
  %v2641 = vrcp.pop %v2573
  %v2642 = vmul.f32 1.0, %v2641
  %v2643 = vrcp.pop %v2574
  %v2644 = vmul.f32 1.0, %v2643
  %v2645 = vrcp.pop %v2575
  %v2646 = vmul.f32 1.0, %v2645
  %v2647 = vrcp.pop %v2576
  %v2648 = vmul.f32 1.0, %v2647
  %v2649 = vrcp.pop %v2577
  %v2650 = vmul.f32 1.0, %v2649
  %v2651 = vrcp.pop %v2578
  %v2652 = vmul.f32 1.0, %v2651
  %v2653 = vrcp.pop %v2579
  %v2654 = vmul.f32 1.0, %v2653
  %v2655 = vrcp.pop %v2580
  %v2656 = vmul.f32 1.0, %v2655
  %v2657 = vrcp.pop %v2581
  %v2658 = vmul.f32 1.0, %v2657
  %v2659 = vrcp.pop %v2582
  %v2660 = vmul.f32 1.0, %v2659
  %v2661 = vrcp.pop %v2583
  %v2662 = vmul.f32 1.0, %v2661
  %v2663 = vrcp.pop %v2584
  %v2664 = vmul.f32 1.0, %v2663
  %v2665 = vrcp.pop %v2585
  %v2666 = vmul.f32 1.0, %v2665
  %v2667 = vrcp.pop %v2586
  %v2668 = vmul.f32 1.0, %v2667
  %v2669 = vrcp.pop %v2587
  %v2670 = vmul.f32 1.0, %v2669
  %v2671 = vrcp.pop %v2588
  %v2672 = vmul.f32 1.0, %v2671
  %v2673 = vrcp.pop %v2589
  %v2674 = vmul.f32 1.0, %v2673
  %v2675 = vrcp.pop %v2590
  %v2676 = vmul.f32 1.0, %v2675
  %v2677 = vrcp.pop %v2591
  %v2678 = vmul.f32 1.0, %v2677
  %v2679 = vrcp.pop %v2592
  %v2680 = vmul.f32 1.0, %v2679
  %v2681 = vrcp.pop %v2593
  %v2682 = vmul.f32 1.0, %v2681
  %v2683 = vrcp.pop %v2594
  %v2684 = vmul.f32 1.0, %v2683
  %v2685 = vrcp.pop %v2595
  %v2686 = vmul.f32 1.0, %v2685
  %v2687 = vrcp.pop %v2596
  %v2688 = vmul.f32 1.0, %v2687
  %v2689 = vrcp.pop %v2597
  %v2690 = vmul.f32 1.0, %v2689
  %v2691 = vrcp.pop %v2598
  %v2692 = vmul.f32 1.0, %v2691
  %v2693 = vrcp.pop %v2599
  %v2694 = vmul.f32 1.0, %v2693
  %v2695 = vrcp.pop %v2600
  %v2696 = vmul.f32 1.0, %v2695
  %v2697 = vrcp.pop %v2601
  %v2698 = vmul.f32 1.0, %v2697
  %v2699 = vrcp.pop %v2602
  %v2700 = vmul.f32 1.0, %v2699
  %v2701 = vmax.f32 %v1950, %v2604
  %v2702 = vmax.f32 %v1952, %v2606
  %v2703 = vmax.f32 %v1954, %v2608
  %v2704 = vmax.f32 %v1956, %v2610
  %v2705 = vmax.f32 %v1958, %v2612
  %v2706 = vmax.f32 %v1960, %v2614
  %v2707 = vmax.f32 %v1962, %v2616
  %v2708 = vmax.f32 %v1964, %v2618
  %v2709 = vmax.f32 %v1966, %v2620
  %v2710 = vmax.f32 %v1968, %v2622
  %v2711 = vmax.f32 %v1970, %v2624
  %v2712 = vmax.f32 %v1972, %v2626
  %v2713 = vmax.f32 %v1974, %v2628
  %v2714 = vmax.f32 %v1976, %v2630
  %v2715 = vmax.f32 %v1978, %v2632
  %v2716 = vmax.f32 %v1980, %v2634
  %v2717 = vmax.f32 %v1982, %v2636
  %v2718 = vmax.f32 %v1984, %v2638
  %v2719 = vmax.f32 %v1986, %v2640
  %v2720 = vmax.f32 %v1988, %v2642
  %v2721 = vmax.f32 %v1990, %v2644
  %v2722 = vmax.f32 %v1992, %v2646
  %v2723 = vmax.f32 %v1994, %v2648
  %v2724 = vmax.f32 %v1996, %v2650
  %v2725 = vmax.f32 %v1998, %v2652
  %v2726 = vmax.f32 %v2000, %v2654
  %v2727 = vmax.f32 %v2002, %v2656
  %v2728 = vmax.f32 %v2004, %v2658
  %v2729 = vmax.f32 %v2006, %v2660
  %v2730 = vmax.f32 %v2008, %v2662
  %v2731 = vmax.f32 %v2010, %v2664
  %v2732 = vmax.f32 %v2012, %v2666
  %v2733 = vmax.f32 %v2014, %v2668
  %v2734 = vmax.f32 %v2016, %v2670
  %v2735 = vmax.f32 %v2018, %v2672
  %v2736 = vmax.f32 %v2020, %v2674
  %v2737 = vmax.f32 %v2022, %v2676
  %v2738 = vmax.f32 %v2024, %v2678
  %v2739 = vmax.f32 %v2026, %v2680
  %v2740 = vmax.f32 %v2028, %v2682
  %v2741 = vmax.f32 %v2030, %v2684
  %v2742 = vmax.f32 %v2032, %v2686
  %v2743 = vmax.f32 %v2034, %v2688
  %v2744 = vmax.f32 %v2036, %v2690
  %v2745 = vmax.f32 %v2038, %v2692
  %v2746 = vmax.f32 %v2040, %v2694
  %v2747 = vmax.f32 %v2042, %v2696
  %v2748 = vmax.f32 %v2044, %v2698
  %v2749 = vmax.f32 %v2046, %v2700
  %v2750 = vmax.f32 %v1344, %v2701
  %v2751 = vmax.f32 %v1345, %v2702
  %v2752 = vmax.f32 %v1346, %v2703
  %v2753 = vmax.f32 %v1347, %v2704
  %v2754 = vmax.f32 %v1348, %v2705
  %v2755 = vmax.f32 %v1349, %v2706
  %v2756 = vmax.f32 %v1350, %v2707
  %v2757 = vmax.f32 %v1351, %v2708
  %v2758 = vmax.f32 %v1352, %v2709
  %v2759 = vmax.f32 %v1353, %v2710
  %v2760 = vmax.f32 %v1354, %v2711
  %v2761 = vmax.f32 %v1355, %v2712
  %v2762 = vmax.f32 %v1356, %v2713
  %v2763 = vmax.f32 %v1357, %v2714
  %v2764 = vmax.f32 %v1358, %v2715
  %v2765 = vmax.f32 %v1359, %v2716
  %v2766 = vmax.f32 %v1360, %v2717
  %v2767 = vmax.f32 %v1361, %v2718
  %v2768 = vmax.f32 %v1362, %v2719
  %v2769 = vmax.f32 %v1363, %v2720
  %v2770 = vmax.f32 %v1364, %v2721
  %v2771 = vmax.f32 %v1365, %v2722
  %v2772 = vmax.f32 %v1366, %v2723
  %v2773 = vmax.f32 %v1367, %v2724
  %v2774 = vmax.f32 %v1368, %v2725
  %v2775 = vmax.f32 %v1369, %v2726
  %v2776 = vmax.f32 %v1370, %v2727
  %v2777 = vmax.f32 %v1371, %v2728
  %v2778 = vmax.f32 %v1372, %v2729
  %v2779 = vmax.f32 %v1373, %v2730
  %v2780 = vmax.f32 %v1374, %v2731
  %v2781 = vmax.f32 %v1375, %v2732
  %v2782 = vmax.f32 %v1376, %v2733
  %v2783 = vmax.f32 %v1377, %v2734
  %v2784 = vmax.f32 %v1378, %v2735
  %v2785 = vmax.f32 %v1379, %v2736
  %v2786 = vmax.f32 %v1380, %v2737
  %v2787 = vmax.f32 %v1381, %v2738
  %v2788 = vmax.f32 %v1382, %v2739
  %v2789 = vmax.f32 %v1383, %v2740
  %v2790 = vmax.f32 %v1384, %v2741
  %v2791 = vmax.f32 %v1385, %v2742
  %v2792 = vmax.f32 %v1386, %v2743
  %v2793 = vmax.f32 %v1387, %v2744
  %v2794 = vmax.f32 %v1388, %v2745
  %v2795 = vmax.f32 %v1389, %v2746
  %v2796 = vmax.f32 %v1390, %v2747
  %v2797 = vmax.f32 %v1391, %v2748
  %v2798 = vmax.f32 %v1392, %v2749
  %2799 = vst [vmem:[%s3] sm:$0xff] %v2750
  %2800 = vst [vmem:[%s3 + $0x8] sm:$0xff] %v2751
  %2801 = vst [vmem:[%s3 + $0x10] sm:$0xff] %v2752
  %2802 = vst [vmem:[%s3 + $0x18] sm:$0xff] %v2753
  %2803 = vst [vmem:[%s3 + $0x20] sm:$0xff] %v2754
  %2804 = vst [vmem:[%s3 + $0x28] sm:$0xff] %v2755
  %2805 = vst [vmem:[%s3 + $0x30] sm:$0xff] %v2756
  %2806 = vst [vmem:[%s3 + $0x38] sm:$0xff] %v2757
  %2807 = vst [vmem:[%s3 + $0x40] sm:$0xff] %v2758
  %2808 = vst [vmem:[%s3 + $0x48] sm:$0xff] %v2759
  %2809 = vst [vmem:[%s3 + $0x50] sm:$0xff] %v2760
  %2810 = vst [vmem:[%s3 + $0x58] sm:$0xff] %v2761
  %2811 = vst [vmem:[%s3 + $0x60] sm:$0xff] %v2762
  %2812 = vst [vmem:[%s3 + $0x68] sm:$0xff] %v2763
  %2813 = vst [vmem:[%s3 + $0x70] sm:$0xff] %v2764
  %2814 = vst [vmem:[%s3 + $0x78] sm:$0xff] %v2765
  %2815 = vst [vmem:[%s3 + $0x80] sm:$0xff] %v2766
  %2816 = vst [vmem:[%s3 + $0x88] sm:$0xff] %v2767
  %2817 = vst [vmem:[%s3 + $0x90] sm:$0xff] %v2768
  %2818 = vst [vmem:[%s3 + $0x98] sm:$0xff] %v2769
  %2819 = vst [vmem:[%s3 + $0xa0] sm:$0xff] %v2770
  %2820 = vst [vmem:[%s3 + $0xa8] sm:$0xff] %v2771
  %2821 = vst [vmem:[%s3 + $0xb0] sm:$0xff] %v2772
  %2822 = vst [vmem:[%s3 + $0xb8] sm:$0xff] %v2773
  %2823 = vst [vmem:[%s3 + $0xc0] sm:$0xff] %v2774
  %2824 = vst [vmem:[%s3 + $0xc8] sm:$0xff] %v2775
  %2825 = vst [vmem:[%s3 + $0xd0] sm:$0xff] %v2776
  %2826 = vst [vmem:[%s3 + $0xd8] sm:$0xff] %v2777
  %2827 = vst [vmem:[%s3 + $0xe0] sm:$0xff] %v2778
  %2828 = vst [vmem:[%s3 + $0xe8] sm:$0xff] %v2779
  %2829 = vst [vmem:[%s3 + $0xf0] sm:$0xff] %v2780
  %2830 = vst [vmem:[%s3 + $0xf8] sm:$0xff] %v2781
  %2831 = vst [vmem:[%s3 + $0x100] sm:$0xff] %v2782
  %2832 = vst [vmem:[%s3 + $0x108] sm:$0xff] %v2783
  %2833 = vst [vmem:[%s3 + $0x110] sm:$0xff] %v2784
  %2834 = vst [vmem:[%s3 + $0x118] sm:$0xff] %v2785
  %2835 = vst [vmem:[%s3 + $0x120] sm:$0xff] %v2786
  %2836 = vst [vmem:[%s3 + $0x128] sm:$0xff] %v2787
  %2837 = vst [vmem:[%s3 + $0x130] sm:$0xff] %v2788
  %2838 = vst [vmem:[%s3 + $0x138] sm:$0xff] %v2789
  %2839 = vst [vmem:[%s3 + $0x140] sm:$0xff] %v2790
  %2840 = vst [vmem:[%s3 + $0x148] sm:$0xff] %v2791
  %2841 = vst [vmem:[%s3 + $0x150] sm:$0xff] %v2792
  %2842 = vst [vmem:[%s3 + $0x158] sm:$0xff] %v2793
  %2843 = vst [vmem:[%s3 + $0x160] sm:$0xff] %v2794
  %2844 = vst [vmem:[%s3 + $0x168] sm:$0xff] %v2795
  %2845 = vst [vmem:[%s3 + $0x170] sm:$0xff] %v2796
  %2846 = vst [vmem:[%s3 + $0x178] sm:$0xff] %v2797
  %2847 = vst [vmem:[%s3 + $0x180] sm:$0xff] %v2798
  // Predicated region
  $region14: #{convnet_forward.3} parent=0 // pred_check
    _
  $region15: #{convnet_forward.3} parent=0 // pred_check_branch
    %2849 = sbr.rel (0) target = $region17
  $region16: #{convnet_forward.3} parent=0 // pred_region
    _
  $region17: #{convnet_forward.3} parent=0 // pred_fallthru
    _
  // Predicated region
  $region18: #{convnet_forward.3} parent=0 // pred_check
    _
  $region19: #{convnet_forward.3} parent=0 // pred_check_branch
    %2851 = sbr.rel (0) target = $region21
  $region20: #{convnet_forward.3} parent=0 // pred_region
    _
  $region21: #{convnet_forward.3} parent=0 // pred_fallthru
    _

// kernel: convnet_forward.5
$region0: #{convnet_forward.5}
  #allocation0 [shape = 'u32[]', space=smem, size = 0x4, offset = 0x4, fixed_abs, tag = 'smem constant byte address 0x4 - core index']
  #allocation1 [shape = 'u32[144,128]{1,0:T(1,128)}', space=vmem, size = 0x12000, scoped, tag = 'internal scratch']
  %s0 = inlined_call_operand.vmem [shape: f32[2,512], index: 0, kind: input, shape index: {}]
  %s1 = inlined_call_operand.vmem [shape: f32[512,128], index: 1, kind: input, shape index: {}]
  %s2 = inlined_call_operand.vmem [shape: f32[1,128], index: 2, kind: input, shape index: {}]
  %s3 = inlined_call_operand.vmem [shape: f32[128,128], index: 3, kind: input, shape index: {}]
  %s4 = inlined_call_operand.vmem [shape: f32[1,128], index: 4, kind: input, shape index: {}]
  %s5 = inlined_call_operand.vmem [shape: f32[128,128], index: 5, kind: input, shape index: {}]
  %s6 = inlined_call_operand.vmem [shape: f32[1,128], index: 6, kind: input, shape index: {}]
  %s7 = inlined_call_operand.hbm [shape: f32[2,128], index: 7, kind: output, shape index: {}]
  %s8 = sld [smem:[#allocation0]]
  $region38: #{convnet_forward.5} parent=0
    _
  %s10 = ssub.s32 1, %s8
  %s11 = scalar_select 0, %s10, %s8
  $region1: #{convnet_forward.5} parent=0
    #allocation2 [shape = 'u8[1024]{0}', space=vmem, size = 0x400, scoped, tag = 'output window, operand 0, single buffered']
    #allocation3 [shape = 's32[1]{0}', space=sflag, size = 0x4, scoped, tag = 'scoped memory for convnet_forward.5']
    %12 = vsyncpa [#allocation3], 0
    // Predicated region
    $region2: #{convnet_forward.5} parent=1 // pred_check
      _
    $region3: #{convnet_forward.5} parent=1 // pred_check_branch
      %14 = sbr.rel (0) target = $region5
    $region4: #{convnet_forward.5} parent=1 // pred_region
      _
    $region5: #{convnet_forward.5} parent=1 // pred_fallthru
      _
    // Predicated region
    $region6: #{convnet_forward.5} parent=1 // pred_check
      _
    $region7: #{convnet_forward.5} parent=1 // pred_check_branch
      %16 = sbr.rel (0) target = $region9
    $region8: #{convnet_forward.5} parent=1 // pred_region
      _
    $region9: #{convnet_forward.5} parent=1 // pred_fallthru
      _
    // Predicated region
    $region10: #{convnet_forward.5} parent=1 // pred_check
      _
    $region11: #{convnet_forward.5} parent=1 // pred_check_branch
      %18 = sbr.rel (0) target = $region13
    $region12: #{convnet_forward.5} parent=1 // pred_region
      _
    $region13: #{convnet_forward.5} parent=1 // pred_fallthru
      _
    // Predicated region
    $region14: #{convnet_forward.5} parent=1 // pred_check
      _
    $region15: #{convnet_forward.5} parent=1 // pred_check_branch
      %20 = sbr.rel (0) target = $region17
    $region16: #{convnet_forward.5} parent=1 // pred_region
      _
    $region17: #{convnet_forward.5} parent=1 // pred_fallthru
      _
    // Predicated region
    $region18: #{convnet_forward.5} parent=1 // pred_check
      _
    $region19: #{convnet_forward.5} parent=1 // pred_check_branch
      %22 = sbr.rel (0) target = $region21
    $region20: #{convnet_forward.5} parent=1 // pred_region
      _
    $region21: #{convnet_forward.5} parent=1 // pred_fallthru
      _
    // Predicated region
    $region22: #{convnet_forward.5} parent=1 // pred_check
      _
    $region23: #{convnet_forward.5} parent=1 // pred_check_branch
      %24 = sbr.rel (0) target = $region25
    $region24: #{convnet_forward.5} parent=1 // pred_region
      _
    $region25: #{convnet_forward.5} parent=1 // pred_fallthru
      _
    // Predicated region
    $region26: #{convnet_forward.5} parent=1 // pred_check
      _
    $region27: #{convnet_forward.5} parent=1 // pred_check_branch
      %26 = sbr.rel (0) target = $region29
    $region28: #{convnet_forward.5} parent=1 // pred_region
      _
    $region29: #{convnet_forward.5} parent=1 // pred_fallthru
      _
    %v27 = vld [vmem:[%s0] sm:$0xff]
    %v28 = vld [vmem:[%s1] sm:$0xff]
    %v29 = vld [vmem:[%s1 + $0x8] sm:$0xff]
    %v30 = vld [vmem:[%s1 + $0x10] sm:$0xff]
    %v31 = vld [vmem:[%s1 + $0x18] sm:$0xff]
    %v32 = vld [vmem:[%s1 + $0x20] sm:$0xff]
    %v33 = vld [vmem:[%s1 + $0x28] sm:$0xff]
    %v34 = vld [vmem:[%s1 + $0x30] sm:$0xff]
    %v35 = vld [vmem:[%s1 + $0x38] sm:$0xff]
    %v36 = vld [vmem:[%s1 + $0x40] sm:$0xff]
    %v37 = vld [vmem:[%s1 + $0x48] sm:$0xff]
    %v38 = vld [vmem:[%s1 + $0x50] sm:$0xff]
    %v39 = vld [vmem:[%s1 + $0x58] sm:$0xff]
    %v40 = vld [vmem:[%s1 + $0x60] sm:$0xff]
    %v41 = vld [vmem:[%s1 + $0x68] sm:$0xff]
    %v42 = vld [vmem:[%s1 + $0x70] sm:$0xff]
    %v43 = vld [vmem:[%s1 + $0x78] sm:$0xff]
    %v44 = vld [vmem:[%s1 + $0x80] sm:$0xff]
    %v45 = vld [vmem:[%s1 + $0x88] sm:$0xff]
    %v46 = vld [vmem:[%s1 + $0x90] sm:$0xff]
    %v47 = vld [vmem:[%s1 + $0x98] sm:$0xff]
    %v48 = vld [vmem:[%s1 + $0xa0] sm:$0xff]
    %v49 = vld [vmem:[%s1 + $0xa8] sm:$0xff]
    %v50 = vld [vmem:[%s1 + $0xb0] sm:$0xff]
    %v51 = vld [vmem:[%s1 + $0xb8] sm:$0xff]
    %v52 = vld [vmem:[%s1 + $0xc0] sm:$0xff]
    %v53 = vld [vmem:[%s1 + $0xc8] sm:$0xff]
    %v54 = vld [vmem:[%s1 + $0xd0] sm:$0xff]
    %v55 = vld [vmem:[%s1 + $0xd8] sm:$0xff]
    %v56 = vld [vmem:[%s1 + $0xe0] sm:$0xff]
    %v57 = vld [vmem:[%s1 + $0xe8] sm:$0xff]
    %v58 = vld [vmem:[%s1 + $0xf0] sm:$0xff]
    %v59 = vld [vmem:[%s1 + $0xf8] sm:$0xff]
    %v60 = vld [vmem:[%s1 + $0x100] sm:$0xff]
    %v61 = vld [vmem:[%s1 + $0x108] sm:$0xff]
    %v62 = vld [vmem:[%s1 + $0x110] sm:$0xff]
    %v63 = vld [vmem:[%s1 + $0x118] sm:$0xff]
    %v64 = vld [vmem:[%s1 + $0x120] sm:$0xff]
    %v65 = vld [vmem:[%s1 + $0x128] sm:$0xff]
    %v66 = vld [vmem:[%s1 + $0x130] sm:$0xff]
    %v67 = vld [vmem:[%s1 + $0x138] sm:$0xff]
    %v68 = vld [vmem:[%s1 + $0x140] sm:$0xff]
    %v69 = vld [vmem:[%s1 + $0x148] sm:$0xff]
    %v70 = vld [vmem:[%s1 + $0x150] sm:$0xff]
    %v71 = vld [vmem:[%s1 + $0x158] sm:$0xff]
    %v72 = vld [vmem:[%s1 + $0x160] sm:$0xff]
    %v73 = vld [vmem:[%s1 + $0x168] sm:$0xff]
    %v74 = vld [vmem:[%s1 + $0x170] sm:$0xff]
    %v75 = vld [vmem:[%s1 + $0x178] sm:$0xff]
    %v76 = vld [vmem:[%s1 + $0x180] sm:$0xff]
    %v77 = vld [vmem:[%s1 + $0x188] sm:$0xff]
    %v78 = vld [vmem:[%s1 + $0x190] sm:$0xff]
    %v79 = vld [vmem:[%s1 + $0x198] sm:$0xff]
    %v80 = vld [vmem:[%s1 + $0x1a0] sm:$0xff]
    %v81 = vld [vmem:[%s1 + $0x1a8] sm:$0xff]
    %v82 = vld [vmem:[%s1 + $0x1b0] sm:$0xff]
    %v83 = vld [vmem:[%s1 + $0x1b8] sm:$0xff]
    %v84 = vld [vmem:[%s1 + $0x1c0] sm:$0xff]
    %v85 = vld [vmem:[%s1 + $0x1c8] sm:$0xff]
    %v86 = vld [vmem:[%s1 + $0x1d0] sm:$0xff]
    %v87 = vld [vmem:[%s1 + $0x1d8] sm:$0xff]
    %v88 = vld [vmem:[%s1 + $0x1e0] sm:$0xff]
    %v89 = vld [vmem:[%s1 + $0x1e8] sm:$0xff]
    %v90 = vld [vmem:[%s1 + $0x1f0] sm:$0xff]
    %v91 = vld [vmem:[%s1 + $0x1f8] sm:$0xff]
    %v92 = vld [vmem:[%s2] sm:$0x1]
    %v94 = vlaneseq
    %v95 = vshrl.u32 %v94, 7
    %v96 = vsub.s32 0, %v95
    %v97 = vrot.slane %v92, %v96
    %v100 = vcombine.high %v27, %v27
    %v102 = vunpack.c.l.s4 1983009808
    %v103 = vunpack.c.0.s8 %v102
    %v104 = vlaneseq
    %v105 = vshrl.u32 %v104, 7
    %v106 = vsub.s32 %v103, %v105
    %v107 = vrot.slane %v27, %v106
    %v109 = vunpack.c.l.s4 1983009808
    %v110 = vunpack.c.0.s8 %v109
    %v111 = vlaneseq
    %v112 = vshrl.u32 %v111, 7
    %v113 = vsub.s32 %v110, %v112
    %v114 = vrot.slane %v100, %v113
    %v115 = vcombine.high %v107, %v107
    %v116 = vcombine.high %v114, %v114
    %121 = vmatprep.subr.mxu0 0.0
    %122 = vmatpush1.msra.mxu0 %v43
    %123 = vmatprep.subr.mxu0 0.0
    %124 = vmatpush1.msra.mxu0 %v42
    %125 = vmatprep.subr.mxu0 0.0
    %126 = vmatpush1.msra.mxu0 %v41
    %127 = vmatprep.subr.mxu0 0.0
    %128 = vmatpush1.msra.mxu0 %v40
    %129 = vmatprep.subr.mxu0 0.0
    %130 = vmatpush1.msra.mxu0 %v39
    %131 = vmatprep.subr.mxu0 0.0
    %132 = vmatpush1.msra.mxu0 %v38
    %133 = vmatprep.subr.mxu0 0.0
    %134 = vmatpush1.msra.mxu0 %v37
    %135 = vmatprep.subr.mxu0 0.0
    %136 = vmatpush1.msra.mxu0 %v36
    %137 = vmatprep.subr.mxu0 0.0
    %138 = vmatpush1.msra.mxu0 %v35
    %139 = vmatprep.subr.mxu0 0.0
    %140 = vmatpush1.msra.mxu0 %v34
    %141 = vmatprep.subr.mxu0 0.0
    %142 = vmatpush1.msra.mxu0 %v33
    %143 = vmatprep.subr.mxu0 0.0
    %144 = vmatpush1.msra.mxu0 %v32
    %145 = vmatprep.subr.mxu0 0.0
    %146 = vmatpush1.msra.mxu0 %v31
    %147 = vmatprep.subr.mxu0 0.0
    %148 = vmatpush1.msra.mxu0 %v30
    %149 = vmatprep.subr.mxu0 0.0
    %150 = vmatpush1.msra.mxu0 %v29
    %151 = vmatprep.subr.mxu0 0.0
    %152 = vmatpush1.msra.mxu0 %v28
    %153 = vmatprep.subr.mxu0 0.0
    %154 = vmatpush2.msra.mxu0 %v59
    %155 = vmatprep.subr.mxu0 0.0
    %156 = vmatpush2.msra.mxu0 %v58
    %157 = vmatprep.subr.mxu0 0.0
    %158 = vmatpush2.msra.mxu0 %v57
    %159 = vmatprep.subr.mxu0 0.0
    %160 = vmatpush2.msra.mxu0 %v56
    %161 = vmatprep.subr.mxu0 0.0
    %162 = vmatpush2.msra.mxu0 %v55
    %163 = vmatprep.subr.mxu0 0.0
    %164 = vmatpush2.msra.mxu0 %v54
    %165 = vmatprep.subr.mxu0 0.0
    %166 = vmatpush2.msra.mxu0 %v53
    %167 = vmatprep.subr.mxu0 0.0
    %168 = vmatpush2.msra.mxu0 %v52
    %169 = vmatprep.subr.mxu0 0.0
    %170 = vmatpush2.msra.mxu0 %v51
    %171 = vmatprep.subr.mxu0 0.0
    %172 = vmatpush2.msra.mxu0 %v50
    %173 = vmatprep.subr.mxu0 0.0
    %174 = vmatpush2.msra.mxu0 %v49
    %175 = vmatprep.subr.mxu0 0.0
    %176 = vmatpush2.msra.mxu0 %v48
    %177 = vmatprep.subr.mxu0 0.0
    %178 = vmatpush2.msra.mxu0 %v47
    %179 = vmatprep.subr.mxu0 0.0
    %180 = vmatpush2.msra.mxu0 %v46
    %181 = vmatprep.subr.mxu0 0.0
    %182 = vmatpush2.msra.mxu0 %v45
    %183 = vmatprep.subr.mxu0 0.0
    %184 = vmatpush2.msra.mxu0 %v44
    %185 = vmatprep.mubr.f32.mxu0 %v115
    %186 = vmatmul.mubr.f32.gmra.mxu0 %v107
    %v187 = vpop.f32.mrf.mxu0
    %v188 = vadd.f32 %v97, %v187
    %v189 = vpop.f32.mrf.mxu0
    %190 = vdwg.mxu0
    %191 = vmatprep.subr.mxu0 0.0
    %192 = vmatpush1.msra.mxu0 %v75
    %193 = vmatprep.subr.mxu0 0.0
    %194 = vmatpush1.msra.mxu0 %v74
    %195 = vmatprep.subr.mxu0 0.0
    %196 = vmatpush1.msra.mxu0 %v73
    %197 = vmatprep.subr.mxu0 0.0
    %198 = vmatpush1.msra.mxu0 %v72
    %199 = vmatprep.subr.mxu0 0.0
    %200 = vmatpush1.msra.mxu0 %v71
    %201 = vmatprep.subr.mxu0 0.0
    %202 = vmatpush1.msra.mxu0 %v70
    %203 = vmatprep.subr.mxu0 0.0
    %204 = vmatpush1.msra.mxu0 %v69
    %205 = vmatprep.subr.mxu0 0.0
    %206 = vmatpush1.msra.mxu0 %v68
    %207 = vmatprep.subr.mxu0 0.0
    %208 = vmatpush1.msra.mxu0 %v67
    %209 = vmatprep.subr.mxu0 0.0
    %210 = vmatpush1.msra.mxu0 %v66
    %211 = vmatprep.subr.mxu0 0.0
    %212 = vmatpush1.msra.mxu0 %v65
    %213 = vmatprep.subr.mxu0 0.0
    %214 = vmatpush1.msra.mxu0 %v64
    %215 = vmatprep.subr.mxu0 0.0
    %216 = vmatpush1.msra.mxu0 %v63
    %217 = vmatprep.subr.mxu0 0.0
    %218 = vmatpush1.msra.mxu0 %v62
    %219 = vmatprep.subr.mxu0 0.0
    %220 = vmatpush1.msra.mxu0 %v61
    %221 = vmatprep.subr.mxu0 0.0
    %222 = vmatpush1.msra.mxu0 %v60
    %223 = vmatprep.subr.mxu0 0.0
    %224 = vmatpush2.msra.mxu0 %v91
    %225 = vmatprep.subr.mxu0 0.0
    %226 = vmatpush2.msra.mxu0 %v90
    %227 = vmatprep.subr.mxu0 0.0
    %228 = vmatpush2.msra.mxu0 %v89
    %229 = vmatprep.subr.mxu0 0.0
    %230 = vmatpush2.msra.mxu0 %v88
    %231 = vmatprep.subr.mxu0 0.0
    %232 = vmatpush2.msra.mxu0 %v87
    %233 = vmatprep.subr.mxu0 0.0
    %234 = vmatpush2.msra.mxu0 %v86
    %235 = vmatprep.subr.mxu0 0.0
    %236 = vmatpush2.msra.mxu0 %v85
    %237 = vmatprep.subr.mxu0 0.0
    %238 = vmatpush2.msra.mxu0 %v84
    %239 = vmatprep.subr.mxu0 0.0
    %240 = vmatpush2.msra.mxu0 %v83
    %241 = vmatprep.subr.mxu0 0.0
    %242 = vmatpush2.msra.mxu0 %v82
    %243 = vmatprep.subr.mxu0 0.0
    %244 = vmatpush2.msra.mxu0 %v81
    %245 = vmatprep.subr.mxu0 0.0
    %246 = vmatpush2.msra.mxu0 %v80
    %247 = vmatprep.subr.mxu0 0.0
    %248 = vmatpush2.msra.mxu0 %v79
    %249 = vmatprep.subr.mxu0 0.0
    %250 = vmatpush2.msra.mxu0 %v78
    %251 = vmatprep.subr.mxu0 0.0
    %252 = vmatpush2.msra.mxu0 %v77
    %253 = vmatprep.subr.mxu0 0.0
    %254 = vmatpush2.msra.mxu0 %v76
    %255 = vmatprep.mubr.f32.mxu0 %v116
    %256 = vmatmul.mubr.f32.gmra.mxu0 %v114
    %v257 = vpop.f32.mrf.mxu0
    %v258 = vadd.f32 %v188, %v257
    %v259 = vpop.f32.mrf.mxu0
    %260 = vdwg.mxu0
    %v261 = vxor.u32 %v258, 2147483648
    %v262 = vmul.f32 %v261, 1.442695
    %v263 = vpow.pop %v262
    %v264 = vadd.f32 %v263, 1.0
    %v265 = vrcp.pop %v264
    %v266 = vmul.f32 1.0, %v265
    %v267 = vld [vmem:[%s3] sm:$0xff]
    %v268 = vld [vmem:[%s3 + $0x8] sm:$0xff]
    %v269 = vld [vmem:[%s3 + $0x10] sm:$0xff]
    %v270 = vld [vmem:[%s3 + $0x18] sm:$0xff]
    %v271 = vld [vmem:[%s3 + $0x20] sm:$0xff]
    %v272 = vld [vmem:[%s3 + $0x28] sm:$0xff]
    %v273 = vld [vmem:[%s3 + $0x30] sm:$0xff]
    %v274 = vld [vmem:[%s3 + $0x38] sm:$0xff]
    %v275 = vld [vmem:[%s3 + $0x40] sm:$0xff]
    %v276 = vld [vmem:[%s3 + $0x48] sm:$0xff]
    %v277 = vld [vmem:[%s3 + $0x50] sm:$0xff]
    %v278 = vld [vmem:[%s3 + $0x58] sm:$0xff]
    %v279 = vld [vmem:[%s3 + $0x60] sm:$0xff]
    %v280 = vld [vmem:[%s3 + $0x68] sm:$0xff]
    %v281 = vld [vmem:[%s3 + $0x70] sm:$0xff]
    %v282 = vld [vmem:[%s3 + $0x78] sm:$0xff]
    %v283 = vld [vmem:[%s4] sm:$0x1]
    %v285 = vlaneseq
    %v286 = vshrl.u32 %v285, 7
    %v287 = vsub.s32 0, %v286
    %v288 = vrot.slane %v283, %v287
    %290 = vmatprep.subr.mxu0 0.0
    %291 = vmatpush1.msra.mxu0 %v282
    %292 = vmatprep.subr.mxu0 0.0
    %293 = vmatpush1.msra.mxu0 %v281
    %294 = vmatprep.subr.mxu0 0.0
    %295 = vmatpush1.msra.mxu0 %v280
    %296 = vmatprep.subr.mxu0 0.0
    %297 = vmatpush1.msra.mxu0 %v279
    %298 = vmatprep.subr.mxu0 0.0
    %299 = vmatpush1.msra.mxu0 %v278
    %300 = vmatprep.subr.mxu0 0.0
    %301 = vmatpush1.msra.mxu0 %v277
    %302 = vmatprep.subr.mxu0 0.0
    %303 = vmatpush1.msra.mxu0 %v276
    %304 = vmatprep.subr.mxu0 0.0
    %305 = vmatpush1.msra.mxu0 %v275
    %306 = vmatprep.subr.mxu0 0.0
    %307 = vmatpush1.msra.mxu0 %v274
    %308 = vmatprep.subr.mxu0 0.0
    %309 = vmatpush1.msra.mxu0 %v273
    %310 = vmatprep.subr.mxu0 0.0
    %311 = vmatpush1.msra.mxu0 %v272
    %312 = vmatprep.subr.mxu0 0.0
    %313 = vmatpush1.msra.mxu0 %v271
    %314 = vmatprep.subr.mxu0 0.0
    %315 = vmatpush1.msra.mxu0 %v270
    %316 = vmatprep.subr.mxu0 0.0
    %317 = vmatpush1.msra.mxu0 %v269
    %318 = vmatprep.subr.mxu0 0.0
    %319 = vmatpush1.msra.mxu0 %v268
    %320 = vmatprep.subr.mxu0 0.0
    %321 = vmatpush1.msra.mxu0 %v267
    %322 = vmatprep.subr.mxu0 0.0
    %323 = vmatpush2.msra.mxu0 0.0
    %324 = vmatprep.subr.mxu0 0.0
    %325 = vmatpush2.msra.mxu0 0.0
    %326 = vmatprep.subr.mxu0 0.0
    %327 = vmatpush2.msra.mxu0 0.0
    %328 = vmatprep.subr.mxu0 0.0
    %329 = vmatpush2.msra.mxu0 0.0
    %330 = vmatprep.subr.mxu0 0.0
    %331 = vmatpush2.msra.mxu0 0.0
    %332 = vmatprep.subr.mxu0 0.0
    %333 = vmatpush2.msra.mxu0 0.0
    %334 = vmatprep.subr.mxu0 0.0
    %335 = vmatpush2.msra.mxu0 0.0
    %336 = vmatprep.subr.mxu0 0.0
    %337 = vmatpush2.msra.mxu0 0.0
    %338 = vmatprep.subr.mxu0 0.0
    %339 = vmatpush2.msra.mxu0 0.0
    %340 = vmatprep.subr.mxu0 0.0
    %341 = vmatpush2.msra.mxu0 0.0
    %342 = vmatprep.subr.mxu0 0.0
    %343 = vmatpush2.msra.mxu0 0.0
    %344 = vmatprep.subr.mxu0 0.0
    %345 = vmatpush2.msra.mxu0 0.0
    %346 = vmatprep.subr.mxu0 0.0
    %347 = vmatpush2.msra.mxu0 0.0
    %348 = vmatprep.subr.mxu0 0.0
    %349 = vmatpush2.msra.mxu0 0.0
    %350 = vmatprep.subr.mxu0 0.0
    %351 = vmatpush2.msra.mxu0 0.0
    %352 = vmatprep.subr.mxu0 0.0
    %353 = vmatpush2.msra.mxu0 0.0
    %354 = vmatprep.mubr.f32.mxu0 0.0
    %355 = vmatmul.mubr.f32.gmra.mxu0 %v266
    %v356 = vpop.f32.mrf.mxu0
    %v357 = vadd.f32 %v288, %v356
    %v358 = vpop.f32.mrf.mxu0
    %359 = vdwg.mxu0
    %v360 = vxor.u32 %v357, 2147483648
    %v361 = vmul.f32 %v360, 1.442695
    %v362 = vpow.pop %v361
    %v363 = vadd.f32 %v362, 1.0
    %v364 = vrcp.pop %v363
    %v365 = vmul.f32 1.0, %v364
    %v366 = vld [vmem:[%s5] sm:$0xff]
    %v367 = vld [vmem:[%s5 + $0x8] sm:$0xff]
    %v368 = vld [vmem:[%s5 + $0x10] sm:$0xff]
    %v369 = vld [vmem:[%s5 + $0x18] sm:$0xff]
    %v370 = vld [vmem:[%s5 + $0x20] sm:$0xff]
    %v371 = vld [vmem:[%s5 + $0x28] sm:$0xff]
    %v372 = vld [vmem:[%s5 + $0x30] sm:$0xff]
    %v373 = vld [vmem:[%s5 + $0x38] sm:$0xff]
    %v374 = vld [vmem:[%s5 + $0x40] sm:$0xff]
    %v375 = vld [vmem:[%s5 + $0x48] sm:$0xff]
    %v376 = vld [vmem:[%s5 + $0x50] sm:$0xff]
    %v377 = vld [vmem:[%s5 + $0x58] sm:$0xff]
    %v378 = vld [vmem:[%s5 + $0x60] sm:$0xff]
    %v379 = vld [vmem:[%s5 + $0x68] sm:$0xff]
    %v380 = vld [vmem:[%s5 + $0x70] sm:$0xff]
    %v381 = vld [vmem:[%s5 + $0x78] sm:$0xff]
    %v382 = vld [vmem:[%s6] sm:$0x1]
    %v384 = vlaneseq
    %v385 = vshrl.u32 %v384, 7
    %v386 = vsub.s32 0, %v385
    %v387 = vrot.slane %v382, %v386
    %389 = vmatprep.subr.mxu0 0.0
    %390 = vmatpush1.msra.mxu0 %v381
    %391 = vmatprep.subr.mxu0 0.0
    %392 = vmatpush1.msra.mxu0 %v380
    %393 = vmatprep.subr.mxu0 0.0
    %394 = vmatpush1.msra.mxu0 %v379
    %395 = vmatprep.subr.mxu0 0.0
    %396 = vmatpush1.msra.mxu0 %v378
    %397 = vmatprep.subr.mxu0 0.0
    %398 = vmatpush1.msra.mxu0 %v377
    %399 = vmatprep.subr.mxu0 0.0
    %400 = vmatpush1.msra.mxu0 %v376
    %401 = vmatprep.subr.mxu0 0.0
    %402 = vmatpush1.msra.mxu0 %v375
    %403 = vmatprep.subr.mxu0 0.0
    %404 = vmatpush1.msra.mxu0 %v374
    %405 = vmatprep.subr.mxu0 0.0
    %406 = vmatpush1.msra.mxu0 %v373
    %407 = vmatprep.subr.mxu0 0.0
    %408 = vmatpush1.msra.mxu0 %v372
    %409 = vmatprep.subr.mxu0 0.0
    %410 = vmatpush1.msra.mxu0 %v371
    %411 = vmatprep.subr.mxu0 0.0
    %412 = vmatpush1.msra.mxu0 %v370
    %413 = vmatprep.subr.mxu0 0.0
    %414 = vmatpush1.msra.mxu0 %v369
    %415 = vmatprep.subr.mxu0 0.0
    %416 = vmatpush1.msra.mxu0 %v368
    %417 = vmatprep.subr.mxu0 0.0
    %418 = vmatpush1.msra.mxu0 %v367
    %419 = vmatprep.subr.mxu0 0.0
    %420 = vmatpush1.msra.mxu0 %v366
    %421 = vmatprep.subr.mxu0 0.0
    %422 = vmatpush2.msra.mxu0 0.0
    %423 = vmatprep.subr.mxu0 0.0
    %424 = vmatpush2.msra.mxu0 0.0
    %425 = vmatprep.subr.mxu0 0.0
    %426 = vmatpush2.msra.mxu0 0.0
    %427 = vmatprep.subr.mxu0 0.0
    %428 = vmatpush2.msra.mxu0 0.0
    %429 = vmatprep.subr.mxu0 0.0
    %430 = vmatpush2.msra.mxu0 0.0
    %431 = vmatprep.subr.mxu0 0.0
    %432 = vmatpush2.msra.mxu0 0.0
    %433 = vmatprep.subr.mxu0 0.0
    %434 = vmatpush2.msra.mxu0 0.0
    %435 = vmatprep.subr.mxu0 0.0
    %436 = vmatpush2.msra.mxu0 0.0
    %437 = vmatprep.subr.mxu0 0.0
    %438 = vmatpush2.msra.mxu0 0.0
    %439 = vmatprep.subr.mxu0 0.0
    %440 = vmatpush2.msra.mxu0 0.0
    %441 = vmatprep.subr.mxu0 0.0
    %442 = vmatpush2.msra.mxu0 0.0
    %443 = vmatprep.subr.mxu0 0.0
    %444 = vmatpush2.msra.mxu0 0.0
    %445 = vmatprep.subr.mxu0 0.0
    %446 = vmatpush2.msra.mxu0 0.0
    %447 = vmatprep.subr.mxu0 0.0
    %448 = vmatpush2.msra.mxu0 0.0
    %449 = vmatprep.subr.mxu0 0.0
    %450 = vmatpush2.msra.mxu0 0.0
    %451 = vmatprep.subr.mxu0 0.0
    %452 = vmatpush2.msra.mxu0 0.0
    %453 = vmatprep.mubr.f32.mxu0 0.0
    %454 = vmatmul.mubr.f32.gmra.mxu0 %v365
    %v455 = vpop.f32.mrf.mxu0
    %v456 = vadd.f32 %v387, %v455
    %v457 = vpop.f32.mrf.mxu0
    %458 = vdwg.mxu0
    %459 = vst [vmem:[#allocation2] sm:$0x3] %v456
    // Predicated region
    $region30: #{convnet_forward.5} parent=1 // pred_check
      _
    $region31: #{convnet_forward.5} parent=1 // pred_check_branch
      %461 = sbr.rel (0) target = $region33
    $region32: #{convnet_forward.5} parent=1 // pred_region
      %s463 = ssub.s32 32, 32
      %464 = vsyncadd [#allocation3], %s463
      %s466 = sshll.u32 [#allocation2], 4
      %s467 = int_to_ptr.vmem [resolvable:$true] %s466
      %469 = dma.vmem_to_hbm [thread:$0]  %s467, 32, %s7, [#allocation3]
    $region33: #{convnet_forward.5} parent=1 // pred_fallthru
      _
    // Predicated region
    $region34: #{convnet_forward.5} parent=1 // pred_check
      _
    $region35: #{convnet_forward.5} parent=1 // pred_check_branch
      %471 = sbr.rel (0) target = $region37
    $region36: #{convnet_forward.5} parent=1 // pred_region
      %472 = dma.done [#allocation3], 32
    $region37: #{convnet_forward.5} parent=1 // pred_fallthru
      _
    %473 = vsyncpa [#allocation3], 1

// kernel: convnet_forward.4
$region0: #{convnet_forward.4}
  #allocation0 [shape = 'u32[]', space=smem, size = 0x4, offset = 0x4, fixed_abs, tag = 'smem constant byte address 0x4 - core index']
  #allocation1 [shape = 'u32[144,128]{1,0:T(1,128)}', space=vmem, size = 0x12000, scoped, tag = 'internal scratch']
  %s0 = inlined_call_operand.vmem [shape: f32[4,50,256], index: 0, kind: input, shape index: {}]
  %s1 = inlined_call_operand.vmem [shape: f32[256,128], index: 1, kind: input, shape index: {}]
  %s2 = inlined_call_operand.vmem [shape: f32[1,128], index: 2, kind: input, shape index: {}]
  %s3 = inlined_call_operand.vmem [shape: f32[50,128], index: 3, kind: output, shape index: {}]
  %s4 = sld [smem:[#allocation0]]
  $region22: #{convnet_forward.4} parent=0
    _
  %s6 = ssub.s32 1, %s4
  %s7 = scalar_select 0, %s6, %s4
  // Predicated region
  $region2: #{convnet_forward.4} parent=0 // pred_check
    _
  $region3: #{convnet_forward.4} parent=0 // pred_check_branch
    %9 = sbr.rel (0) target = $region5
  $region4: #{convnet_forward.4} parent=0 // pred_region
    _
  $region5: #{convnet_forward.4} parent=0 // pred_fallthru
    _
  // Predicated region
  $region6: #{convnet_forward.4} parent=0 // pred_check
    _
  $region7: #{convnet_forward.4} parent=0 // pred_check_branch
    %11 = sbr.rel (0) target = $region9
  $region8: #{convnet_forward.4} parent=0 // pred_region
    _
  $region9: #{convnet_forward.4} parent=0 // pred_fallthru
    _
  // Predicated region
  $region10: #{convnet_forward.4} parent=0 // pred_check
    _
  $region11: #{convnet_forward.4} parent=0 // pred_check_branch
    %13 = sbr.rel (0) target = $region13
  $region12: #{convnet_forward.4} parent=0 // pred_region
    _
  $region13: #{convnet_forward.4} parent=0 // pred_fallthru
    _
  %v14 = vld [vmem:[%s1] sm:$0xff]
  %v15 = vld [vmem:[%s1 + $0x8] sm:$0xff]
  %v16 = vld [vmem:[%s1 + $0x10] sm:$0xff]
  %v17 = vld [vmem:[%s1 + $0x18] sm:$0xff]
  %v18 = vld [vmem:[%s1 + $0x20] sm:$0xff]
  %v19 = vld [vmem:[%s1 + $0x28] sm:$0xff]
  %v20 = vld [vmem:[%s1 + $0x30] sm:$0xff]
  %v21 = vld [vmem:[%s1 + $0x38] sm:$0xff]
  %v22 = vld [vmem:[%s1 + $0x40] sm:$0xff]
  %v23 = vld [vmem:[%s1 + $0x48] sm:$0xff]
  %v24 = vld [vmem:[%s1 + $0x50] sm:$0xff]
  %v25 = vld [vmem:[%s1 + $0x58] sm:$0xff]
  %v26 = vld [vmem:[%s1 + $0x60] sm:$0xff]
  %v27 = vld [vmem:[%s1 + $0x68] sm:$0xff]
  %v28 = vld [vmem:[%s1 + $0x70] sm:$0xff]
  %v29 = vld [vmem:[%s1 + $0x78] sm:$0xff]
  %v30 = vld [vmem:[%s1 + $0x80] sm:$0xff]
  %v31 = vld [vmem:[%s1 + $0x88] sm:$0xff]
  %v32 = vld [vmem:[%s1 + $0x90] sm:$0xff]
  %v33 = vld [vmem:[%s1 + $0x98] sm:$0xff]
  %v34 = vld [vmem:[%s1 + $0xa0] sm:$0xff]
  %v35 = vld [vmem:[%s1 + $0xa8] sm:$0xff]
  %v36 = vld [vmem:[%s1 + $0xb0] sm:$0xff]
  %v37 = vld [vmem:[%s1 + $0xb8] sm:$0xff]
  %v38 = vld [vmem:[%s1 + $0xc0] sm:$0xff]
  %v39 = vld [vmem:[%s1 + $0xc8] sm:$0xff]
  %v40 = vld [vmem:[%s1 + $0xd0] sm:$0xff]
  %v41 = vld [vmem:[%s1 + $0xd8] sm:$0xff]
  %v42 = vld [vmem:[%s1 + $0xe0] sm:$0xff]
  %v43 = vld [vmem:[%s1 + $0xe8] sm:$0xff]
  %v44 = vld [vmem:[%s1 + $0xf0] sm:$0xff]
  %v45 = vld [vmem:[%s1 + $0xf8] sm:$0xff]
  %v46 = vld [vmem:[%s2] sm:$0x1]
  %v47 = vld [vmem:[%s0] sm:$0xff]
  %v48 = vld [vmem:[%s0 + $0x8] sm:$0xff]
  %v49 = vld [vmem:[%s0 + $0x10] sm:$0xff]
  %v50 = vld [vmem:[%s0 + $0x18] sm:$0xff]
  %v51 = vld [vmem:[%s0 + $0x20] sm:$0xff]
  %v52 = vld [vmem:[%s0 + $0x28] sm:$0xff]
  %v53 = vld [vmem:[%s0 + $0x30] sm:$0xff]
  %v54 = vld [vmem:[%s0 + $0x38] sm:$0xff]
  %v55 = vld [vmem:[%s0 + $0x40] sm:$0xff]
  %v56 = vld [vmem:[%s0 + $0x48] sm:$0xff]
  %v57 = vld [vmem:[%s0 + $0x50] sm:$0xff]
  %v58 = vld [vmem:[%s0 + $0x58] sm:$0xff]
  %v59 = vld [vmem:[%s0 + $0x60] sm:$0x3]
  %v60 = vld [vmem:[%s0 + $0x68] sm:$0x3]
  %v62 = vlaneseq
  %v63 = vshrl.u32 %v62, 7
  %v64 = vsub.s32 0, %v63
  %v65 = vrot.slane %v46, %v64
  %67 = vmatprep.subr.mxu0 0.0
  %68 = vmatpush1.msra.mxu0 %v29
  %69 = vmatprep.subr.mxu0 0.0
  %70 = vmatpush1.msra.mxu0 %v28
  %71 = vmatprep.subr.mxu0 0.0
  %72 = vmatpush1.msra.mxu0 %v27
  %73 = vmatprep.subr.mxu0 0.0
  %74 = vmatpush1.msra.mxu0 %v26
  %75 = vmatprep.subr.mxu0 0.0
  %76 = vmatpush1.msra.mxu0 %v25
  %77 = vmatprep.subr.mxu0 0.0
  %78 = vmatpush1.msra.mxu0 %v24
  %79 = vmatprep.subr.mxu0 0.0
  %80 = vmatpush1.msra.mxu0 %v23
  %81 = vmatprep.subr.mxu0 0.0
  %82 = vmatpush1.msra.mxu0 %v22
  %83 = vmatprep.subr.mxu0 0.0
  %84 = vmatpush1.msra.mxu0 %v21
  %85 = vmatprep.subr.mxu0 0.0
  %86 = vmatpush1.msra.mxu0 %v20
  %87 = vmatprep.subr.mxu0 0.0
  %88 = vmatpush1.msra.mxu0 %v19
  %89 = vmatprep.subr.mxu0 0.0
  %90 = vmatpush1.msra.mxu0 %v18
  %91 = vmatprep.subr.mxu0 0.0
  %92 = vmatpush1.msra.mxu0 %v17
  %93 = vmatprep.subr.mxu0 0.0
  %94 = vmatpush1.msra.mxu0 %v16
  %95 = vmatprep.subr.mxu0 0.0
  %96 = vmatpush1.msra.mxu0 %v15
  %97 = vmatprep.subr.mxu0 0.0
  %98 = vmatpush1.msra.mxu0 %v14
  %99 = vmatprep.subr.mxu0 0.0
  %100 = vmatpush2.msra.mxu0 %v45
  %101 = vmatprep.subr.mxu0 0.0
  %102 = vmatpush2.msra.mxu0 %v44
  %103 = vmatprep.subr.mxu0 0.0
  %104 = vmatpush2.msra.mxu0 %v43
  %105 = vmatprep.subr.mxu0 0.0
  %106 = vmatpush2.msra.mxu0 %v42
  %107 = vmatprep.subr.mxu0 0.0
  %108 = vmatpush2.msra.mxu0 %v41
  %109 = vmatprep.subr.mxu0 0.0
  %110 = vmatpush2.msra.mxu0 %v40
  %111 = vmatprep.subr.mxu0 0.0
  %112 = vmatpush2.msra.mxu0 %v39
  %113 = vmatprep.subr.mxu0 0.0
  %114 = vmatpush2.msra.mxu0 %v38
  %115 = vmatprep.subr.mxu0 0.0
  %116 = vmatpush2.msra.mxu0 %v37
  %117 = vmatprep.subr.mxu0 0.0
  %118 = vmatpush2.msra.mxu0 %v36
  %119 = vmatprep.subr.mxu0 0.0
  %120 = vmatpush2.msra.mxu0 %v35
  %121 = vmatprep.subr.mxu0 0.0
  %122 = vmatpush2.msra.mxu0 %v34
  %123 = vmatprep.subr.mxu0 0.0
  %124 = vmatpush2.msra.mxu0 %v33
  %125 = vmatprep.subr.mxu0 0.0
  %126 = vmatpush2.msra.mxu0 %v32
  %127 = vmatprep.subr.mxu0 0.0
  %128 = vmatpush2.msra.mxu0 %v31
  %129 = vmatprep.subr.mxu0 0.0
  %130 = vmatpush2.msra.mxu0 %v30
  %131 = vmatprep.mubr.f32.mxu0 %v48
  %132 = vmatmul.mubr.f32.gmra.mxu0 %v47
  %v133 = vpop.f32.mrf.mxu0
  %v134 = vadd.f32 %v65, %v133
  %v135 = vpop.f32.mrf.mxu0
  %136 = vmatprep.mubr.f32.mxu0 %v50
  %137 = vmatmul.mubr.f32.gmra.mxu0 %v49
  %v138 = vpop.f32.mrf.mxu0
  %v139 = vadd.f32 %v65, %v138
  %v140 = vpop.f32.mrf.mxu0
  %141 = vmatprep.mubr.f32.mxu0 %v52
  %142 = vmatmul.mubr.f32.gmra.mxu0 %v51
  %v143 = vpop.f32.mrf.mxu0
  %v144 = vadd.f32 %v65, %v143
  %v145 = vpop.f32.mrf.mxu0
  %146 = vmatprep.mubr.f32.mxu0 %v54
  %147 = vmatmul.mubr.f32.gmra.mxu0 %v53
  %v148 = vpop.f32.mrf.mxu0
  %v149 = vadd.f32 %v65, %v148
  %v150 = vpop.f32.mrf.mxu0
  %151 = vmatprep.mubr.f32.mxu0 %v56
  %152 = vmatmul.mubr.f32.gmra.mxu0 %v55
  %v153 = vpop.f32.mrf.mxu0
  %v154 = vadd.f32 %v65, %v153
  %v155 = vpop.f32.mrf.mxu0
  %156 = vmatprep.mubr.f32.mxu0 %v58
  %157 = vmatmul.mubr.f32.gmra.mxu0 %v57
  %v158 = vpop.f32.mrf.mxu0
  %v159 = vadd.f32 %v65, %v158
  %v160 = vpop.f32.mrf.mxu0
  %161 = vmatprep.mubr.f32.mxu0 %v60
  %162 = vmatmul.mubr.f32.gmra.mxu0 %v59
  %v163 = vpop.f32.mrf.mxu0
  %v164 = vadd.f32 %v65, %v163
  %v165 = vpop.f32.mrf.mxu0
  %166 = vdwg.mxu0
  %v167 = vxor.u32 %v134, 2147483648
  %v168 = vxor.u32 %v139, 2147483648
  %v169 = vxor.u32 %v144, 2147483648
  %v170 = vxor.u32 %v149, 2147483648
  %v171 = vxor.u32 %v154, 2147483648
  %v172 = vxor.u32 %v159, 2147483648
  %v173 = vxor.u32 %v164, 2147483648
  %v174 = vmul.f32 %v167, 1.442695
  %v175 = vpow.pop %v174
  %v176 = vmul.f32 %v168, 1.442695
  %v177 = vpow.pop %v176
  %v178 = vmul.f32 %v169, 1.442695
  %v179 = vpow.pop %v178
  %v180 = vmul.f32 %v170, 1.442695
  %v181 = vpow.pop %v180
  %v182 = vmul.f32 %v171, 1.442695
  %v183 = vpow.pop %v182
  %v184 = vmul.f32 %v172, 1.442695
  %v185 = vpow.pop %v184
  %v186 = vmul.f32 %v173, 1.442695
  %v187 = vpow.pop %v186
  %v188 = vadd.f32 %v175, 1.0
  %v189 = vadd.f32 %v177, 1.0
  %v190 = vadd.f32 %v179, 1.0
  %v191 = vadd.f32 %v181, 1.0
  %v192 = vadd.f32 %v183, 1.0
  %v193 = vadd.f32 %v185, 1.0
  %v194 = vadd.f32 %v187, 1.0
  %v195 = vrcp.pop %v188
  %v196 = vmul.f32 1.0, %v195
  %v197 = vrcp.pop %v189
  %v198 = vmul.f32 1.0, %v197
  %v199 = vrcp.pop %v190
  %v200 = vmul.f32 1.0, %v199
  %v201 = vrcp.pop %v191
  %v202 = vmul.f32 1.0, %v201
  %v203 = vrcp.pop %v192
  %v204 = vmul.f32 1.0, %v203
  %v205 = vrcp.pop %v193
  %v206 = vmul.f32 1.0, %v205
  %v207 = vrcp.pop %v194
  %v208 = vmul.f32 1.0, %v207
  %s209 = scalar_lea.vmem %s0, 112
  %v210 = vld [vmem:[%s209] sm:$0xff]
  %v211 = vld [vmem:[%s209 + $0x8] sm:$0xff]
  %v212 = vld [vmem:[%s209 + $0x10] sm:$0xff]
  %v213 = vld [vmem:[%s209 + $0x18] sm:$0xff]
  %v214 = vld [vmem:[%s209 + $0x20] sm:$0xff]
  %v215 = vld [vmem:[%s209 + $0x28] sm:$0xff]
  %v216 = vld [vmem:[%s209 + $0x30] sm:$0xff]
  %v217 = vld [vmem:[%s209 + $0x38] sm:$0xff]
  %v218 = vld [vmem:[%s209 + $0x40] sm:$0xff]
  %v219 = vld [vmem:[%s209 + $0x48] sm:$0xff]
  %v220 = vld [vmem:[%s209 + $0x50] sm:$0xff]
  %v221 = vld [vmem:[%s209 + $0x58] sm:$0xff]
  %v222 = vld [vmem:[%s209 + $0x60] sm:$0x3]
  %v223 = vld [vmem:[%s209 + $0x68] sm:$0x3]
  %224 = vmatprep.subr.mxu0 0.0
  %225 = vmatpush1.msra.mxu0 %v29
  %226 = vmatprep.subr.mxu0 0.0
  %227 = vmatpush1.msra.mxu0 %v28
  %228 = vmatprep.subr.mxu0 0.0
  %229 = vmatpush1.msra.mxu0 %v27
  %230 = vmatprep.subr.mxu0 0.0
  %231 = vmatpush1.msra.mxu0 %v26
  %232 = vmatprep.subr.mxu0 0.0
  %233 = vmatpush1.msra.mxu0 %v25
  %234 = vmatprep.subr.mxu0 0.0
  %235 = vmatpush1.msra.mxu0 %v24
  %236 = vmatprep.subr.mxu0 0.0
  %237 = vmatpush1.msra.mxu0 %v23
  %238 = vmatprep.subr.mxu0 0.0
  %239 = vmatpush1.msra.mxu0 %v22
  %240 = vmatprep.subr.mxu0 0.0
  %241 = vmatpush1.msra.mxu0 %v21
  %242 = vmatprep.subr.mxu0 0.0
  %243 = vmatpush1.msra.mxu0 %v20
  %244 = vmatprep.subr.mxu0 0.0
  %245 = vmatpush1.msra.mxu0 %v19
  %246 = vmatprep.subr.mxu0 0.0
  %247 = vmatpush1.msra.mxu0 %v18
  %248 = vmatprep.subr.mxu0 0.0
  %249 = vmatpush1.msra.mxu0 %v17
  %250 = vmatprep.subr.mxu0 0.0
  %251 = vmatpush1.msra.mxu0 %v16
  %252 = vmatprep.subr.mxu0 0.0
  %253 = vmatpush1.msra.mxu0 %v15
  %254 = vmatprep.subr.mxu0 0.0
  %255 = vmatpush1.msra.mxu0 %v14
  %256 = vmatprep.subr.mxu0 0.0
  %257 = vmatpush2.msra.mxu0 %v45
  %258 = vmatprep.subr.mxu0 0.0
  %259 = vmatpush2.msra.mxu0 %v44
  %260 = vmatprep.subr.mxu0 0.0
  %261 = vmatpush2.msra.mxu0 %v43
  %262 = vmatprep.subr.mxu0 0.0
  %263 = vmatpush2.msra.mxu0 %v42
  %264 = vmatprep.subr.mxu0 0.0
  %265 = vmatpush2.msra.mxu0 %v41
  %266 = vmatprep.subr.mxu0 0.0
  %267 = vmatpush2.msra.mxu0 %v40
  %268 = vmatprep.subr.mxu0 0.0
  %269 = vmatpush2.msra.mxu0 %v39
  %270 = vmatprep.subr.mxu0 0.0
  %271 = vmatpush2.msra.mxu0 %v38
  %272 = vmatprep.subr.mxu0 0.0
  %273 = vmatpush2.msra.mxu0 %v37
  %274 = vmatprep.subr.mxu0 0.0
  %275 = vmatpush2.msra.mxu0 %v36
  %276 = vmatprep.subr.mxu0 0.0
  %277 = vmatpush2.msra.mxu0 %v35
  %278 = vmatprep.subr.mxu0 0.0
  %279 = vmatpush2.msra.mxu0 %v34
  %280 = vmatprep.subr.mxu0 0.0
  %281 = vmatpush2.msra.mxu0 %v33
  %282 = vmatprep.subr.mxu0 0.0
  %283 = vmatpush2.msra.mxu0 %v32
  %284 = vmatprep.subr.mxu0 0.0
  %285 = vmatpush2.msra.mxu0 %v31
  %286 = vmatprep.subr.mxu0 0.0
  %287 = vmatpush2.msra.mxu0 %v30
  %288 = vmatprep.mubr.f32.mxu0 %v211
  %289 = vmatmul.mubr.f32.gmra.mxu0 %v210
  %v290 = vpop.f32.mrf.mxu0
  %v291 = vadd.f32 %v65, %v290
  %v292 = vpop.f32.mrf.mxu0
  %293 = vmatprep.mubr.f32.mxu0 %v213
  %294 = vmatmul.mubr.f32.gmra.mxu0 %v212
  %v295 = vpop.f32.mrf.mxu0
  %v296 = vadd.f32 %v65, %v295
  %v297 = vpop.f32.mrf.mxu0
  %298 = vmatprep.mubr.f32.mxu0 %v215
  %299 = vmatmul.mubr.f32.gmra.mxu0 %v214
  %v300 = vpop.f32.mrf.mxu0
  %v301 = vadd.f32 %v65, %v300
  %v302 = vpop.f32.mrf.mxu0
  %303 = vmatprep.mubr.f32.mxu0 %v217
  %304 = vmatmul.mubr.f32.gmra.mxu0 %v216
  %v305 = vpop.f32.mrf.mxu0
  %v306 = vadd.f32 %v65, %v305
  %v307 = vpop.f32.mrf.mxu0
  %308 = vmatprep.mubr.f32.mxu0 %v219
  %309 = vmatmul.mubr.f32.gmra.mxu0 %v218
  %v310 = vpop.f32.mrf.mxu0
  %v311 = vadd.f32 %v65, %v310
  %v312 = vpop.f32.mrf.mxu0
  %313 = vmatprep.mubr.f32.mxu0 %v221
  %314 = vmatmul.mubr.f32.gmra.mxu0 %v220
  %v315 = vpop.f32.mrf.mxu0
  %v316 = vadd.f32 %v65, %v315
  %v317 = vpop.f32.mrf.mxu0
  %318 = vmatprep.mubr.f32.mxu0 %v223
  %319 = vmatmul.mubr.f32.gmra.mxu0 %v222
  %v320 = vpop.f32.mrf.mxu0
  %v321 = vadd.f32 %v65, %v320
  %v322 = vpop.f32.mrf.mxu0
  %323 = vdwg.mxu0
  %v324 = vxor.u32 %v291, 2147483648
  %v325 = vxor.u32 %v296, 2147483648
  %v326 = vxor.u32 %v301, 2147483648
  %v327 = vxor.u32 %v306, 2147483648
  %v328 = vxor.u32 %v311, 2147483648
  %v329 = vxor.u32 %v316, 2147483648
  %v330 = vxor.u32 %v321, 2147483648
  %v331 = vmul.f32 %v324, 1.442695
  %v332 = vpow.pop %v331
  %v333 = vmul.f32 %v325, 1.442695
  %v334 = vpow.pop %v333
  %v335 = vmul.f32 %v326, 1.442695
  %v336 = vpow.pop %v335
  %v337 = vmul.f32 %v327, 1.442695
  %v338 = vpow.pop %v337
  %v339 = vmul.f32 %v328, 1.442695
  %v340 = vpow.pop %v339
  %v341 = vmul.f32 %v329, 1.442695
  %v342 = vpow.pop %v341
  %v343 = vmul.f32 %v330, 1.442695
  %v344 = vpow.pop %v343
  %v345 = vadd.f32 %v332, 1.0
  %v346 = vadd.f32 %v334, 1.0
  %v347 = vadd.f32 %v336, 1.0
  %v348 = vadd.f32 %v338, 1.0
  %v349 = vadd.f32 %v340, 1.0
  %v350 = vadd.f32 %v342, 1.0
  %v351 = vadd.f32 %v344, 1.0
  %v352 = vrcp.pop %v345
  %v353 = vmul.f32 1.0, %v352
  %v354 = vrcp.pop %v346
  %v355 = vmul.f32 1.0, %v354
  %v356 = vrcp.pop %v347
  %v357 = vmul.f32 1.0, %v356
  %v358 = vrcp.pop %v348
  %v359 = vmul.f32 1.0, %v358
  %v360 = vrcp.pop %v349
  %v361 = vmul.f32 1.0, %v360
  %v362 = vrcp.pop %v350
  %v363 = vmul.f32 1.0, %v362
  %v364 = vrcp.pop %v351
  %v365 = vmul.f32 1.0, %v364
  %v366 = vmax.f32 %v196, %v353
  %v367 = vmax.f32 %v198, %v355
  %v368 = vmax.f32 %v200, %v357
  %v369 = vmax.f32 %v202, %v359
  %v370 = vmax.f32 %v204, %v361
  %v371 = vmax.f32 %v206, %v363
  %v372 = vmax.f32 %v208, %v365
  %s373 = scalar_lea.vmem %s0, 224
  %v374 = vld [vmem:[%s373] sm:$0xff]
  %v375 = vld [vmem:[%s373 + $0x8] sm:$0xff]
  %v376 = vld [vmem:[%s373 + $0x10] sm:$0xff]
  %v377 = vld [vmem:[%s373 + $0x18] sm:$0xff]
  %v378 = vld [vmem:[%s373 + $0x20] sm:$0xff]
  %v379 = vld [vmem:[%s373 + $0x28] sm:$0xff]
  %v380 = vld [vmem:[%s373 + $0x30] sm:$0xff]
  %v381 = vld [vmem:[%s373 + $0x38] sm:$0xff]
  %v382 = vld [vmem:[%s373 + $0x40] sm:$0xff]
  %v383 = vld [vmem:[%s373 + $0x48] sm:$0xff]
  %v384 = vld [vmem:[%s373 + $0x50] sm:$0xff]
  %v385 = vld [vmem:[%s373 + $0x58] sm:$0xff]
  %v386 = vld [vmem:[%s373 + $0x60] sm:$0x3]
  %v387 = vld [vmem:[%s373 + $0x68] sm:$0x3]
  %388 = vmatprep.subr.mxu0 0.0
  %389 = vmatpush1.msra.mxu0 %v29
  %390 = vmatprep.subr.mxu0 0.0
  %391 = vmatpush1.msra.mxu0 %v28
  %392 = vmatprep.subr.mxu0 0.0
  %393 = vmatpush1.msra.mxu0 %v27
  %394 = vmatprep.subr.mxu0 0.0
  %395 = vmatpush1.msra.mxu0 %v26
  %396 = vmatprep.subr.mxu0 0.0
  %397 = vmatpush1.msra.mxu0 %v25
  %398 = vmatprep.subr.mxu0 0.0
  %399 = vmatpush1.msra.mxu0 %v24
  %400 = vmatprep.subr.mxu0 0.0
  %401 = vmatpush1.msra.mxu0 %v23
  %402 = vmatprep.subr.mxu0 0.0
  %403 = vmatpush1.msra.mxu0 %v22
  %404 = vmatprep.subr.mxu0 0.0
  %405 = vmatpush1.msra.mxu0 %v21
  %406 = vmatprep.subr.mxu0 0.0
  %407 = vmatpush1.msra.mxu0 %v20
  %408 = vmatprep.subr.mxu0 0.0
  %409 = vmatpush1.msra.mxu0 %v19
  %410 = vmatprep.subr.mxu0 0.0
  %411 = vmatpush1.msra.mxu0 %v18
  %412 = vmatprep.subr.mxu0 0.0
  %413 = vmatpush1.msra.mxu0 %v17
  %414 = vmatprep.subr.mxu0 0.0
  %415 = vmatpush1.msra.mxu0 %v16
  %416 = vmatprep.subr.mxu0 0.0
  %417 = vmatpush1.msra.mxu0 %v15
  %418 = vmatprep.subr.mxu0 0.0
  %419 = vmatpush1.msra.mxu0 %v14
  %420 = vmatprep.subr.mxu0 0.0
  %421 = vmatpush2.msra.mxu0 %v45
  %422 = vmatprep.subr.mxu0 0.0
  %423 = vmatpush2.msra.mxu0 %v44
  %424 = vmatprep.subr.mxu0 0.0
  %425 = vmatpush2.msra.mxu0 %v43
  %426 = vmatprep.subr.mxu0 0.0
  %427 = vmatpush2.msra.mxu0 %v42
  %428 = vmatprep.subr.mxu0 0.0
  %429 = vmatpush2.msra.mxu0 %v41
  %430 = vmatprep.subr.mxu0 0.0
  %431 = vmatpush2.msra.mxu0 %v40
  %432 = vmatprep.subr.mxu0 0.0
  %433 = vmatpush2.msra.mxu0 %v39
  %434 = vmatprep.subr.mxu0 0.0
  %435 = vmatpush2.msra.mxu0 %v38
  %436 = vmatprep.subr.mxu0 0.0
  %437 = vmatpush2.msra.mxu0 %v37
  %438 = vmatprep.subr.mxu0 0.0
  %439 = vmatpush2.msra.mxu0 %v36
  %440 = vmatprep.subr.mxu0 0.0
  %441 = vmatpush2.msra.mxu0 %v35
  %442 = vmatprep.subr.mxu0 0.0
  %443 = vmatpush2.msra.mxu0 %v34
  %444 = vmatprep.subr.mxu0 0.0
  %445 = vmatpush2.msra.mxu0 %v33
  %446 = vmatprep.subr.mxu0 0.0
  %447 = vmatpush2.msra.mxu0 %v32
  %448 = vmatprep.subr.mxu0 0.0
  %449 = vmatpush2.msra.mxu0 %v31
  %450 = vmatprep.subr.mxu0 0.0
  %451 = vmatpush2.msra.mxu0 %v30
  %452 = vmatprep.mubr.f32.mxu0 %v375
  %453 = vmatmul.mubr.f32.gmra.mxu0 %v374
  %v454 = vpop.f32.mrf.mxu0
  %v455 = vadd.f32 %v65, %v454
  %v456 = vpop.f32.mrf.mxu0
  %457 = vmatprep.mubr.f32.mxu0 %v377
  %458 = vmatmul.mubr.f32.gmra.mxu0 %v376
  %v459 = vpop.f32.mrf.mxu0
  %v460 = vadd.f32 %v65, %v459
  %v461 = vpop.f32.mrf.mxu0
  %462 = vmatprep.mubr.f32.mxu0 %v379
  %463 = vmatmul.mubr.f32.gmra.mxu0 %v378
  %v464 = vpop.f32.mrf.mxu0
  %v465 = vadd.f32 %v65, %v464
  %v466 = vpop.f32.mrf.mxu0
  %467 = vmatprep.mubr.f32.mxu0 %v381
  %468 = vmatmul.mubr.f32.gmra.mxu0 %v380
  %v469 = vpop.f32.mrf.mxu0
  %v470 = vadd.f32 %v65, %v469
  %v471 = vpop.f32.mrf.mxu0
  %472 = vmatprep.mubr.f32.mxu0 %v383
  %473 = vmatmul.mubr.f32.gmra.mxu0 %v382
  %v474 = vpop.f32.mrf.mxu0
  %v475 = vadd.f32 %v65, %v474
  %v476 = vpop.f32.mrf.mxu0
  %477 = vmatprep.mubr.f32.mxu0 %v385
  %478 = vmatmul.mubr.f32.gmra.mxu0 %v384
  %v479 = vpop.f32.mrf.mxu0
  %v480 = vadd.f32 %v65, %v479
  %v481 = vpop.f32.mrf.mxu0
  %482 = vmatprep.mubr.f32.mxu0 %v387
  %483 = vmatmul.mubr.f32.gmra.mxu0 %v386
  %v484 = vpop.f32.mrf.mxu0
  %v485 = vadd.f32 %v65, %v484
  %v486 = vpop.f32.mrf.mxu0
  %487 = vdwg.mxu0
  %v488 = vxor.u32 %v455, 2147483648
  %v489 = vxor.u32 %v460, 2147483648
  %v490 = vxor.u32 %v465, 2147483648
  %v491 = vxor.u32 %v470, 2147483648
  %v492 = vxor.u32 %v475, 2147483648
  %v493 = vxor.u32 %v480, 2147483648
  %v494 = vxor.u32 %v485, 2147483648
  %v495 = vmul.f32 %v488, 1.442695
  %v496 = vpow.pop %v495
  %v497 = vmul.f32 %v489, 1.442695
  %v498 = vpow.pop %v497
  %v499 = vmul.f32 %v490, 1.442695
  %v500 = vpow.pop %v499
  %v501 = vmul.f32 %v491, 1.442695
  %v502 = vpow.pop %v501
  %v503 = vmul.f32 %v492, 1.442695
  %v504 = vpow.pop %v503
  %v505 = vmul.f32 %v493, 1.442695
  %v506 = vpow.pop %v505
  %v507 = vmul.f32 %v494, 1.442695
  %v508 = vpow.pop %v507
  %v509 = vadd.f32 %v496, 1.0
  %v510 = vadd.f32 %v498, 1.0
  %v511 = vadd.f32 %v500, 1.0
  %v512 = vadd.f32 %v502, 1.0
  %v513 = vadd.f32 %v504, 1.0
  %v514 = vadd.f32 %v506, 1.0
  %v515 = vadd.f32 %v508, 1.0
  %v516 = vrcp.pop %v509
  %v517 = vmul.f32 1.0, %v516
  %v518 = vrcp.pop %v510
  %v519 = vmul.f32 1.0, %v518
  %v520 = vrcp.pop %v511
  %v521 = vmul.f32 1.0, %v520
  %v522 = vrcp.pop %v512
  %v523 = vmul.f32 1.0, %v522
  %v524 = vrcp.pop %v513
  %v525 = vmul.f32 1.0, %v524
  %v526 = vrcp.pop %v514
  %v527 = vmul.f32 1.0, %v526
  %v528 = vrcp.pop %v515
  %v529 = vmul.f32 1.0, %v528
  %s530 = scalar_lea.vmem %s0, 336
  %v531 = vld [vmem:[%s530] sm:$0xff]
  %v532 = vld [vmem:[%s530 + $0x8] sm:$0xff]
  %v533 = vld [vmem:[%s530 + $0x10] sm:$0xff]
  %v534 = vld [vmem:[%s530 + $0x18] sm:$0xff]
  %v535 = vld [vmem:[%s530 + $0x20] sm:$0xff]
  %v536 = vld [vmem:[%s530 + $0x28] sm:$0xff]
  %v537 = vld [vmem:[%s530 + $0x30] sm:$0xff]
  %v538 = vld [vmem:[%s530 + $0x38] sm:$0xff]
  %v539 = vld [vmem:[%s530 + $0x40] sm:$0xff]
  %v540 = vld [vmem:[%s530 + $0x48] sm:$0xff]
  %v541 = vld [vmem:[%s530 + $0x50] sm:$0xff]
  %v542 = vld [vmem:[%s530 + $0x58] sm:$0xff]
  %v543 = vld [vmem:[%s530 + $0x60] sm:$0x3]
  %v544 = vld [vmem:[%s530 + $0x68] sm:$0x3]
  %545 = vmatprep.subr.mxu0 0.0
  %546 = vmatpush1.msra.mxu0 %v29
  %547 = vmatprep.subr.mxu0 0.0
  %548 = vmatpush1.msra.mxu0 %v28
  %549 = vmatprep.subr.mxu0 0.0
  %550 = vmatpush1.msra.mxu0 %v27
  %551 = vmatprep.subr.mxu0 0.0
  %552 = vmatpush1.msra.mxu0 %v26
  %553 = vmatprep.subr.mxu0 0.0
  %554 = vmatpush1.msra.mxu0 %v25
  %555 = vmatprep.subr.mxu0 0.0
  %556 = vmatpush1.msra.mxu0 %v24
  %557 = vmatprep.subr.mxu0 0.0
  %558 = vmatpush1.msra.mxu0 %v23
  %559 = vmatprep.subr.mxu0 0.0
  %560 = vmatpush1.msra.mxu0 %v22
  %561 = vmatprep.subr.mxu0 0.0
  %562 = vmatpush1.msra.mxu0 %v21
  %563 = vmatprep.subr.mxu0 0.0
  %564 = vmatpush1.msra.mxu0 %v20
  %565 = vmatprep.subr.mxu0 0.0
  %566 = vmatpush1.msra.mxu0 %v19
  %567 = vmatprep.subr.mxu0 0.0
  %568 = vmatpush1.msra.mxu0 %v18
  %569 = vmatprep.subr.mxu0 0.0
  %570 = vmatpush1.msra.mxu0 %v17
  %571 = vmatprep.subr.mxu0 0.0
  %572 = vmatpush1.msra.mxu0 %v16
  %573 = vmatprep.subr.mxu0 0.0
  %574 = vmatpush1.msra.mxu0 %v15
  %575 = vmatprep.subr.mxu0 0.0
  %576 = vmatpush1.msra.mxu0 %v14
  %577 = vmatprep.subr.mxu0 0.0
  %578 = vmatpush2.msra.mxu0 %v45
  %579 = vmatprep.subr.mxu0 0.0
  %580 = vmatpush2.msra.mxu0 %v44
  %581 = vmatprep.subr.mxu0 0.0
  %582 = vmatpush2.msra.mxu0 %v43
  %583 = vmatprep.subr.mxu0 0.0
  %584 = vmatpush2.msra.mxu0 %v42
  %585 = vmatprep.subr.mxu0 0.0
  %586 = vmatpush2.msra.mxu0 %v41
  %587 = vmatprep.subr.mxu0 0.0
  %588 = vmatpush2.msra.mxu0 %v40
  %589 = vmatprep.subr.mxu0 0.0
  %590 = vmatpush2.msra.mxu0 %v39
  %591 = vmatprep.subr.mxu0 0.0
  %592 = vmatpush2.msra.mxu0 %v38
  %593 = vmatprep.subr.mxu0 0.0
  %594 = vmatpush2.msra.mxu0 %v37
  %595 = vmatprep.subr.mxu0 0.0
  %596 = vmatpush2.msra.mxu0 %v36
  %597 = vmatprep.subr.mxu0 0.0
  %598 = vmatpush2.msra.mxu0 %v35
  %599 = vmatprep.subr.mxu0 0.0
  %600 = vmatpush2.msra.mxu0 %v34
  %601 = vmatprep.subr.mxu0 0.0
  %602 = vmatpush2.msra.mxu0 %v33
  %603 = vmatprep.subr.mxu0 0.0
  %604 = vmatpush2.msra.mxu0 %v32
  %605 = vmatprep.subr.mxu0 0.0
  %606 = vmatpush2.msra.mxu0 %v31
  %607 = vmatprep.subr.mxu0 0.0
  %608 = vmatpush2.msra.mxu0 %v30
  %609 = vmatprep.mubr.f32.mxu0 %v532
  %610 = vmatmul.mubr.f32.gmra.mxu0 %v531
  %v611 = vpop.f32.mrf.mxu0
  %v612 = vadd.f32 %v65, %v611
  %v613 = vpop.f32.mrf.mxu0
  %614 = vmatprep.mubr.f32.mxu0 %v534
  %615 = vmatmul.mubr.f32.gmra.mxu0 %v533
  %v616 = vpop.f32.mrf.mxu0
  %v617 = vadd.f32 %v65, %v616
  %v618 = vpop.f32.mrf.mxu0
  %619 = vmatprep.mubr.f32.mxu0 %v536
  %620 = vmatmul.mubr.f32.gmra.mxu0 %v535
  %v621 = vpop.f32.mrf.mxu0
  %v622 = vadd.f32 %v65, %v621
  %v623 = vpop.f32.mrf.mxu0
  %624 = vmatprep.mubr.f32.mxu0 %v538
  %625 = vmatmul.mubr.f32.gmra.mxu0 %v537
  %v626 = vpop.f32.mrf.mxu0
  %v627 = vadd.f32 %v65, %v626
  %v628 = vpop.f32.mrf.mxu0
  %629 = vmatprep.mubr.f32.mxu0 %v540
  %630 = vmatmul.mubr.f32.gmra.mxu0 %v539
  %v631 = vpop.f32.mrf.mxu0
  %v632 = vadd.f32 %v65, %v631
  %v633 = vpop.f32.mrf.mxu0
  %634 = vmatprep.mubr.f32.mxu0 %v542
  %635 = vmatmul.mubr.f32.gmra.mxu0 %v541
  %v636 = vpop.f32.mrf.mxu0
  %v637 = vadd.f32 %v65, %v636
  %v638 = vpop.f32.mrf.mxu0
  %639 = vmatprep.mubr.f32.mxu0 %v544
  %640 = vmatmul.mubr.f32.gmra.mxu0 %v543
  %v641 = vpop.f32.mrf.mxu0
  %v642 = vadd.f32 %v65, %v641
  %v643 = vpop.f32.mrf.mxu0
  %644 = vdwg.mxu0
  %v645 = vxor.u32 %v612, 2147483648
  %v646 = vxor.u32 %v617, 2147483648
  %v647 = vxor.u32 %v622, 2147483648
  %v648 = vxor.u32 %v627, 2147483648
  %v649 = vxor.u32 %v632, 2147483648
  %v650 = vxor.u32 %v637, 2147483648
  %v651 = vxor.u32 %v642, 2147483648
  %v652 = vmul.f32 %v645, 1.442695
  %v653 = vpow.pop %v652
  %v654 = vmul.f32 %v646, 1.442695
  %v655 = vpow.pop %v654
  %v656 = vmul.f32 %v647, 1.442695
  %v657 = vpow.pop %v656
  %v658 = vmul.f32 %v648, 1.442695
  %v659 = vpow.pop %v658
  %v660 = vmul.f32 %v649, 1.442695
  %v661 = vpow.pop %v660
  %v662 = vmul.f32 %v650, 1.442695
  %v663 = vpow.pop %v662
  %v664 = vmul.f32 %v651, 1.442695
  %v665 = vpow.pop %v664
  %v666 = vadd.f32 %v653, 1.0
  %v667 = vadd.f32 %v655, 1.0
  %v668 = vadd.f32 %v657, 1.0
  %v669 = vadd.f32 %v659, 1.0
  %v670 = vadd.f32 %v661, 1.0
  %v671 = vadd.f32 %v663, 1.0
  %v672 = vadd.f32 %v665, 1.0
  %v673 = vrcp.pop %v666
  %v674 = vmul.f32 1.0, %v673
  %v675 = vrcp.pop %v667
  %v676 = vmul.f32 1.0, %v675
  %v677 = vrcp.pop %v668
  %v678 = vmul.f32 1.0, %v677
  %v679 = vrcp.pop %v669
  %v680 = vmul.f32 1.0, %v679
  %v681 = vrcp.pop %v670
  %v682 = vmul.f32 1.0, %v681
  %v683 = vrcp.pop %v671
  %v684 = vmul.f32 1.0, %v683
  %v685 = vrcp.pop %v672
  %v686 = vmul.f32 1.0, %v685
  %v687 = vmax.f32 %v517, %v674
  %v688 = vmax.f32 %v519, %v676
  %v689 = vmax.f32 %v521, %v678
  %v690 = vmax.f32 %v523, %v680
  %v691 = vmax.f32 %v525, %v682
  %v692 = vmax.f32 %v527, %v684
  %v693 = vmax.f32 %v529, %v686
  %v694 = vmax.f32 %v366, %v687
  %v695 = vmax.f32 %v367, %v688
  %v696 = vmax.f32 %v368, %v689
  %v697 = vmax.f32 %v369, %v690
  %v698 = vmax.f32 %v370, %v691
  %v699 = vmax.f32 %v371, %v692
  %v700 = vmax.f32 %v372, %v693
  %701 = vst [vmem:[%s3] sm:$0xff] %v694
  %702 = vst [vmem:[%s3 + $0x8] sm:$0xff] %v695
  %703 = vst [vmem:[%s3 + $0x10] sm:$0xff] %v696
  %704 = vst [vmem:[%s3 + $0x18] sm:$0xff] %v697
  %705 = vst [vmem:[%s3 + $0x20] sm:$0xff] %v698
  %706 = vst [vmem:[%s3 + $0x28] sm:$0xff] %v699
  %707 = vst [vmem:[%s3 + $0x30] sm:$0x3] %v700
  // Predicated region
  $region14: #{convnet_forward.4} parent=0 // pred_check
    _
  $region15: #{convnet_forward.4} parent=0 // pred_check_branch
    %709 = sbr.rel (0) target = $region17
  $region16: #{convnet_forward.4} parent=0 // pred_region
    _
  $region17: #{convnet_forward.4} parent=0 // pred_fallthru
    _
  // Predicated region
  $region18: #{convnet_forward.4} parent=0 // pred_check
    _
  $region19: #{convnet_forward.4} parent=0 // pred_check_branch
    %711 = sbr.rel (0) target = $region21
  $region20: #{convnet_forward.4} parent=0 // pred_region
    _
  $region21: #{convnet_forward.4} parent=0 // pred_fallthru
    _

</llo_original>
